<compile_context>
chip_gen: v7x
topology: tpu7x:2x2x1
jax: 0.10.0
libtpu: 0.0.40
codegen_flags: <defaults>
</compile_context>

<pallas_src>
import jax
import jax.numpy as jnp
from jax.experimental import pallas as pl
from jax.experimental.pallas import tpu as pltpu

EPS = 1e-5


# ----------------------------------------------------------------------------
# Fused NCB kernel: one image per grid step, flattened (H*W, C) tile.
# ----------------------------------------------------------------------------
def make_ncb_kernel(W):
    def ncb_fused_kernel(x_ref, dww_ref, bn1s_ref, bn1b_ref,
                         projw_ref, w1_ref, cb1_ref, bn2s_ref, bn2b_ref,
                         w2_ref, cb2_ref, out_ref, acc_ref):
        M, C = x_ref.shape                       # M = H * W pixels of one image
        x = x_ref[...]                           # (M, C) f32, channels on lanes
        w = dww_ref[...]                         # (3, 3, C) depthwise taps

        # ---- depthwise 3x3 conv, SAME padding via masks (no host pad) -----
        # Column (+/-1) taps: XLU sublane roll of the resident tile + boundary
        # masks (replaces 9 relayout-heavy shifted slices of a padded image).
        col = jax.lax.broadcasted_iota(jnp.int32, (M, C), 0) % W
        xl = jnp.where(col == 0,     0.0, pltpu.roll(x, shift=1,     axis=0))
        xr = jnp.where(col == W - 1, 0.0, pltpu.roll(x, shift=M - 1, axis=0))

        top = xl * w[0, 0, :] + x * w[0, 1, :] + xr * w[0, 2, :]   # from row h-1
        mid = xl * w[1, 0, :] + x * w[1, 1, :] + xr * w[1, 2, :]   # from row h
        bot = xl * w[2, 0, :] + x * w[2, 1, :] + xr * w[2, 2, :]   # from row h+1

        # Row (+/-1) taps: W-row shifted accumulates (sublane-aligned when
        # W % 8 == 0) into the f32 scratch.
        acc_ref[...] = mid
        acc_ref[pl.ds(W, M - W), :] = acc_ref[pl.ds(W, M - W), :] + top[:M - W, :]
        acc_ref[pl.ds(0, M - W), :] = acc_ref[pl.ds(0, M - W), :] + bot[W:, :]

        # BN1 (folded, inference) + ReLU, f32.
        act = jnp.maximum(acc_ref[...] * bn1s_ref[...] + bn1b_ref[...], 0.0)

        # ---- MHCA 1x1 projection (bf16 MXU, f32 accumulate) + residual -----
        feats = jnp.dot(act.astype(jnp.bfloat16), projw_ref[...],
                        preferred_element_type=jnp.float32) + x

        # ---- MLP: 1x1 expand -> BN2 -> ReLU -> 1x1 project + residual ------
        h = jnp.dot(feats.astype(jnp.bfloat16), w1_ref[...],
                    preferred_element_type=jnp.float32) + cb1_ref[...]
        h = jnp.maximum(h * bn2s_ref[...] + bn2b_ref[...], 0.0)
        o = jnp.dot(h.astype(jnp.bfloat16), w2_ref[...],
                    preferred_element_type=jnp.float32) + cb2_ref[...]

        out_ref[...] = (o + feats).astype(out_ref.dtype)

    return ncb_fused_kernel


# ----------------------------------------------------------------------------
# Wrapper (channels-last core; NCHW only at the PyTorch boundary)
# ----------------------------------------------------------------------------
def ncb_forward_nhwc(x_nhwc, p):
    N, H, W, C = x_nhwc.shape
    hidden = p["w1"].shape[1]
    M = H * W

    # TODO(synk): for large H*W*C (high-res early stages, esp. v7x 64 MiB VMEM),
    # tile the grid over H-bands with a 1-row halo (manual DMA) and single-buffer
    # the constant weight blocks (pipeline_mode=pl.Buffered(1)); the whole-image
    # block is ample for the small shapes exercised here.

    # Fold BatchNorm (inference, running stats) into per-channel scale / bias.
    bn1_s = p["bn1_gamma"] / jnp.sqrt(p["bn1_var"] + EPS)
    bn1_b = p["bn1_beta"] - p["bn1_mean"] * bn1_s
    bn2_s = p["bn2_gamma"] / jnp.sqrt(p["bn2_var"] + EPS)
    bn2_b = p["bn2_beta"] - p["bn2_mean"] * bn2_s

    # bf16 MXU operands (weights); accumulation / BN / residuals stay f32.
    proj_w = p["proj_w"].astype(jnp.bfloat16)
    w1 = p["w1"].astype(jnp.bfloat16)
    w2 = p["w2"].astype(jnp.bfloat16)

    x_flat = x_nhwc.reshape(N, M, C)             # free reshape, lane-dense C

    def const_spec(shape):
        zeros = (0,) * len(shape)
        return pl.BlockSpec(shape, lambda n, z=zeros: z)

    cost = pl.CostEstimate(
        flops=N * M * (18 * C + 2 * C * C + 4 * C * hidden),
        transcendentals=0,
        bytes_accessed=(2 * N * M * C * 4                        # x in + out
                        + (C * C + 2 * C * hidden) * 2           # bf16 weights
                        + (9 * C + 2 * C + 3 * hidden + C) * 4)) # taps / BN / biases

    out_flat = pl.pallas_call(
        make_ncb_kernel(W),
        out_shape=jax.ShapeDtypeStruct((N, M, C), jnp.float32),
        grid=(N,),
        in_specs=[
            pl.BlockSpec((None, M, C), lambda n: (n, 0, 0)),     # x, one image
            const_spec((3, 3, C)),                               # depthwise taps
            const_spec((1, C)), const_spec((1, C)),              # BN1 scale/bias
            const_spec((C, C)),                                  # proj_w (bf16)
            const_spec((C, hidden)),                             # w1     (bf16)
            const_spec((1, hidden)),                             # cb1
            const_spec((1, hidden)), const_spec((1, hidden)),    # BN2 scale/bias
            const_spec((hidden, C)),                             # w2     (bf16)
            const_spec((1, C)),                                  # cb2
        ],
        out_specs=pl.BlockSpec((None, M, C), lambda n: (n, 0, 0)),
        scratch_shapes=[pltpu.VMEM((M, C), jnp.float32)],
        compiler_params=pltpu.CompilerParams(
            dimension_semantics=("parallel",),   # images shard across TCs (v7x)
            vmem_limit_bytes=64 * 1024 * 1024),
        cost_estimate=cost,
    )(x_flat, p["dw_w"], bn1_s.reshape(1, C), bn1_b.reshape(1, C),
      proj_w, w1, p["cb1"].reshape(1, hidden),
      bn2_s.reshape(1, hidden), bn2_b.reshape(1, hidden),
      w2, p["cb2"].reshape(1, C))

    return out_flat.reshape(N, H, W, C)


def ncb_forward(x_nchw, p):
    # In a full Next-ViT stack, stay NHWC across blocks and transpose once at
    # model entry/exit; done here only because the module spec is NCHW.
    x = jnp.transpose(x_nchw, (0, 2, 3, 1)).astype(jnp.float32)
    return jnp.transpose(ncb_forward_nhwc(x, p), (0, 3, 1, 2))


# ----------------------------------------------------------------------------
# Pure-JAX reference (independent path: lax.conv + einsum + explicit BN).
# matmul_dtype=bfloat16 mimics the kernel's bf16-MXU / f32-accumulate matmuls.
# ----------------------------------------------------------------------------
def ncb_reference(x_nchw, p, matmul_dtype=jnp.float32):
    x = jnp.transpose(x_nchw, (0, 2, 3, 1)).astype(jnp.float32)
    C = x.shape[-1]
    hi = jax.lax.Precision.HIGHEST
    rhs = p["dw_w"][:, :, None, :]                       # HWIO, I = 1
    conv = jax.lax.conv_general_dilated(
        x, rhs, window_strides=(1, 1), padding="SAME",
        dimension_numbers=("NHWC", "HWIO", "NHWC"),
        feature_group_count=C, precision=hi)
    h = (conv - p["bn1_mean"]) / jnp.sqrt(p["bn1_var"] + EPS) \
        * p["bn1_gamma"] + p["bn1_beta"]
    h = jnp.maximum(h, 0.0)

    def mm(a, w):
        return jnp.einsum("nhwc,cd->nhwd", a.astype(matmul_dtype),
                          w.astype(matmul_dtype),
                          preferred_element_type=jnp.float32, precision=hi)

    feats = mm(h, p["proj_w"]) + x
    m = mm(feats, p["w1"]) + p["cb1"]
    m = (m - p["bn2_mean"]) / jnp.sqrt(p["bn2_var"] + EPS) \
        * p["bn2_gamma"] + p["bn2_beta"]
    m = jnp.maximum(m, 0.0)
    o = mm(m, p["w2"]) + p["cb2"]
    return jnp.transpose(o + feats, (0, 3, 1, 2))


# ----------------------------------------------------------------------------
def make_params(key, C, expansion_ratio):
    hidden = C * expansion_ratio
    ks = jax.random.split(key, 12)
    f32 = jnp.float32
    return {
        # MHCA
        "dw_w":      0.2 * jax.random.normal(ks[0], (3, 3, C), f32),
        "bn1_gamma": 1.0 + 0.1 * jax.random.normal(ks[1], (C,), f32),
        "bn1_beta":  0.1 * jax.random.normal(ks[2], (C,), f32),
        "bn1_mean":  0.1 * jax.random.normal(ks[3], (C,), f32),
        "bn1_var":   1.0 + 0.1 * jax.random.uniform(ks[4], (C,), f32),
        "proj_w":    0.2 * jax.random.normal(ks[5], (C, C), f32),
        # MLP
        "w1":        0.2 * jax.random.normal(ks[6], (C, hidden), f32),
        "cb1":       0.1 * jax.random.normal(ks[7], (hidden,), f32),
        "bn2_gamma": 1.0 + 0.1 * jax.random.normal(ks[8], (hidden,), f32),
        "bn2_beta":  0.1 * jax.random.normal(ks[9], (hidden,), f32),
        "bn2_mean":  0.1 * jax.random.normal(ks[10], (hidden,), f32),
        "bn2_var":   1.0 + 0.1 * jax.random.uniform(ks[11], (hidden,), f32),
        "w2":        0.2 * jax.random.normal(ks[5], (hidden, C), f32),
        "cb2":       0.1 * jax.random.normal(ks[7], (C,), f32),
    }


if __name__ == "__main__":
    # NCB(in_features=4, out_features=4, dropout_path=0.1, expansion_ratio=3)
    # TODO(synk): DropPath (stochastic depth) is identity at inference; the
    # training-time random path drop is not implemented.
    N, C, H, W = 2, 4, 16, 16
    key = jax.random.PRNGKey(0)
    kx, kp = jax.random.split(key)
    x = jax.random.normal(kx, (N, C, H, W), jnp.float32)
    params = make_params(kp, C, expansion_ratio=3)

    fwd = jax.jit(ncb_forward)
    out = jax.block_until_ready(fwd(x, params))
    assert out.shape == (N, C, H, W)

    # Tight check vs a reference using the same bf16 matmul casts.
    ref_bf = jax.block_until_ready(ncb_reference(x, params, jnp.bfloat16))
    err_bf = float(jnp.max(jnp.abs(out - ref_bf)))
    assert err_bf < 1e-2, f"max abs err vs bf16-matched ref = {err_bf}"

    # Loose sanity check vs the full-f32 reference (bf16 MXU rounding only).
    ref_f32 = jax.block_until_ready(ncb_reference(x, params, jnp.float32))
    err_f32 = float(jnp.max(jnp.abs(out - ref_f32)))
    assert err_f32 < 5e-2, f"max abs err vs f32 ref = {err_f32}"

    print("KERNEL_OK")
</pallas_src>

<mosaic_0001>
module attributes {stable_mosaic.version = 11 : i64} {
  func.func @ncb_fused_kernel(%arg0: i32, %arg1: memref<1x256x4xf32, #tpu.memory_space<vmem>>, %arg2: memref<3x3x4xf32, #tpu.memory_space<vmem>>, %arg3: memref<1x4xf32, #tpu.memory_space<vmem>>, %arg4: memref<1x4xf32, #tpu.memory_space<vmem>>, %arg5: memref<4x4xbf16, #tpu.memory_space<vmem>>, %arg6: memref<4x12xbf16, #tpu.memory_space<vmem>>, %arg7: memref<1x12xf32, #tpu.memory_space<vmem>>, %arg8: memref<1x12xf32, #tpu.memory_space<vmem>>, %arg9: memref<1x12xf32, #tpu.memory_space<vmem>>, %arg10: memref<12x4xbf16, #tpu.memory_space<vmem>>, %arg11: memref<1x4xf32, #tpu.memory_space<vmem>>, %arg12: memref<1x256x4xf32, #tpu.memory_space<vmem>>, %arg13: memref<256x4xf32, #tpu.memory_space<vmem>>) attributes {dimension_semantics = [#tpu.dimension_semantics<parallel>], iteration_bounds = array<i64: 2>, scalar_prefetch = 0 : i64, scratch_operands = 1 : i64, tpu.core_type = #tpu.core_type<tc>, window_params = [{transform_indices = @transform_0, window_bounds = array<i64: 1, 256, 4>}, {pipeline_mode = #tpu.pipeline_mode<synchronous>, transform_indices = @transform_1, window_bounds = array<i64: 3, 3, 4>}, {pipeline_mode = #tpu.pipeline_mode<synchronous>, transform_indices = @transform_2, window_bounds = array<i64: 1, 4>}, {pipeline_mode = #tpu.pipeline_mode<synchronous>, transform_indices = @transform_3, window_bounds = array<i64: 1, 4>}, {pipeline_mode = #tpu.pipeline_mode<synchronous>, transform_indices = @transform_4, window_bounds = array<i64: 4, 4>}, {pipeline_mode = #tpu.pipeline_mode<synchronous>, transform_indices = @transform_5, window_bounds = array<i64: 4, 12>}, {pipeline_mode = #tpu.pipeline_mode<synchronous>, transform_indices = @transform_6, window_bounds = array<i64: 1, 12>}, {pipeline_mode = #tpu.pipeline_mode<synchronous>, transform_indices = @transform_7, window_bounds = array<i64: 1, 12>}, {pipeline_mode = #tpu.pipeline_mode<synchronous>, transform_indices = @transform_8, window_bounds = array<i64: 1, 12>}, {pipeline_mode = #tpu.pipeline_mode<synchronous>, transform_indices = @transform_9, window_bounds = array<i64: 12, 4>}, {pipeline_mode = #tpu.pipeline_mode<synchronous>, transform_indices = @transform_10, window_bounds = array<i64: 1, 4>}, {transform_indices = @transform_11, window_bounds = array<i64: 1, 256, 4>}]} {
    %c0 = arith.constant 0 : index
    %c0_0 = arith.constant 0 : index
    %c0_1 = arith.constant 0 : index
    %0 = vector.load %arg1[%c0, %c0_0, %c0_1] : memref<1x256x4xf32, #tpu.memory_space<vmem>>, vector<1x256x4xf32>
    %1 = vector.shape_cast %0 : vector<1x256x4xf32> to vector<256x4xf32>
    %c0_2 = arith.constant 0 : index
    %c0_3 = arith.constant 0 : index
    %c0_4 = arith.constant 0 : index
    %2 = vector.load %arg2[%c0_2, %c0_3, %c0_4] : memref<3x3x4xf32, #tpu.memory_space<vmem>>, vector<3x3x4xf32>
    %3 = tpu.iota {dimensions = array<i32: 0>} : vector<256x4xi32>
    %c16_i32 = arith.constant 16 : i32
    %c0_i32 = arith.constant 0 : i32
    %4 = arith.cmpi eq, %c16_i32, %c0_i32 : i32
    %c1_i32 = arith.constant 1 : i32
    %5 = arith.select %4, %c1_i32, %c16_i32 : i32
    %6 = vector.broadcast %5 : i32 to vector<256x4xi32>
    %7 = arith.remsi %3, %6 : vector<256x4xi32>
    %c0_i32_5 = arith.constant 0 : i32
    %8 = vector.broadcast %c0_i32_5 : i32 to vector<256x4xi32>
    %9 = arith.cmpi ne, %7, %8 : vector<256x4xi32>
    %c0_i32_6 = arith.constant 0 : i32
    %10 = vector.broadcast %c0_i32_6 : i32 to vector<256x4xi32>
    %11 = arith.cmpi slt, %7, %10 : vector<256x4xi32>
    %c0_i32_7 = arith.constant 0 : i32
    %12 = arith.cmpi slt, %5, %c0_i32_7 : i32
    %13 = vector.broadcast %12 : i1 to vector<256x4xi1>
    %14 = vector.broadcast %13 : vector<256x4xi1> to vector<256x4xi1>
    %15 = arith.xori %11, %14 : vector<256x4xi1>
    %16 = arith.andi %15, %9 : vector<256x4xi1>
    %17 = vector.broadcast %5 : i32 to vector<256x4xi32>
    %18 = arith.addi %7, %17 : vector<256x4xi32>
    %19 = arith.select %16, %18, %7 : vector<256x4xi1>, vector<256x4xi32>
    %c0_i32_8 = arith.constant 0 : i32
    %20 = vector.broadcast %c0_i32_8 : i32 to vector<256x4xi32>
    %21 = arith.cmpi eq, %19, %20 : vector<256x4xi32>
    %c1_i32_9 = arith.constant 1 : i32
    %22 = tpu.dynamic_rotate %1 by %c1_i32_9 dim 0 : vector<256x4xf32>, i32 -> vector<256x4xf32>
    %cst = arith.constant 0.000000e+00 : f32
    %23 = vector.broadcast %cst : f32 to vector<256x4xf32>
    %24 = arith.select %21, %23, %22 : vector<256x4xi1>, vector<256x4xf32>
    %c15_i32 = arith.constant 15 : i32
    %25 = vector.broadcast %c15_i32 : i32 to vector<256x4xi32>
    %26 = arith.cmpi eq, %19, %25 : vector<256x4xi32>
    %c255_i32 = arith.constant 255 : i32
    %27 = tpu.dynamic_rotate %1 by %c255_i32 dim 0 : vector<256x4xf32>, i32 -> vector<256x4xf32>
    %cst_10 = arith.constant 0.000000e+00 : f32
    %28 = vector.broadcast %cst_10 : f32 to vector<256x4xf32>
    %29 = arith.select %26, %28, %27 : vector<256x4xi1>, vector<256x4xf32>
    %30 = vector.extract_strided_slice %2 {offsets = [0, 0, 0], sizes = [1, 1, 4], strides = [1, 1, 1]} : vector<3x3x4xf32> to vector<1x1x4xf32>
    %31 = vector.shape_cast %30 : vector<1x1x4xf32> to vector<4xf32>
    %32 = vector.shape_cast %31 : vector<4xf32> to vector<1x4xf32>
    %33 = vector.broadcast %32 : vector<1x4xf32> to vector<256x4xf32>
    %34 = arith.mulf %24, %33 : vector<256x4xf32>
    %35 = vector.extract_strided_slice %2 {offsets = [0, 1, 0], sizes = [1, 1, 4], strides = [1, 1, 1]} : vector<3x3x4xf32> to vector<1x1x4xf32>
    %36 = vector.shape_cast %35 : vector<1x1x4xf32> to vector<4xf32>
    %37 = vector.shape_cast %36 : vector<4xf32> to vector<1x4xf32>
    %38 = vector.broadcast %37 : vector<1x4xf32> to vector<256x4xf32>
    %39 = arith.mulf %1, %38 : vector<256x4xf32>
    %40 = arith.addf %34, %39 : vector<256x4xf32>
    %41 = vector.extract_strided_slice %2 {offsets = [0, 2, 0], sizes = [1, 1, 4], strides = [1, 1, 1]} : vector<3x3x4xf32> to vector<1x1x4xf32>
    %42 = vector.shape_cast %41 : vector<1x1x4xf32> to vector<4xf32>
    %43 = vector.shape_cast %42 : vector<4xf32> to vector<1x4xf32>
    %44 = vector.broadcast %43 : vector<1x4xf32> to vector<256x4xf32>
    %45 = arith.mulf %29, %44 : vector<256x4xf32>
    %46 = arith.addf %40, %45 : vector<256x4xf32>
    %47 = vector.extract_strided_slice %2 {offsets = [1, 0, 0], sizes = [1, 1, 4], strides = [1, 1, 1]} : vector<3x3x4xf32> to vector<1x1x4xf32>
    %48 = vector.shape_cast %47 : vector<1x1x4xf32> to vector<4xf32>
    %49 = vector.shape_cast %48 : vector<4xf32> to vector<1x4xf32>
    %50 = vector.broadcast %49 : vector<1x4xf32> to vector<256x4xf32>
    %51 = arith.mulf %24, %50 : vector<256x4xf32>
    %52 = vector.extract_strided_slice %2 {offsets = [1, 1, 0], sizes = [1, 1, 4], strides = [1, 1, 1]} : vector<3x3x4xf32> to vector<1x1x4xf32>
    %53 = vector.shape_cast %52 : vector<1x1x4xf32> to vector<4xf32>
    %54 = vector.shape_cast %53 : vector<4xf32> to vector<1x4xf32>
    %55 = vector.broadcast %54 : vector<1x4xf32> to vector<256x4xf32>
    %56 = arith.mulf %1, %55 : vector<256x4xf32>
    %57 = arith.addf %51, %56 : vector<256x4xf32>
    %58 = vector.extract_strided_slice %2 {offsets = [1, 2, 0], sizes = [1, 1, 4], strides = [1, 1, 1]} : vector<3x3x4xf32> to vector<1x1x4xf32>
    %59 = vector.shape_cast %58 : vector<1x1x4xf32> to vector<4xf32>
    %60 = vector.shape_cast %59 : vector<4xf32> to vector<1x4xf32>
    %61 = vector.broadcast %60 : vector<1x4xf32> to vector<256x4xf32>
    %62 = arith.mulf %29, %61 : vector<256x4xf32>
    %63 = arith.addf %57, %62 : vector<256x4xf32>
    %64 = vector.extract_strided_slice %2 {offsets = [2, 0, 0], sizes = [1, 1, 4], strides = [1, 1, 1]} : vector<3x3x4xf32> to vector<1x1x4xf32>
    %65 = vector.shape_cast %64 : vector<1x1x4xf32> to vector<4xf32>
    %66 = vector.shape_cast %65 : vector<4xf32> to vector<1x4xf32>
    %67 = vector.broadcast %66 : vector<1x4xf32> to vector<256x4xf32>
    %68 = arith.mulf %24, %67 : vector<256x4xf32>
    %69 = vector.extract_strided_slice %2 {offsets = [2, 1, 0], sizes = [1, 1, 4], strides = [1, 1, 1]} : vector<3x3x4xf32> to vector<1x1x4xf32>
    %70 = vector.shape_cast %69 : vector<1x1x4xf32> to vector<4xf32>
    %71 = vector.shape_cast %70 : vector<4xf32> to vector<1x4xf32>
    %72 = vector.broadcast %71 : vector<1x4xf32> to vector<256x4xf32>
    %73 = arith.mulf %1, %72 : vector<256x4xf32>
    %74 = arith.addf %68, %73 : vector<256x4xf32>
    %75 = vector.extract_strided_slice %2 {offsets = [2, 2, 0], sizes = [1, 1, 4], strides = [1, 1, 1]} : vector<3x3x4xf32> to vector<1x1x4xf32>
    %76 = vector.shape_cast %75 : vector<1x1x4xf32> to vector<4xf32>
    %77 = vector.shape_cast %76 : vector<4xf32> to vector<1x4xf32>
    %78 = vector.broadcast %77 : vector<1x4xf32> to vector<256x4xf32>
    %79 = arith.mulf %29, %78 : vector<256x4xf32>
    %80 = arith.addf %74, %79 : vector<256x4xf32>
    %c0_11 = arith.constant 0 : index
    %c0_12 = arith.constant 0 : index
    %81 = vector.load %arg13[%c0_11, %c0_12] : memref<256x4xf32, #tpu.memory_space<vmem>>, vector<256x4xf32>
    tpu.vector_store %arg13[%c0_11, %c0_12], %63 {strides = array<i32>} : memref<256x4xf32, #tpu.memory_space<vmem>>, vector<256x4xf32>,
    %c16 = arith.constant 16 : index
    %c0_13 = arith.constant 0 : index
    %82 = vector.load %arg13[%c16, %c0_13] : memref<256x4xf32, #tpu.memory_space<vmem>>, vector<240x4xf32>
    %83 = vector.extract_strided_slice %46 {offsets = [0, 0], sizes = [240, 4], strides = [1, 1]} : vector<256x4xf32> to vector<240x4xf32>
    %84 = arith.addf %82, %83 : vector<240x4xf32>
    %c16_14 = arith.constant 16 : index
    %c0_15 = arith.constant 0 : index
    %85 = vector.load %arg13[%c16_14, %c0_15] : memref<256x4xf32, #tpu.memory_space<vmem>>, vector<240x4xf32>
    tpu.vector_store %arg13[%c16_14, %c0_15], %84 {strides = array<i32>} : memref<256x4xf32, #tpu.memory_space<vmem>>, vector<240x4xf32>,
    %c0_16 = arith.constant 0 : index
    %c0_17 = arith.constant 0 : index
    %86 = vector.load %arg13[%c0_16, %c0_17] : memref<256x4xf32, #tpu.memory_space<vmem>>, vector<240x4xf32>
    %87 = vector.extract_strided_slice %80 {offsets = [16, 0], sizes = [240, 4], strides = [1, 1]} : vector<256x4xf32> to vector<240x4xf32>
    %88 = arith.addf %86, %87 : vector<240x4xf32>
    %c0_18 = arith.constant 0 : index
    %c0_19 = arith.constant 0 : index
    %89 = vector.load %arg13[%c0_18, %c0_19] : memref<256x4xf32, #tpu.memory_space<vmem>>, vector<240x4xf32>
    tpu.vector_store %arg13[%c0_18, %c0_19], %88 {strides = array<i32>} : memref<256x4xf32, #tpu.memory_space<vmem>>, vector<240x4xf32>,
    %c0_20 = arith.constant 0 : index
    %c0_21 = arith.constant 0 : index
    %90 = vector.load %arg13[%c0_20, %c0_21] : memref<256x4xf32, #tpu.memory_space<vmem>>, vector<256x4xf32>
    %c0_22 = arith.constant 0 : index
    %c0_23 = arith.constant 0 : index
    %91 = vector.load %arg3[%c0_22, %c0_23] : memref<1x4xf32, #tpu.memory_space<vmem>>, vector<1x4xf32>
    %92 = vector.broadcast %91 : vector<1x4xf32> to vector<256x4xf32>
    %93 = arith.mulf %90, %92 : vector<256x4xf32>
    %c0_24 = arith.constant 0 : index
    %c0_25 = arith.constant 0 : index
    %94 = vector.load %arg4[%c0_24, %c0_25] : memref<1x4xf32, #tpu.memory_space<vmem>>, vector<1x4xf32>
    %95 = vector.broadcast %94 : vector<1x4xf32> to vector<256x4xf32>
    %96 = arith.addf %93, %95 : vector<256x4xf32>
    %cst_26 = arith.constant 0.000000e+00 : f32
    %97 = vector.broadcast %cst_26 : f32 to vector<256x4xf32>
    %98 = arith.maximumf %96, %97 : vector<256x4xf32>
    %99 = arith.truncf %98 : vector<256x4xf32> to vector<256x4xbf16>
    %c0_27 = arith.constant 0 : index
    %c0_28 = arith.constant 0 : index
    %100 = vector.load %arg5[%c0_27, %c0_28] : memref<4x4xbf16, #tpu.memory_space<vmem>>, vector<4x4xbf16>
    %cst_29 = arith.constant dense<0.000000e+00> : vector<256x4xf32>
    %101 = tpu.matmul %99, %100, %cst_29 {dimension_numbers = #tpu.dot_dimension_numbers<[1], [0], [0], [1], [0, 0, 1, 1], [], []>} : vector<256x4xbf16>, vector<4x4xbf16>, vector<256x4xf32> -> vector<256x4xf32>
    %102 = arith.addf %101, %1 : vector<256x4xf32>
    %103 = arith.truncf %102 : vector<256x4xf32> to vector<256x4xbf16>
    %c0_30 = arith.constant 0 : index
    %c0_31 = arith.constant 0 : index
    %104 = vector.load %arg6[%c0_30, %c0_31] : memref<4x12xbf16, #tpu.memory_space<vmem>>, vector<4x12xbf16>
    %cst_32 = arith.constant dense<0.000000e+00> : vector<256x12xf32>
    %105 = tpu.matmul %103, %104, %cst_32 {dimension_numbers = #tpu.dot_dimension_numbers<[1], [0], [0], [1], [0, 0, 1, 1], [], []>} : vector<256x4xbf16>, vector<4x12xbf16>, vector<256x12xf32> -> vector<256x12xf32>
    %c0_33 = arith.constant 0 : index
    %c0_34 = arith.constant 0 : index
    %106 = vector.load %arg7[%c0_33, %c0_34] : memref<1x12xf32, #tpu.memory_space<vmem>>, vector<1x12xf32>
    %107 = vector.broadcast %106 : vector<1x12xf32> to vector<256x12xf32>
    %108 = arith.addf %105, %107 : vector<256x12xf32>
    %c0_35 = arith.constant 0 : index
    %c0_36 = arith.constant 0 : index
    %109 = vector.load %arg8[%c0_35, %c0_36] : memref<1x12xf32, #tpu.memory_space<vmem>>, vector<1x12xf32>
    %110 = vector.broadcast %109 : vector<1x12xf32> to vector<256x12xf32>
    %111 = arith.mulf %108, %110 : vector<256x12xf32>
    %c0_37 = arith.constant 0 : index
    %c0_38 = arith.constant 0 : index
    %112 = vector.load %arg9[%c0_37, %c0_38] : memref<1x12xf32, #tpu.memory_space<vmem>>, vector<1x12xf32>
    %113 = vector.broadcast %112 : vector<1x12xf32> to vector<256x12xf32>
    %114 = arith.addf %111, %113 : vector<256x12xf32>
    %cst_39 = arith.constant 0.000000e+00 : f32
    %115 = vector.broadcast %cst_39 : f32 to vector<256x12xf32>
    %116 = arith.maximumf %114, %115 : vector<256x12xf32>
    %117 = arith.truncf %116 : vector<256x12xf32> to vector<256x12xbf16>
    %c0_40 = arith.constant 0 : index
    %c0_41 = arith.constant 0 : index
    %118 = vector.load %arg10[%c0_40, %c0_41] : memref<12x4xbf16, #tpu.memory_space<vmem>>, vector<12x4xbf16>
    %cst_42 = arith.constant dense<0.000000e+00> : vector<256x4xf32>
    %119 = tpu.matmul %117, %118, %cst_42 {dimension_numbers = #tpu.dot_dimension_numbers<[1], [0], [0], [1], [0, 0, 1, 1], [], []>} : vector<256x12xbf16>, vector<12x4xbf16>, vector<256x4xf32> -> vector<256x4xf32>
    %c0_43 = arith.constant 0 : index
    %c0_44 = arith.constant 0 : index
    %120 = vector.load %arg11[%c0_43, %c0_44] : memref<1x4xf32, #tpu.memory_space<vmem>>, vector<1x4xf32>
    %121 = vector.broadcast %120 : vector<1x4xf32> to vector<256x4xf32>
    %122 = arith.addf %119, %121 : vector<256x4xf32>
    %123 = arith.addf %122, %102 : vector<256x4xf32>
    %c0_45 = arith.constant 0 : index
    %c0_46 = arith.constant 0 : index
    %c0_47 = arith.constant 0 : index
    %124 = vector.load %arg12[%c0_45, %c0_46, %c0_47] : memref<1x256x4xf32, #tpu.memory_space<vmem>>, vector<1x256x4xf32>
    %125 = vector.shape_cast %124 : vector<1x256x4xf32> to vector<256x4xf32>
    %126 = vector.shape_cast %123 : vector<256x4xf32> to vector<1x256x4xf32>
    tpu.vector_store %arg12[%c0_45, %c0_46, %c0_47], %126 {strides = array<i32>} : memref<1x256x4xf32, #tpu.memory_space<vmem>>, vector<1x256x4xf32>,
    return
  }
  func.func @transform_0(%arg0: i32) -> (i32, i32, i32) {
    %c0_i32 = arith.constant 0 : i32
    %c0_i32_0 = arith.constant 0 : i32
    %c0_i32_1 = arith.constant 0 : i32
    return %arg0, %c0_i32, %c0_i32_0 : i32, i32, i32
  }
  func.func @transform_1(%arg0: i32) -> (i32, i32, i32) {
    %c0_i32 = arith.constant 0 : i32
    %c0_i32_0 = arith.constant 0 : i32
    %c0_i32_1 = arith.constant 0 : i32
    %c0_i32_2 = arith.constant 0 : i32
    return %c0_i32, %c0_i32_0, %c0_i32_1 : i32, i32, i32
  }
  func.func @transform_2(%arg0: i32) -> (i32, i32) {
    %c0_i32 = arith.constant 0 : i32
    %c0_i32_0 = arith.constant 0 : i32
    %c0_i32_1 = arith.constant 0 : i32
    return %c0_i32, %c0_i32_0 : i32, i32
  }
  func.func @transform_3(%arg0: i32) -> (i32, i32) {
    %c0_i32 = arith.constant 0 : i32
    %c0_i32_0 = arith.constant 0 : i32
    %c0_i32_1 = arith.constant 0 : i32
    return %c0_i32, %c0_i32_0 : i32, i32
  }
  func.func @transform_4(%arg0: i32) -> (i32, i32) {
    %c0_i32 = arith.constant 0 : i32
    %c0_i32_0 = arith.constant 0 : i32
    %c0_i32_1 = arith.constant 0 : i32
    return %c0_i32, %c0_i32_0 : i32, i32
  }
  func.func @transform_5(%arg0: i32) -> (i32, i32) {
    %c0_i32 = arith.constant 0 : i32
    %c0_i32_0 = arith.constant 0 : i32
    %c0_i32_1 = arith.constant 0 : i32
    return %c0_i32, %c0_i32_0 : i32, i32
  }
  func.func @transform_6(%arg0: i32) -> (i32, i32) {
    %c0_i32 = arith.constant 0 : i32
    %c0_i32_0 = arith.constant 0 : i32
    %c0_i32_1 = arith.constant 0 : i32
    return %c0_i32, %c0_i32_0 : i32, i32
  }
  func.func @transform_7(%arg0: i32) -> (i32, i32) {
    %c0_i32 = arith.constant 0 : i32
    %c0_i32_0 = arith.constant 0 : i32
    %c0_i32_1 = arith.constant 0 : i32
    return %c0_i32, %c0_i32_0 : i32, i32
  }
  func.func @transform_8(%arg0: i32) -> (i32, i32) {
    %c0_i32 = arith.constant 0 : i32
    %c0_i32_0 = arith.constant 0 : i32
    %c0_i32_1 = arith.constant 0 : i32
    return %c0_i32, %c0_i32_0 : i32, i32
  }
  func.func @transform_9(%arg0: i32) -> (i32, i32) {
    %c0_i32 = arith.constant 0 : i32
    %c0_i32_0 = arith.constant 0 : i32
    %c0_i32_1 = arith.constant 0 : i32
    return %c0_i32, %c0_i32_0 : i32, i32
  }
  func.func @transform_10(%arg0: i32) -> (i32, i32) {
    %c0_i32 = arith.constant 0 : i32
    %c0_i32_0 = arith.constant 0 : i32
    %c0_i32_1 = arith.constant 0 : i32
    return %c0_i32, %c0_i32_0 : i32, i32
  }
  func.func @transform_11(%arg0: i32) -> (i32, i32, i32) {
    %c0_i32 = arith.constant 0 : i32
    %c0_i32_0 = arith.constant 0 : i32
    %c0_i32_1 = arith.constant 0 : i32
    return %arg0, %c0_i32, %c0_i32_0 : i32, i32, i32
  }
}

</mosaic_0001>

<llo_original>
// kernel: ncb_forward.1
$region0: #{ncb_forward.1}
  #allocation0 [shape = 'u32[]', space=smem, size = 0x4, offset = 0x4, fixed_abs, tag = 'smem constant byte address 0x4 - core index']
  #allocation1 [shape = 'u32[144,128]{1,0:T(1,128)}', space=vmem, size = 0x12000, scoped, tag = 'internal scratch']
  #allocation2 [shape = 'f32[256,4]{1,0:T(8,128)}', space=vmem, size = 0x20000, scoped, tag = 'scratch operand']
  %s0 = inlined_call_operand.hbm [shape: f32[2,256,4], index: 0, kind: input, shape index: {}]
  %s1 = inlined_call_operand.hbm [shape: f32[3,3,4], index: 1, kind: input, shape index: {}]
  %s2 = inlined_call_operand.hbm [shape: f32[1,4], index: 2, kind: input, shape index: {}]
  %s3 = inlined_call_operand.hbm [shape: f32[1,4], index: 3, kind: input, shape index: {}]
  %s4 = inlined_call_operand.hbm [shape: bf16[4,4], index: 4, kind: input, shape index: {}]
  %s5 = inlined_call_operand.hbm [shape: bf16[4,12], index: 5, kind: input, shape index: {}]
  %s6 = inlined_call_operand.hbm [shape: f32[1,12], index: 6, kind: input, shape index: {}]
  %s7 = inlined_call_operand.hbm [shape: f32[1,12], index: 7, kind: input, shape index: {}]
  %s8 = inlined_call_operand.hbm [shape: f32[1,12], index: 8, kind: input, shape index: {}]
  %s9 = inlined_call_operand.hbm [shape: bf16[12,4], index: 9, kind: input, shape index: {}]
  %s10 = inlined_call_operand.hbm [shape: f32[1,4], index: 10, kind: input, shape index: {}]
  %s11 = inlined_call_operand.hbm [shape: f32[2,256,4], index: 11, kind: output, shape index: {}]
  %s12 = sld [smem:[#allocation0]]
  $region121: #{ncb_forward.1} parent=0
    _
  %s14 = ssub.s32 1, %s12
  %s15 = scalar_select 0, %s14, %s12
  $region1: #{ncb_forward.1} parent=0
    #allocation3 [shape = 'u8[262144]{0}', space=vmem, size = 0x40000, scoped, tag = 'input window, operand 0']
    #allocation4 [shape = 's32[2]{0}', space=sflag, size = 0x8, scoped, tag = 'scoped memory for ncb_forward.1']
    #allocation5 [shape = 's32[2]{0}', space=sflag, size = 0x8, scoped, tag = 'scoped memory for ncb_forward.1']
    #allocation6 [shape = 'u8[6144]{0}', space=vmem, size = 0x1800, scoped, tag = 'input window, operand 1, single buffered']
    #allocation7 [shape = 's32[1]{0}', space=sflag, size = 0x4, scoped, tag = 'scoped memory for ncb_forward.1']
    #allocation8 [shape = 'u8[512]{0}', space=vmem, size = 0x400, scoped, tag = 'input window, operand 2, single buffered']
    #allocation9 [shape = 'u8[512]{0}', space=vmem, size = 0x400, scoped, tag = 'input window, operand 3, single buffered']
    #allocation10 [shape = 's32[1]{0}', space=sflag, size = 0x4, scoped, tag = 'scoped memory for ncb_forward.1']
    #allocation11 [shape = 'u8[1024]{0}', space=vmem, size = 0x400, scoped, tag = 'input window, operand 4, single buffered']
    #allocation12 [shape = 'u8[1024]{0}', space=vmem, size = 0x400, scoped, tag = 'input window, operand 5, single buffered']
    #allocation13 [shape = 's32[1]{0}', space=sflag, size = 0x4, scoped, tag = 'scoped memory for ncb_forward.1']
    #allocation14 [shape = 'u8[512]{0}', space=vmem, size = 0x400, scoped, tag = 'input window, operand 6, single buffered']
    #allocation15 [shape = 'u8[512]{0}', space=vmem, size = 0x400, scoped, tag = 'input window, operand 7, single buffered']
    #allocation16 [shape = 's32[1]{0}', space=sflag, size = 0x4, scoped, tag = 'scoped memory for ncb_forward.1']
    #allocation17 [shape = 'u8[512]{0}', space=vmem, size = 0x400, scoped, tag = 'input window, operand 8, single buffered']
    #allocation18 [shape = 'u8[4096]{0}', space=vmem, size = 0x1000, scoped, tag = 'input window, operand 9, single buffered']
    #allocation19 [shape = 's32[1]{0}', space=sflag, size = 0x4, scoped, tag = 'scoped memory for ncb_forward.1']
    #allocation20 [shape = 'u8[512]{0}', space=vmem, size = 0x400, scoped, tag = 'input window, operand 10, single buffered']
    #allocation21 [shape = 'u8[262144]{0}', space=vmem, size = 0x40000, scoped, tag = 'output window, operand 0']
    %16 = vsyncpa [#allocation4], 0
    %s17 = scalar_lea.sflag [#allocation4], 1
    %18 = vsyncpa %s17, 0
    %19 = vsyncpa [#allocation7], 0
    %20 = vsyncpa [#allocation10], 0
    %21 = vsyncpa [#allocation13], 0
    %22 = vsyncpa [#allocation16], 0
    %23 = vsyncpa [#allocation19], 0
    %24 = vsyncpa [#allocation5], 0
    %s25 = scalar_lea.sflag [#allocation5], 1
    %26 = vsyncpa %s25, 0
    loop: start=0, step=1, limit=4
    $region2: #{ncb_forward.1} parent=1 // loop_pre_header
      _
    $region3: #{ncb_forward.1} parent=1 // loop_header
      %s28 = sphi 0, %s32
      %p29 = scmp.ge.s32.totalorder %s28, 4
      %s38 = sphi 0, %s40
      %s41 = sphi 0, %s38
      %s42 = sphi 0, %s41
      %s58 = sphi 0, %s42
      %s62 = sphi 0, %s62
      %s64 = sphi 0, %s62
      %s65 = sphi 0, %s64
      %s79 = sphi 0, %s65
      %s83 = sphi 0, %s83
      %s85 = sphi 0, %s83
      %s86 = sphi 0, %s85
      %s100 = sphi 0, %s86
      %s104 = sphi 0, %s104
      %s106 = sphi 0, %s104
      %s107 = sphi 0, %s106
      %s121 = sphi 0, %s107
      %s125 = sphi 0, %s125
      %s127 = sphi 0, %s125
      %s128 = sphi 0, %s127
      %s142 = sphi 0, %s128
      %s146 = sphi 0, %s146
      %s148 = sphi 0, %s146
      %s149 = sphi 0, %s148
      %s163 = sphi 0, %s149
      %s167 = sphi 0, %s167
      %s169 = sphi 0, %s167
      %s170 = sphi 0, %s169
      %s184 = sphi 0, %s170
      %s188 = sphi 0, %s188
      %s190 = sphi 0, %s188
      %s191 = sphi 0, %s190
      %s205 = sphi 0, %s191
      %s209 = sphi 0, %s209
      %s211 = sphi 0, %s209
      %s212 = sphi 0, %s211
      %s226 = sphi 0, %s212
      %s230 = sphi 0, %s230
      %s232 = sphi 0, %s230
      %s233 = sphi 0, %s232
      %s247 = sphi 0, %s233
      %s251 = sphi 0, %s251
      %s253 = sphi 0, %s251
      %s254 = sphi 0, %s253
      %s268 = sphi 0, %s254
      %s274 = sphi 0, %s276
      %s277 = sphi 0, %s274
      %s278 = sphi 0, %s277
      %s294 = sphi 0, %s278
    $region4: #{ncb_forward.1} parent=1 // loop_header_branch
      %31 = sbr.rel (%p29) target = $region8
    $region5: #{ncb_forward.1} parent=1 // loop_body
      %s33 = ssub.s32 %s28, 1
      %s34 = ssub.s32 %s28, 2
      %s35 = sadd.s32 %s28, 1
      %s36 = ssub.s32 %s28, %s35
      %p37 = scmp.eq.s32.totalorder %s36, 0
      %s39 = sadd.s32 %s38, 1
      %s40 = scalar_select %p37, %s38, %s39
      %p43 = pneg %p37
      %p44 = scmp.eq.s32.totalorder %s28, 1
      %p45 = por %p43, %p44
      %p46 = scmp.ne.s32.totalorder %s38, %s41
      %p47 = scmp.eq.s32.totalorder %s28, 0
      %p48 = por %p46, %p47
      %p49 = scmp.ne.s32.totalorder %s38, %s41
      %p50 = scmp.eq.s32.totalorder %s33, 1
      %p51 = por %p49, %p50
      %p52 = scmp.ne.s32.totalorder %s41, %s42
      %p53 = scmp.eq.s32.totalorder %s33, 0
      %p54 = por %p52, %p53
      %p55 = scmp.ne.s32.totalorder %s41, %s42
      %p56 = scmp.eq.s32.totalorder %s34, 1
      %p57 = por %p55, %p56
      %p59 = scmp.ne.s32.totalorder %s42, %s58
      %p60 = scmp.eq.s32.totalorder %s34, 0
      %p61 = por %p59, %p60
      %s63 = sadd.s32 %s62, 1
      %p66 = scmp.eq.s32.totalorder %s28, 1
      %p67 = scmp.ne.s32.totalorder %s62, %s64
      %p68 = scmp.eq.s32.totalorder %s28, 0
      %p69 = por %p67, %p68
      %p70 = scmp.ne.s32.totalorder %s62, %s64
      %p71 = scmp.eq.s32.totalorder %s33, 1
      %p72 = por %p70, %p71
      %p73 = scmp.ne.s32.totalorder %s64, %s65
      %p74 = scmp.eq.s32.totalorder %s33, 0
      %p75 = por %p73, %p74
      %p76 = scmp.ne.s32.totalorder %s64, %s65
      %p77 = scmp.eq.s32.totalorder %s34, 1
      %p78 = por %p76, %p77
      %p80 = scmp.ne.s32.totalorder %s65, %s79
      %p81 = scmp.eq.s32.totalorder %s34, 0
      %p82 = por %p80, %p81
      %s84 = sadd.s32 %s83, 1
      %p87 = scmp.eq.s32.totalorder %s28, 1
      %p88 = scmp.ne.s32.totalorder %s83, %s85
      %p89 = scmp.eq.s32.totalorder %s28, 0
      %p90 = por %p88, %p89
      %p91 = scmp.ne.s32.totalorder %s83, %s85
      %p92 = scmp.eq.s32.totalorder %s33, 1
      %p93 = por %p91, %p92
      %p94 = scmp.ne.s32.totalorder %s85, %s86
      %p95 = scmp.eq.s32.totalorder %s33, 0
      %p96 = por %p94, %p95
      %p97 = scmp.ne.s32.totalorder %s85, %s86
      %p98 = scmp.eq.s32.totalorder %s34, 1
      %p99 = por %p97, %p98
      %p101 = scmp.ne.s32.totalorder %s86, %s100
      %p102 = scmp.eq.s32.totalorder %s34, 0
      %p103 = por %p101, %p102
      %s105 = sadd.s32 %s104, 1
      %p108 = scmp.eq.s32.totalorder %s28, 1
      %p109 = scmp.ne.s32.totalorder %s104, %s106
      %p110 = scmp.eq.s32.totalorder %s28, 0
      %p111 = por %p109, %p110
      %p112 = scmp.ne.s32.totalorder %s104, %s106
      %p113 = scmp.eq.s32.totalorder %s33, 1
      %p114 = por %p112, %p113
      %p115 = scmp.ne.s32.totalorder %s106, %s107
      %p116 = scmp.eq.s32.totalorder %s33, 0
      %p117 = por %p115, %p116
      %p118 = scmp.ne.s32.totalorder %s106, %s107
      %p119 = scmp.eq.s32.totalorder %s34, 1
      %p120 = por %p118, %p119
      %p122 = scmp.ne.s32.totalorder %s107, %s121
      %p123 = scmp.eq.s32.totalorder %s34, 0
      %p124 = por %p122, %p123
      %s126 = sadd.s32 %s125, 1
      %p129 = scmp.eq.s32.totalorder %s28, 1
      %p130 = scmp.ne.s32.totalorder %s125, %s127
      %p131 = scmp.eq.s32.totalorder %s28, 0
      %p132 = por %p130, %p131
      %p133 = scmp.ne.s32.totalorder %s125, %s127
      %p134 = scmp.eq.s32.totalorder %s33, 1
      %p135 = por %p133, %p134
      %p136 = scmp.ne.s32.totalorder %s127, %s128
      %p137 = scmp.eq.s32.totalorder %s33, 0
      %p138 = por %p136, %p137
      %p139 = scmp.ne.s32.totalorder %s127, %s128
      %p140 = scmp.eq.s32.totalorder %s34, 1
      %p141 = por %p139, %p140
      %p143 = scmp.ne.s32.totalorder %s128, %s142
      %p144 = scmp.eq.s32.totalorder %s34, 0
      %p145 = por %p143, %p144
      %s147 = sadd.s32 %s146, 1
      %p150 = scmp.eq.s32.totalorder %s28, 1
      %p151 = scmp.ne.s32.totalorder %s146, %s148
      %p152 = scmp.eq.s32.totalorder %s28, 0
      %p153 = por %p151, %p152
      %p154 = scmp.ne.s32.totalorder %s146, %s148
      %p155 = scmp.eq.s32.totalorder %s33, 1
      %p156 = por %p154, %p155
      %p157 = scmp.ne.s32.totalorder %s148, %s149
      %p158 = scmp.eq.s32.totalorder %s33, 0
      %p159 = por %p157, %p158
      %p160 = scmp.ne.s32.totalorder %s148, %s149
      %p161 = scmp.eq.s32.totalorder %s34, 1
      %p162 = por %p160, %p161
      %p164 = scmp.ne.s32.totalorder %s149, %s163
      %p165 = scmp.eq.s32.totalorder %s34, 0
      %p166 = por %p164, %p165
      %s168 = sadd.s32 %s167, 1
      %p171 = scmp.eq.s32.totalorder %s28, 1
      %p172 = scmp.ne.s32.totalorder %s167, %s169
      %p173 = scmp.eq.s32.totalorder %s28, 0
      %p174 = por %p172, %p173
      %p175 = scmp.ne.s32.totalorder %s167, %s169
      %p176 = scmp.eq.s32.totalorder %s33, 1
      %p177 = por %p175, %p176
      %p178 = scmp.ne.s32.totalorder %s169, %s170
      %p179 = scmp.eq.s32.totalorder %s33, 0
      %p180 = por %p178, %p179
      %p181 = scmp.ne.s32.totalorder %s169, %s170
      %p182 = scmp.eq.s32.totalorder %s34, 1
      %p183 = por %p181, %p182
      %p185 = scmp.ne.s32.totalorder %s170, %s184
      %p186 = scmp.eq.s32.totalorder %s34, 0
      %p187 = por %p185, %p186
      %s189 = sadd.s32 %s188, 1
      %p192 = scmp.eq.s32.totalorder %s28, 1
      %p193 = scmp.ne.s32.totalorder %s188, %s190
      %p194 = scmp.eq.s32.totalorder %s28, 0
      %p195 = por %p193, %p194
      %p196 = scmp.ne.s32.totalorder %s188, %s190
      %p197 = scmp.eq.s32.totalorder %s33, 1
      %p198 = por %p196, %p197
      %p199 = scmp.ne.s32.totalorder %s190, %s191
      %p200 = scmp.eq.s32.totalorder %s33, 0
      %p201 = por %p199, %p200
      %p202 = scmp.ne.s32.totalorder %s190, %s191
      %p203 = scmp.eq.s32.totalorder %s34, 1
      %p204 = por %p202, %p203
      %p206 = scmp.ne.s32.totalorder %s191, %s205
      %p207 = scmp.eq.s32.totalorder %s34, 0
      %p208 = por %p206, %p207
      %s210 = sadd.s32 %s209, 1
      %p213 = scmp.eq.s32.totalorder %s28, 1
      %p214 = scmp.ne.s32.totalorder %s209, %s211
      %p215 = scmp.eq.s32.totalorder %s28, 0
      %p216 = por %p214, %p215
      %p217 = scmp.ne.s32.totalorder %s209, %s211
      %p218 = scmp.eq.s32.totalorder %s33, 1
      %p219 = por %p217, %p218
      %p220 = scmp.ne.s32.totalorder %s211, %s212
      %p221 = scmp.eq.s32.totalorder %s33, 0
      %p222 = por %p220, %p221
      %p223 = scmp.ne.s32.totalorder %s211, %s212
      %p224 = scmp.eq.s32.totalorder %s34, 1
      %p225 = por %p223, %p224
      %p227 = scmp.ne.s32.totalorder %s212, %s226
      %p228 = scmp.eq.s32.totalorder %s34, 0
      %p229 = por %p227, %p228
      %s231 = sadd.s32 %s230, 1
      %p234 = scmp.eq.s32.totalorder %s28, 1
      %p235 = scmp.ne.s32.totalorder %s230, %s232
      %p236 = scmp.eq.s32.totalorder %s28, 0
      %p237 = por %p235, %p236
      %p238 = scmp.ne.s32.totalorder %s230, %s232
      %p239 = scmp.eq.s32.totalorder %s33, 1
      %p240 = por %p238, %p239
      %p241 = scmp.ne.s32.totalorder %s232, %s233
      %p242 = scmp.eq.s32.totalorder %s33, 0
      %p243 = por %p241, %p242
      %p244 = scmp.ne.s32.totalorder %s232, %s233
      %p245 = scmp.eq.s32.totalorder %s34, 1
      %p246 = por %p244, %p245
      %p248 = scmp.ne.s32.totalorder %s233, %s247
      %p249 = scmp.eq.s32.totalorder %s34, 0
      %p250 = por %p248, %p249
      %s252 = sadd.s32 %s251, 1
      %p255 = scmp.eq.s32.totalorder %s28, 1
      %p256 = scmp.ne.s32.totalorder %s251, %s253
      %p257 = scmp.eq.s32.totalorder %s28, 0
      %p258 = por %p256, %p257
      %p259 = scmp.ne.s32.totalorder %s251, %s253
      %p260 = scmp.eq.s32.totalorder %s33, 1
      %p261 = por %p259, %p260
      %p262 = scmp.ne.s32.totalorder %s253, %s254
      %p263 = scmp.eq.s32.totalorder %s33, 0
      %p264 = por %p262, %p263
      %p265 = scmp.ne.s32.totalorder %s253, %s254
      %p266 = scmp.eq.s32.totalorder %s34, 1
      %p267 = por %p265, %p266
      %p269 = scmp.ne.s32.totalorder %s254, %s268
      %p270 = scmp.eq.s32.totalorder %s34, 0
      %p271 = por %p269, %p270
      %s272 = ssub.s32 %s28, %s35
      %p273 = scmp.eq.s32.totalorder %s272, 0
      %s275 = sadd.s32 %s274, 1
      %s276 = scalar_select %p273, %s274, %s275
      %p279 = pneg %p273
      %p280 = scmp.eq.s32.totalorder %s28, 1
      %p281 = por %p279, %p280
      %p282 = scmp.ne.s32.totalorder %s274, %s277
      %p283 = scmp.eq.s32.totalorder %s28, 0
      %p284 = por %p282, %p283
      %p285 = scmp.ne.s32.totalorder %s274, %s277
      %p286 = scmp.eq.s32.totalorder %s33, 1
      %p287 = por %p285, %p286
      %p288 = scmp.ne.s32.totalorder %s277, %s278
      %p289 = scmp.eq.s32.totalorder %s33, 0
      %p290 = por %p288, %p289
      %p291 = scmp.ne.s32.totalorder %s277, %s278
      %p292 = scmp.eq.s32.totalorder %s34, 1
      %p293 = por %p291, %p292
      %p295 = scmp.ne.s32.totalorder %s278, %s294
      %p296 = scmp.eq.s32.totalorder %s34, 0
      %p297 = por %p295, %p296
      %p298 = scmp.le.s32.totalorder 1, %s28
      %p299 = scmp.lt.s32.totalorder %s28, 3
      %p300 = pnand %p298, %p299
      %p301 = pneg %p300
      // Predicated region
      $region9: #{ncb_forward.1} parent=5 // pred_check
        _
      $region10: #{ncb_forward.1} parent=5 // pred_check_branch
        %303 = sbr.rel (%p300) target = $region12
      $region11: #{ncb_forward.1} parent=5 // pred_region
        %s304 = ssub.s32 %s28, 1
        // Predicated region
        $region13: #{ncb_forward.1} parent=11 // pred_check
          %p305 = pneg %p75
        $region14: #{ncb_forward.1} parent=11 // pred_check_branch
          %307 = sbr.rel (%p305) target = $region16
        $region15: #{ncb_forward.1} parent=11 // pred_region
          %s309 = ssub.s32 192, 192
          %310 = vsyncadd [#allocation7], %s309
          %s311 = sshll.u32 [#allocation6], 4
          %s312 = int_to_ptr.vmem [resolvable:$true] %s311
          %317 = dma.hbm_to_vmem [thread:$0]  %s1, 192, %s312, [#allocation7], 64, 64, 4
        $region16: #{ncb_forward.1} parent=11 // pred_fallthru
          _
        // Predicated region
        $region17: #{ncb_forward.1} parent=11 // pred_check
          %p318 = pneg %p96
        $region18: #{ncb_forward.1} parent=11 // pred_check_branch
          %320 = sbr.rel (%p318) target = $region20
        $region19: #{ncb_forward.1} parent=11 // pred_region
          %s322 = ssub.s32 16, 16
          %323 = vsyncadd [#allocation7], %s322
          %s325 = sshll.u32 [#allocation8], 4
          %s326 = int_to_ptr.vmem [resolvable:$true] %s325
          %328 = dma.hbm_to_vmem [thread:$0]  %s2, 16, %s326, [#allocation7]
        $region20: #{ncb_forward.1} parent=11 // pred_fallthru
          _
        // Predicated region
        $region21: #{ncb_forward.1} parent=11 // pred_check
          %p329 = pneg %p117
        $region22: #{ncb_forward.1} parent=11 // pred_check_branch
          %331 = sbr.rel (%p329) target = $region24
        $region23: #{ncb_forward.1} parent=11 // pred_region
          %s333 = ssub.s32 16, 16
          %334 = vsyncadd [#allocation10], %s333
          %s336 = sshll.u32 [#allocation9], 4
          %s337 = int_to_ptr.vmem [resolvable:$true] %s336
          %339 = dma.hbm_to_vmem [thread:$0]  %s3, 16, %s337, [#allocation10]
        $region24: #{ncb_forward.1} parent=11 // pred_fallthru
          _
        // Predicated region
        $region25: #{ncb_forward.1} parent=11 // pred_check
          %p340 = pneg %p138
        $region26: #{ncb_forward.1} parent=11 // pred_check_branch
          %342 = sbr.rel (%p340) target = $region28
        $region27: #{ncb_forward.1} parent=11 // pred_region
          %s344 = ssub.s32 32, 32
          %345 = vsyncadd [#allocation10], %s344
          %s347 = sshll.u32 [#allocation11], 4
          %s348 = int_to_ptr.vmem [resolvable:$true] %s347
          %350 = dma.hbm_to_vmem [thread:$0]  %s4, 32, %s348, [#allocation10]
        $region28: #{ncb_forward.1} parent=11 // pred_fallthru
          _
        // Predicated region
        $region29: #{ncb_forward.1} parent=11 // pred_check
          %p351 = pneg %p159
        $region30: #{ncb_forward.1} parent=11 // pred_check_branch
          %353 = sbr.rel (%p351) target = $region32
        $region31: #{ncb_forward.1} parent=11 // pred_region
          %s355 = ssub.s32 32, 32
          %356 = vsyncadd [#allocation13], %s355
          %s358 = sshll.u32 [#allocation12], 4
          %s359 = int_to_ptr.vmem [resolvable:$true] %s358
          %361 = dma.hbm_to_vmem [thread:$0]  %s5, 32, %s359, [#allocation13]
        $region32: #{ncb_forward.1} parent=11 // pred_fallthru
          _
        // Predicated region
        $region33: #{ncb_forward.1} parent=11 // pred_check
          %p362 = pneg %p180
        $region34: #{ncb_forward.1} parent=11 // pred_check_branch
          %364 = sbr.rel (%p362) target = $region36
        $region35: #{ncb_forward.1} parent=11 // pred_region
          %s366 = ssub.s32 16, 16
          %367 = vsyncadd [#allocation13], %s366
          %s369 = sshll.u32 [#allocation14], 4
          %s370 = int_to_ptr.vmem [resolvable:$true] %s369
          %372 = dma.hbm_to_vmem [thread:$0]  %s6, 16, %s370, [#allocation13]
        $region36: #{ncb_forward.1} parent=11 // pred_fallthru
          _
        // Predicated region
        $region37: #{ncb_forward.1} parent=11 // pred_check
          %p373 = pneg %p201
        $region38: #{ncb_forward.1} parent=11 // pred_check_branch
          %375 = sbr.rel (%p373) target = $region40
        $region39: #{ncb_forward.1} parent=11 // pred_region
          %s377 = ssub.s32 16, 16
          %378 = vsyncadd [#allocation16], %s377
          %s380 = sshll.u32 [#allocation15], 4
          %s381 = int_to_ptr.vmem [resolvable:$true] %s380
          %383 = dma.hbm_to_vmem [thread:$0]  %s7, 16, %s381, [#allocation16]
        $region40: #{ncb_forward.1} parent=11 // pred_fallthru
          _
        // Predicated region
        $region41: #{ncb_forward.1} parent=11 // pred_check
          %p384 = pneg %p222
        $region42: #{ncb_forward.1} parent=11 // pred_check_branch
          %386 = sbr.rel (%p384) target = $region44
        $region43: #{ncb_forward.1} parent=11 // pred_region
          %s388 = ssub.s32 16, 16
          %389 = vsyncadd [#allocation16], %s388
          %s391 = sshll.u32 [#allocation17], 4
          %s392 = int_to_ptr.vmem [resolvable:$true] %s391
          %394 = dma.hbm_to_vmem [thread:$0]  %s8, 16, %s392, [#allocation16]
        $region44: #{ncb_forward.1} parent=11 // pred_fallthru
          _
        // Predicated region
        $region45: #{ncb_forward.1} parent=11 // pred_check
          %p395 = pneg %p243
        $region46: #{ncb_forward.1} parent=11 // pred_check_branch
          %397 = sbr.rel (%p395) target = $region48
        $region47: #{ncb_forward.1} parent=11 // pred_region
          %s399 = ssub.s32 128, 128
          %400 = vsyncadd [#allocation19], %s399
          %s401 = sshll.u32 [#allocation18], 4
          %s402 = int_to_ptr.vmem [resolvable:$true] %s401
          %407 = dma.hbm_to_vmem [thread:$0]  %s9, 128, %s402, [#allocation19], 64, 64, 4
        $region48: #{ncb_forward.1} parent=11 // pred_fallthru
          _
        // Predicated region
        $region49: #{ncb_forward.1} parent=11 // pred_check
          %p408 = pneg %p264
        $region50: #{ncb_forward.1} parent=11 // pred_check_branch
          %410 = sbr.rel (%p408) target = $region52
        $region51: #{ncb_forward.1} parent=11 // pred_region
          %s412 = ssub.s32 16, 16
          %413 = vsyncadd [#allocation19], %s412
          %s415 = sshll.u32 [#allocation20], 4
          %s416 = int_to_ptr.vmem [resolvable:$true] %s415
          %418 = dma.hbm_to_vmem [thread:$0]  %s10, 16, %s416, [#allocation19]
        $region52: #{ncb_forward.1} parent=11 // pred_fallthru
          _
      $region12: #{ncb_forward.1} parent=5 // pred_fallthru
        _
      %p419 = scmp.lt.s32.totalorder %s28, 2
      // Predicated region
      $region53: #{ncb_forward.1} parent=5 // pred_check
        %p420 = pneg %p419
      $region54: #{ncb_forward.1} parent=5 // pred_check_branch
        %422 = sbr.rel (%p420) target = $region56
      $region55: #{ncb_forward.1} parent=5 // pred_region
        // Predicated region
        $region57: #{ncb_forward.1} parent=55 // pred_check
          %p423 = pneg %p48
        $region58: #{ncb_forward.1} parent=55 // pred_check_branch
          %425 = sbr.rel (%p423) target = $region60
        $region59: #{ncb_forward.1} parent=55 // pred_region
          %s426 = sand.u32 %s38, 1
          %s427 = scalar_lea.sflag [#allocation4], %s426
          %s428 = sand.u32 %s38, 1
          %s429 = smul.addr %s428, 256
          %s430 = scalar_lea.vmem [#allocation3], %s429
          %s432 = ssub.s32 4096, 4096
          %433 = vsyncadd %s427, %s432
          %s434 = smul.addr %s28, 32
          %s435 = smul.addr %s434, 128
          %s436 = scalar_lea.hbm %s0, %s435
          %s437 = sshll.u32 %s430, 4
          %s438 = int_to_ptr.vmem [resolvable:$true] %s437
          %443 = dma.hbm_to_vmem [thread:$0]  %s436, 4096, %s438, %s427, 128, 128, 8
        $region60: #{ncb_forward.1} parent=55 // pred_fallthru
          _
      $region56: #{ncb_forward.1} parent=5 // pred_fallthru
        _
      %p444 = scmp.le.s32.totalorder 1, %s28
      %p445 = scmp.lt.s32.totalorder %s28, 3
      %p446 = pnand %p444, %p445
      %p447 = pneg %p446
      // Predicated region
      $region61: #{ncb_forward.1} parent=5 // pred_check
        _
      $region62: #{ncb_forward.1} parent=5 // pred_check_branch
        %449 = sbr.rel (%p446) target = $region64
      $region63: #{ncb_forward.1} parent=5 // pred_region
        %s450 = ssub.s32 %s28, 1
        %s451 = sand.u32 %s41, 1
        %s452 = scalar_lea.sflag [#allocation4], %s451
        %s453 = sand.u32 %s41, 1
        %s454 = smul.addr %s453, 256
        %s455 = scalar_lea.vmem [#allocation3], %s454
        // Predicated region
        $region65: #{ncb_forward.1} parent=63 // pred_check
          %p456 = pneg %p54
        $region66: #{ncb_forward.1} parent=63 // pred_check_branch
          %458 = sbr.rel (%p456) target = $region68
        $region67: #{ncb_forward.1} parent=63 // pred_region
          %459 = dma.done %s452, 4096
        $region68: #{ncb_forward.1} parent=63 // pred_fallthru
          _
        // Predicated region
        $region69: #{ncb_forward.1} parent=63 // pred_check
          %p460 = pneg %p75
        $region70: #{ncb_forward.1} parent=63 // pred_check_branch
          %462 = sbr.rel (%p460) target = $region72
        $region71: #{ncb_forward.1} parent=63 // pred_region
          %463 = dma.done [#allocation7], 192
        $region72: #{ncb_forward.1} parent=63 // pred_fallthru
          _
        // Predicated region
        $region73: #{ncb_forward.1} parent=63 // pred_check
          %p464 = pneg %p96
        $region74: #{ncb_forward.1} parent=63 // pred_check_branch
          %466 = sbr.rel (%p464) target = $region76
        $region75: #{ncb_forward.1} parent=63 // pred_region
          %467 = dma.done [#allocation7], 16
        $region76: #{ncb_forward.1} parent=63 // pred_fallthru
          _
        // Predicated region
        $region77: #{ncb_forward.1} parent=63 // pred_check
          %p468 = pneg %p117
        $region78: #{ncb_forward.1} parent=63 // pred_check_branch
          %470 = sbr.rel (%p468) target = $region80
        $region79: #{ncb_forward.1} parent=63 // pred_region
          %471 = dma.done [#allocation10], 16
        $region80: #{ncb_forward.1} parent=63 // pred_fallthru
          _
        // Predicated region
        $region81: #{ncb_forward.1} parent=63 // pred_check
          %p472 = pneg %p138
        $region82: #{ncb_forward.1} parent=63 // pred_check_branch
          %474 = sbr.rel (%p472) target = $region84
        $region83: #{ncb_forward.1} parent=63 // pred_region
          %475 = dma.done [#allocation10], 32
        $region84: #{ncb_forward.1} parent=63 // pred_fallthru
          _
        // Predicated region
        $region85: #{ncb_forward.1} parent=63 // pred_check
          %p476 = pneg %p159
        $region86: #{ncb_forward.1} parent=63 // pred_check_branch
          %478 = sbr.rel (%p476) target = $region88
        $region87: #{ncb_forward.1} parent=63 // pred_region
          %479 = dma.done [#allocation13], 32
        $region88: #{ncb_forward.1} parent=63 // pred_fallthru
          _
        // Predicated region
        $region89: #{ncb_forward.1} parent=63 // pred_check
          %p480 = pneg %p180
        $region90: #{ncb_forward.1} parent=63 // pred_check_branch
          %482 = sbr.rel (%p480) target = $region92
        $region91: #{ncb_forward.1} parent=63 // pred_region
          %483 = dma.done [#allocation13], 16
        $region92: #{ncb_forward.1} parent=63 // pred_fallthru
          _
        // Predicated region
        $region93: #{ncb_forward.1} parent=63 // pred_check
          %p484 = pneg %p201
        $region94: #{ncb_forward.1} parent=63 // pred_check_branch
          %486 = sbr.rel (%p484) target = $region96
        $region95: #{ncb_forward.1} parent=63 // pred_region
          %487 = dma.done [#allocation16], 16
        $region96: #{ncb_forward.1} parent=63 // pred_fallthru
          _
        // Predicated region
        $region97: #{ncb_forward.1} parent=63 // pred_check
          %p488 = pneg %p222
        $region98: #{ncb_forward.1} parent=63 // pred_check_branch
          %490 = sbr.rel (%p488) target = $region100
        $region99: #{ncb_forward.1} parent=63 // pred_region
          %491 = dma.done [#allocation16], 16
        $region100: #{ncb_forward.1} parent=63 // pred_fallthru
          _
        // Predicated region
        $region101: #{ncb_forward.1} parent=63 // pred_check
          %p492 = pneg %p243
        $region102: #{ncb_forward.1} parent=63 // pred_check_branch
          %494 = sbr.rel (%p492) target = $region104
        $region103: #{ncb_forward.1} parent=63 // pred_region
          %495 = dma.done [#allocation19], 128
        $region104: #{ncb_forward.1} parent=63 // pred_fallthru
          _
        // Predicated region
        $region105: #{ncb_forward.1} parent=63 // pred_check
          %p496 = pneg %p264
        $region106: #{ncb_forward.1} parent=63 // pred_check_branch
          %498 = sbr.rel (%p496) target = $region108
        $region107: #{ncb_forward.1} parent=63 // pred_region
          %499 = dma.done [#allocation19], 16
        $region108: #{ncb_forward.1} parent=63 // pred_fallthru
          _
        %s500 = sand.u32 %s41, 1
        %s501 = scalar_lea.sflag [#allocation4], %s500
        %s502 = sand.u32 %s41, 1
        %s503 = smul.addr %s502, 256
        %s504 = scalar_lea.vmem [#allocation3], %s503
        %p505 = pneg %p54
        %p506 = pneg %p51
        %p507 = pneg %p75
        %p508 = pneg %p72
        %p509 = pneg %p96
        %p510 = pneg %p93
        %p511 = pneg %p117
        %p512 = pneg %p114
        %p513 = pneg %p138
        %p514 = pneg %p135
        %p515 = pneg %p159
        %p516 = pneg %p156
        %p517 = pneg %p180
        %p518 = pneg %p177
        %p519 = pneg %p201
        %p520 = pneg %p198
        %p521 = pneg %p222
        %p522 = pneg %p219
        %p523 = pneg %p243
        %p524 = pneg %p240
        %p525 = pneg %p264
        %p526 = pneg %p261
        %p527 = pneg %p290
        %p528 = pneg %p287
        %s529 = sand.u32 %s277, 1
        %s530 = scalar_lea.sflag [#allocation5], %s529
        %s531 = sand.u32 %s277, 1
        %s532 = smul.addr %s531, 256
        %s533 = scalar_lea.vmem [#allocation21], %s532
        %v535 = vld [vmem:[%s455] sm:$0xff]
        %v536 = vld [vmem:[%s455 + $0x8] sm:$0xff]
        %v537 = vld [vmem:[%s455 + $0x10] sm:$0xff]
        %v538 = vld [vmem:[%s455 + $0x18] sm:$0xff]
        %v539 = vld [vmem:[%s455 + $0x20] sm:$0xff]
        %v540 = vld [vmem:[%s455 + $0x28] sm:$0xff]
        %v541 = vld [vmem:[%s455 + $0x30] sm:$0xff]
        %v542 = vld [vmem:[%s455 + $0x38] sm:$0xff]
        %v543 = vld [vmem:[%s455 + $0x40] sm:$0xff]
        %v544 = vld [vmem:[%s455 + $0x48] sm:$0xff]
        %v545 = vld [vmem:[%s455 + $0x50] sm:$0xff]
        %v546 = vld [vmem:[%s455 + $0x58] sm:$0xff]
        %v547 = vld [vmem:[%s455 + $0x60] sm:$0xff]
        %v548 = vld [vmem:[%s455 + $0x68] sm:$0xff]
        %v549 = vld [vmem:[%s455 + $0x70] sm:$0xff]
        %v550 = vld [vmem:[%s455 + $0x78] sm:$0xff]
        %v551 = vld [vmem:[%s455 + $0x80] sm:$0xff]
        %v552 = vld [vmem:[%s455 + $0x88] sm:$0xff]
        %v553 = vld [vmem:[%s455 + $0x90] sm:$0xff]
        %v554 = vld [vmem:[%s455 + $0x98] sm:$0xff]
        %v555 = vld [vmem:[%s455 + $0xa0] sm:$0xff]
        %v556 = vld [vmem:[%s455 + $0xa8] sm:$0xff]
        %v557 = vld [vmem:[%s455 + $0xb0] sm:$0xff]
        %v558 = vld [vmem:[%s455 + $0xb8] sm:$0xff]
        %v559 = vld [vmem:[%s455 + $0xc0] sm:$0xff]
        %v560 = vld [vmem:[%s455 + $0xc8] sm:$0xff]
        %v561 = vld [vmem:[%s455 + $0xd0] sm:$0xff]
        %v562 = vld [vmem:[%s455 + $0xd8] sm:$0xff]
        %v563 = vld [vmem:[%s455 + $0xe0] sm:$0xff]
        %v564 = vld [vmem:[%s455 + $0xe8] sm:$0xff]
        %v565 = vld [vmem:[%s455 + $0xf0] sm:$0xff]
        %v566 = vld [vmem:[%s455 + $0xf8] sm:$0xff]
        %v567 = vld [vmem:[#allocation6] sm:$0x7]
        %v568 = vld [vmem:[#allocation6 + $0x4] sm:$0x7]
        %v569 = vld [vmem:[#allocation6 + $0x8] sm:$0x7]
        %v570 = vlaneseq
        %v571 = vshrl.u32 %v570, 7
        %v572 = vadd.s32 %v571, 8
        %v573 = vadd.s32 %v571, 16
        %v574 = vadd.s32 %v571, 24
        %v575 = vadd.s32 %v571, 32
        %v576 = vadd.s32 %v571, 40
        %v577 = vadd.s32 %v571, 48
        %v578 = vadd.s32 %v571, 56
        %v579 = vadd.s32 %v571, 64
        %v580 = vadd.s32 %v571, 72
        %v581 = vadd.s32 %v571, 80
        %v582 = vadd.s32 %v571, 88
        %v583 = vadd.s32 %v571, 96
        %v584 = vadd.s32 %v571, 104
        %v585 = vadd.s32 %v571, 112
        %v586 = vadd.s32 %v571, 120
        %v587 = vadd.s32 %v571, 128
        %v588 = vadd.s32 %v571, 136
        %v589 = vadd.s32 %v571, 144
        %v590 = vadd.s32 %v571, 152
        %v591 = vadd.s32 %v571, 160
        %v592 = vadd.s32 %v571, 168
        %v593 = vadd.s32 %v571, 176
        %v594 = vadd.s32 %v571, 184
        %v595 = vadd.s32 %v571, 192
        %v596 = vadd.s32 %v571, 200
        %v597 = vadd.s32 %v571, 208
        %v598 = vadd.s32 %v571, 216
        %v599 = vadd.s32 %v571, 224
        %v600 = vadd.s32 %v571, 232
        %v601 = vadd.s32 %v571, 240
        %v602 = vadd.s32 %v571, 248
        %vm603 = vcmp.lt.s32.totalorder %v571, 0
        %v604 = vsub.s32 0, %v571
        %v605 = vsel %vm603, %v604, %v571
        %v606 = vshrl.u32 %v605, 4
        %v607 = vand.u32 %v605, 15
        %v608 = vsub.s32 0, %v607
        %v609 = vsel %vm603, %v608, %v607
        %vm610 = vcmp.lt.s32.totalorder %v572, 0
        %v611 = vsub.s32 0, %v572
        %v612 = vsel %vm610, %v611, %v572
        %v613 = vshrl.u32 %v612, 4
        %v614 = vand.u32 %v612, 15
        %v615 = vsub.s32 0, %v614
        %v616 = vsel %vm610, %v615, %v614
        %vm617 = vcmp.lt.s32.totalorder %v573, 0
        %v618 = vsub.s32 0, %v573
        %v619 = vsel %vm617, %v618, %v573
        %v620 = vshrl.u32 %v619, 4
        %v621 = vand.u32 %v619, 15
        %v622 = vsub.s32 0, %v621
        %v623 = vsel %vm617, %v622, %v621
        %vm624 = vcmp.lt.s32.totalorder %v574, 0
        %v625 = vsub.s32 0, %v574
        %v626 = vsel %vm624, %v625, %v574
        %v627 = vshrl.u32 %v626, 4
        %v628 = vand.u32 %v626, 15
        %v629 = vsub.s32 0, %v628
        %v630 = vsel %vm624, %v629, %v628
        %vm631 = vcmp.lt.s32.totalorder %v575, 0
        %v632 = vsub.s32 0, %v575
        %v633 = vsel %vm631, %v632, %v575
        %v634 = vshrl.u32 %v633, 4
        %v635 = vand.u32 %v633, 15
        %v636 = vsub.s32 0, %v635
        %v637 = vsel %vm631, %v636, %v635
        %vm638 = vcmp.lt.s32.totalorder %v576, 0
        %v639 = vsub.s32 0, %v576
        %v640 = vsel %vm638, %v639, %v576
        %v641 = vshrl.u32 %v640, 4
        %v642 = vand.u32 %v640, 15
        %v643 = vsub.s32 0, %v642
        %v644 = vsel %vm638, %v643, %v642
        %vm645 = vcmp.lt.s32.totalorder %v577, 0
        %v646 = vsub.s32 0, %v577
        %v647 = vsel %vm645, %v646, %v577
        %v648 = vshrl.u32 %v647, 4
        %v649 = vand.u32 %v647, 15
        %v650 = vsub.s32 0, %v649
        %v651 = vsel %vm645, %v650, %v649
        %vm652 = vcmp.lt.s32.totalorder %v578, 0
        %v653 = vsub.s32 0, %v578
        %v654 = vsel %vm652, %v653, %v578
        %v655 = vshrl.u32 %v654, 4
        %v656 = vand.u32 %v654, 15
        %v657 = vsub.s32 0, %v656
        %v658 = vsel %vm652, %v657, %v656
        %vm659 = vcmp.lt.s32.totalorder %v579, 0
        %v660 = vsub.s32 0, %v579
        %v661 = vsel %vm659, %v660, %v579
        %v662 = vshrl.u32 %v661, 4
        %v663 = vand.u32 %v661, 15
        %v664 = vsub.s32 0, %v663
        %v665 = vsel %vm659, %v664, %v663
        %vm666 = vcmp.lt.s32.totalorder %v580, 0
        %v667 = vsub.s32 0, %v580
        %v668 = vsel %vm666, %v667, %v580
        %v669 = vshrl.u32 %v668, 4
        %v670 = vand.u32 %v668, 15
        %v671 = vsub.s32 0, %v670
        %v672 = vsel %vm666, %v671, %v670
        %vm673 = vcmp.lt.s32.totalorder %v581, 0
        %v674 = vsub.s32 0, %v581
        %v675 = vsel %vm673, %v674, %v581
        %v676 = vshrl.u32 %v675, 4
        %v677 = vand.u32 %v675, 15
        %v678 = vsub.s32 0, %v677
        %v679 = vsel %vm673, %v678, %v677
        %vm680 = vcmp.lt.s32.totalorder %v582, 0
        %v681 = vsub.s32 0, %v582
        %v682 = vsel %vm680, %v681, %v582
        %v683 = vshrl.u32 %v682, 4
        %v684 = vand.u32 %v682, 15
        %v685 = vsub.s32 0, %v684
        %v686 = vsel %vm680, %v685, %v684
        %vm687 = vcmp.lt.s32.totalorder %v583, 0
        %v688 = vsub.s32 0, %v583
        %v689 = vsel %vm687, %v688, %v583
        %v690 = vshrl.u32 %v689, 4
        %v691 = vand.u32 %v689, 15
        %v692 = vsub.s32 0, %v691
        %v693 = vsel %vm687, %v692, %v691
        %vm694 = vcmp.lt.s32.totalorder %v584, 0
        %v695 = vsub.s32 0, %v584
        %v696 = vsel %vm694, %v695, %v584
        %v697 = vshrl.u32 %v696, 4
        %v698 = vand.u32 %v696, 15
        %v699 = vsub.s32 0, %v698
        %v700 = vsel %vm694, %v699, %v698
        %vm701 = vcmp.lt.s32.totalorder %v585, 0
        %v702 = vsub.s32 0, %v585
        %v703 = vsel %vm701, %v702, %v585
        %v704 = vshrl.u32 %v703, 4
        %v705 = vand.u32 %v703, 15
        %v706 = vsub.s32 0, %v705
        %v707 = vsel %vm701, %v706, %v705
        %vm708 = vcmp.lt.s32.totalorder %v586, 0
        %v709 = vsub.s32 0, %v586
        %v710 = vsel %vm708, %v709, %v586
        %v711 = vshrl.u32 %v710, 4
        %v712 = vand.u32 %v710, 15
        %v713 = vsub.s32 0, %v712
        %v714 = vsel %vm708, %v713, %v712
        %vm715 = vcmp.lt.s32.totalorder %v587, 0
        %v716 = vsub.s32 0, %v587
        %v717 = vsel %vm715, %v716, %v587
        %v718 = vshrl.u32 %v717, 4
        %v719 = vand.u32 %v717, 15
        %v720 = vsub.s32 0, %v719
        %v721 = vsel %vm715, %v720, %v719
        %vm722 = vcmp.lt.s32.totalorder %v588, 0
        %v723 = vsub.s32 0, %v588
        %v724 = vsel %vm722, %v723, %v588
        %v725 = vshrl.u32 %v724, 4
        %v726 = vand.u32 %v724, 15
        %v727 = vsub.s32 0, %v726
        %v728 = vsel %vm722, %v727, %v726
        %vm729 = vcmp.lt.s32.totalorder %v589, 0
        %v730 = vsub.s32 0, %v589
        %v731 = vsel %vm729, %v730, %v589
        %v732 = vshrl.u32 %v731, 4
        %v733 = vand.u32 %v731, 15
        %v734 = vsub.s32 0, %v733
        %v735 = vsel %vm729, %v734, %v733
        %vm736 = vcmp.lt.s32.totalorder %v590, 0
        %v737 = vsub.s32 0, %v590
        %v738 = vsel %vm736, %v737, %v590
        %v739 = vshrl.u32 %v738, 4
        %v740 = vand.u32 %v738, 15
        %v741 = vsub.s32 0, %v740
        %v742 = vsel %vm736, %v741, %v740
        %vm743 = vcmp.lt.s32.totalorder %v591, 0
        %v744 = vsub.s32 0, %v591
        %v745 = vsel %vm743, %v744, %v591
        %v746 = vshrl.u32 %v745, 4
        %v747 = vand.u32 %v745, 15
        %v748 = vsub.s32 0, %v747
        %v749 = vsel %vm743, %v748, %v747
        %vm750 = vcmp.lt.s32.totalorder %v592, 0
        %v751 = vsub.s32 0, %v592
        %v752 = vsel %vm750, %v751, %v592
        %v753 = vshrl.u32 %v752, 4
        %v754 = vand.u32 %v752, 15
        %v755 = vsub.s32 0, %v754
        %v756 = vsel %vm750, %v755, %v754
        %vm757 = vcmp.lt.s32.totalorder %v593, 0
        %v758 = vsub.s32 0, %v593
        %v759 = vsel %vm757, %v758, %v593
        %v760 = vshrl.u32 %v759, 4
        %v761 = vand.u32 %v759, 15
        %v762 = vsub.s32 0, %v761
        %v763 = vsel %vm757, %v762, %v761
        %vm764 = vcmp.lt.s32.totalorder %v594, 0
        %v765 = vsub.s32 0, %v594
        %v766 = vsel %vm764, %v765, %v594
        %v767 = vshrl.u32 %v766, 4
        %v768 = vand.u32 %v766, 15
        %v769 = vsub.s32 0, %v768
        %v770 = vsel %vm764, %v769, %v768
        %vm771 = vcmp.lt.s32.totalorder %v595, 0
        %v772 = vsub.s32 0, %v595
        %v773 = vsel %vm771, %v772, %v595
        %v774 = vshrl.u32 %v773, 4
        %v775 = vand.u32 %v773, 15
        %v776 = vsub.s32 0, %v775
        %v777 = vsel %vm771, %v776, %v775
        %vm778 = vcmp.lt.s32.totalorder %v596, 0
        %v779 = vsub.s32 0, %v596
        %v780 = vsel %vm778, %v779, %v596
        %v781 = vshrl.u32 %v780, 4
        %v782 = vand.u32 %v780, 15
        %v783 = vsub.s32 0, %v782
        %v784 = vsel %vm778, %v783, %v782
        %vm785 = vcmp.lt.s32.totalorder %v597, 0
        %v786 = vsub.s32 0, %v597
        %v787 = vsel %vm785, %v786, %v597
        %v788 = vshrl.u32 %v787, 4
        %v789 = vand.u32 %v787, 15
        %v790 = vsub.s32 0, %v789
        %v791 = vsel %vm785, %v790, %v789
        %vm792 = vcmp.lt.s32.totalorder %v598, 0
        %v793 = vsub.s32 0, %v598
        %v794 = vsel %vm792, %v793, %v598
        %v795 = vshrl.u32 %v794, 4
        %v796 = vand.u32 %v794, 15
        %v797 = vsub.s32 0, %v796
        %v798 = vsel %vm792, %v797, %v796
        %vm799 = vcmp.lt.s32.totalorder %v599, 0
        %v800 = vsub.s32 0, %v599
        %v801 = vsel %vm799, %v800, %v599
        %v802 = vshrl.u32 %v801, 4
        %v803 = vand.u32 %v801, 15
        %v804 = vsub.s32 0, %v803
        %v805 = vsel %vm799, %v804, %v803
        %vm806 = vcmp.lt.s32.totalorder %v600, 0
        %v807 = vsub.s32 0, %v600
        %v808 = vsel %vm806, %v807, %v600
        %v809 = vshrl.u32 %v808, 4
        %v810 = vand.u32 %v808, 15
        %v811 = vsub.s32 0, %v810
        %v812 = vsel %vm806, %v811, %v810
        %vm813 = vcmp.lt.s32.totalorder %v601, 0
        %v814 = vsub.s32 0, %v601
        %v815 = vsel %vm813, %v814, %v601
        %v816 = vshrl.u32 %v815, 4
        %v817 = vand.u32 %v815, 15
        %v818 = vsub.s32 0, %v817
        %v819 = vsel %vm813, %v818, %v817
        %vm820 = vcmp.lt.s32.totalorder %v602, 0
        %v821 = vsub.s32 0, %v602
        %v822 = vsel %vm820, %v821, %v602
        %v823 = vshrl.u32 %v822, 4
        %v824 = vand.u32 %v822, 15
        %v825 = vsub.s32 0, %v824
        %v826 = vsel %vm820, %v825, %v824
        %vm827 = vcmp.ne.s32.totalorder %v609, 0
        %vm828 = vcmp.ne.s32.totalorder %v616, 0
        %vm829 = vcmp.ne.s32.totalorder %v623, 0
        %vm830 = vcmp.ne.s32.totalorder %v630, 0
        %vm831 = vcmp.ne.s32.totalorder %v637, 0
        %vm832 = vcmp.ne.s32.totalorder %v644, 0
        %vm833 = vcmp.ne.s32.totalorder %v651, 0
        %vm834 = vcmp.ne.s32.totalorder %v658, 0
        %vm835 = vcmp.ne.s32.totalorder %v665, 0
        %vm836 = vcmp.ne.s32.totalorder %v672, 0
        %vm837 = vcmp.ne.s32.totalorder %v679, 0
        %vm838 = vcmp.ne.s32.totalorder %v686, 0
        %vm839 = vcmp.ne.s32.totalorder %v693, 0
        %vm840 = vcmp.ne.s32.totalorder %v700, 0
        %vm841 = vcmp.ne.s32.totalorder %v707, 0
        %vm842 = vcmp.ne.s32.totalorder %v714, 0
        %vm843 = vcmp.ne.s32.totalorder %v721, 0
        %vm844 = vcmp.ne.s32.totalorder %v728, 0
        %vm845 = vcmp.ne.s32.totalorder %v735, 0
        %vm846 = vcmp.ne.s32.totalorder %v742, 0
        %vm847 = vcmp.ne.s32.totalorder %v749, 0
        %vm848 = vcmp.ne.s32.totalorder %v756, 0
        %vm849 = vcmp.ne.s32.totalorder %v763, 0
        %vm850 = vcmp.ne.s32.totalorder %v770, 0
        %vm851 = vcmp.ne.s32.totalorder %v777, 0
        %vm852 = vcmp.ne.s32.totalorder %v784, 0
        %vm853 = vcmp.ne.s32.totalorder %v791, 0
        %vm854 = vcmp.ne.s32.totalorder %v798, 0
        %vm855 = vcmp.ne.s32.totalorder %v805, 0
        %vm856 = vcmp.ne.s32.totalorder %v812, 0
        %vm857 = vcmp.ne.s32.totalorder %v819, 0
        %vm858 = vcmp.ne.s32.totalorder %v826, 0
        %vm859 = vcmp.lt.s32.totalorder %v609, 0
        %vm860 = vcmp.lt.s32.totalorder %v616, 0
        %vm861 = vcmp.lt.s32.totalorder %v623, 0
        %vm862 = vcmp.lt.s32.totalorder %v630, 0
        %vm863 = vcmp.lt.s32.totalorder %v637, 0
        %vm864 = vcmp.lt.s32.totalorder %v644, 0
        %vm865 = vcmp.lt.s32.totalorder %v651, 0
        %vm866 = vcmp.lt.s32.totalorder %v658, 0
        %vm867 = vcmp.lt.s32.totalorder %v665, 0
        %vm868 = vcmp.lt.s32.totalorder %v672, 0
        %vm869 = vcmp.lt.s32.totalorder %v679, 0
        %vm870 = vcmp.lt.s32.totalorder %v686, 0
        %vm871 = vcmp.lt.s32.totalorder %v693, 0
        %vm872 = vcmp.lt.s32.totalorder %v700, 0
        %vm873 = vcmp.lt.s32.totalorder %v707, 0
        %vm874 = vcmp.lt.s32.totalorder %v714, 0
        %vm875 = vcmp.lt.s32.totalorder %v721, 0
        %vm876 = vcmp.lt.s32.totalorder %v728, 0
        %vm877 = vcmp.lt.s32.totalorder %v735, 0
        %vm878 = vcmp.lt.s32.totalorder %v742, 0
        %vm879 = vcmp.lt.s32.totalorder %v749, 0
        %vm880 = vcmp.lt.s32.totalorder %v756, 0
        %vm881 = vcmp.lt.s32.totalorder %v763, 0
        %vm882 = vcmp.lt.s32.totalorder %v770, 0
        %vm883 = vcmp.lt.s32.totalorder %v777, 0
        %vm884 = vcmp.lt.s32.totalorder %v784, 0
        %vm885 = vcmp.lt.s32.totalorder %v791, 0
        %vm886 = vcmp.lt.s32.totalorder %v798, 0
        %vm887 = vcmp.lt.s32.totalorder %v805, 0
        %vm888 = vcmp.lt.s32.totalorder %v812, 0
        %vm889 = vcmp.lt.s32.totalorder %v819, 0
        %vm890 = vcmp.lt.s32.totalorder %v826, 0
        %vm891 = vmand %vm859, %vm827
        %vm892 = vmand %vm860, %vm828
        %vm893 = vmand %vm861, %vm829
        %vm894 = vmand %vm862, %vm830
        %vm895 = vmand %vm863, %vm831
        %vm896 = vmand %vm864, %vm832
        %vm897 = vmand %vm865, %vm833
        %vm898 = vmand %vm866, %vm834
        %vm899 = vmand %vm867, %vm835
        %vm900 = vmand %vm868, %vm836
        %vm901 = vmand %vm869, %vm837
        %vm902 = vmand %vm870, %vm838
        %vm903 = vmand %vm871, %vm839
        %vm904 = vmand %vm872, %vm840
        %vm905 = vmand %vm873, %vm841
        %vm906 = vmand %vm874, %vm842
        %vm907 = vmand %vm875, %vm843
        %vm908 = vmand %vm876, %vm844
        %vm909 = vmand %vm877, %vm845
        %vm910 = vmand %vm878, %vm846
        %vm911 = vmand %vm879, %vm847
        %vm912 = vmand %vm880, %vm848
        %vm913 = vmand %vm881, %vm849
        %vm914 = vmand %vm882, %vm850
        %vm915 = vmand %vm883, %vm851
        %vm916 = vmand %vm884, %vm852
        %vm917 = vmand %vm885, %vm853
        %vm918 = vmand %vm886, %vm854
        %vm919 = vmand %vm887, %vm855
        %vm920 = vmand %vm888, %vm856
        %vm921 = vmand %vm889, %vm857
        %vm922 = vmand %vm890, %vm858
        %v923 = vadd.s32 %v609, 16
        %v924 = vadd.s32 %v616, 16
        %v925 = vadd.s32 %v623, 16
        %v926 = vadd.s32 %v630, 16
        %v927 = vadd.s32 %v637, 16
        %v928 = vadd.s32 %v644, 16
        %v929 = vadd.s32 %v651, 16
        %v930 = vadd.s32 %v658, 16
        %v931 = vadd.s32 %v665, 16
        %v932 = vadd.s32 %v672, 16
        %v933 = vadd.s32 %v679, 16
        %v934 = vadd.s32 %v686, 16
        %v935 = vadd.s32 %v693, 16
        %v936 = vadd.s32 %v700, 16
        %v937 = vadd.s32 %v707, 16
        %v938 = vadd.s32 %v714, 16
        %v939 = vadd.s32 %v721, 16
        %v940 = vadd.s32 %v728, 16
        %v941 = vadd.s32 %v735, 16
        %v942 = vadd.s32 %v742, 16
        %v943 = vadd.s32 %v749, 16
        %v944 = vadd.s32 %v756, 16
        %v945 = vadd.s32 %v763, 16
        %v946 = vadd.s32 %v770, 16
        %v947 = vadd.s32 %v777, 16
        %v948 = vadd.s32 %v784, 16
        %v949 = vadd.s32 %v791, 16
        %v950 = vadd.s32 %v798, 16
        %v951 = vadd.s32 %v805, 16
        %v952 = vadd.s32 %v812, 16
        %v953 = vadd.s32 %v819, 16
        %v954 = vadd.s32 %v826, 16
        %v955 = vsel %vm891, %v923, %v609
        %v956 = vsel %vm892, %v924, %v616
        %v957 = vsel %vm893, %v925, %v623
        %v958 = vsel %vm894, %v926, %v630
        %v959 = vsel %vm895, %v927, %v637
        %v960 = vsel %vm896, %v928, %v644
        %v961 = vsel %vm897, %v929, %v651
        %v962 = vsel %vm898, %v930, %v658
        %v963 = vsel %vm899, %v931, %v665
        %v964 = vsel %vm900, %v932, %v672
        %v965 = vsel %vm901, %v933, %v679
        %v966 = vsel %vm902, %v934, %v686
        %v967 = vsel %vm903, %v935, %v693
        %v968 = vsel %vm904, %v936, %v700
        %v969 = vsel %vm905, %v937, %v707
        %v970 = vsel %vm906, %v938, %v714
        %v971 = vsel %vm907, %v939, %v721
        %v972 = vsel %vm908, %v940, %v728
        %v973 = vsel %vm909, %v941, %v735
        %v974 = vsel %vm910, %v942, %v742
        %v975 = vsel %vm911, %v943, %v749
        %v976 = vsel %vm912, %v944, %v756
        %v977 = vsel %vm913, %v945, %v763
        %v978 = vsel %vm914, %v946, %v770
        %v979 = vsel %vm915, %v947, %v777
        %v980 = vsel %vm916, %v948, %v784
        %v981 = vsel %vm917, %v949, %v791
        %v982 = vsel %vm918, %v950, %v798
        %v983 = vsel %vm919, %v951, %v805
        %v984 = vsel %vm920, %v952, %v812
        %v985 = vsel %vm921, %v953, %v819
        %v986 = vsel %vm922, %v954, %v826
        %vm987 = vcmp.eq.s32.totalorder %v955, 0
        %vm988 = vcmp.eq.s32.totalorder %v956, 0
        %vm989 = vcmp.eq.s32.totalorder %v957, 0
        %vm990 = vcmp.eq.s32.totalorder %v958, 0
        %vm991 = vcmp.eq.s32.totalorder %v959, 0
        %vm992 = vcmp.eq.s32.totalorder %v960, 0
        %vm993 = vcmp.eq.s32.totalorder %v961, 0
        %vm994 = vcmp.eq.s32.totalorder %v962, 0
        %vm995 = vcmp.eq.s32.totalorder %v963, 0
        %vm996 = vcmp.eq.s32.totalorder %v964, 0
        %vm997 = vcmp.eq.s32.totalorder %v965, 0
        %vm998 = vcmp.eq.s32.totalorder %v966, 0
        %vm999 = vcmp.eq.s32.totalorder %v967, 0
        %vm1000 = vcmp.eq.s32.totalorder %v968, 0
        %vm1001 = vcmp.eq.s32.totalorder %v969, 0
        %vm1002 = vcmp.eq.s32.totalorder %v970, 0
        %vm1003 = vcmp.eq.s32.totalorder %v971, 0
        %vm1004 = vcmp.eq.s32.totalorder %v972, 0
        %vm1005 = vcmp.eq.s32.totalorder %v973, 0
        %vm1006 = vcmp.eq.s32.totalorder %v974, 0
        %vm1007 = vcmp.eq.s32.totalorder %v975, 0
        %vm1008 = vcmp.eq.s32.totalorder %v976, 0
        %vm1009 = vcmp.eq.s32.totalorder %v977, 0
        %vm1010 = vcmp.eq.s32.totalorder %v978, 0
        %vm1011 = vcmp.eq.s32.totalorder %v979, 0
        %vm1012 = vcmp.eq.s32.totalorder %v980, 0
        %vm1013 = vcmp.eq.s32.totalorder %v981, 0
        %vm1014 = vcmp.eq.s32.totalorder %v982, 0
        %vm1015 = vcmp.eq.s32.totalorder %v983, 0
        %vm1016 = vcmp.eq.s32.totalorder %v984, 0
        %vm1017 = vcmp.eq.s32.totalorder %v985, 0
        %vm1018 = vcmp.eq.s32.totalorder %v986, 0
        %v1019 = vrot.slane %v535, 7
        %v1020 = vrot.slane %v536, 7
        %v1021 = vrot.slane %v537, 7
        %v1022 = vrot.slane %v538, 7
        %v1023 = vrot.slane %v539, 7
        %v1024 = vrot.slane %v540, 7
        %v1025 = vrot.slane %v541, 7
        %v1026 = vrot.slane %v542, 7
        %v1027 = vrot.slane %v543, 7
        %v1028 = vrot.slane %v544, 7
        %v1029 = vrot.slane %v545, 7
        %v1030 = vrot.slane %v546, 7
        %v1031 = vrot.slane %v547, 7
        %v1032 = vrot.slane %v548, 7
        %v1033 = vrot.slane %v549, 7
        %v1034 = vrot.slane %v550, 7
        %v1035 = vrot.slane %v551, 7
        %v1036 = vrot.slane %v552, 7
        %v1037 = vrot.slane %v553, 7
        %v1038 = vrot.slane %v554, 7
        %v1039 = vrot.slane %v555, 7
        %v1040 = vrot.slane %v556, 7
        %v1041 = vrot.slane %v557, 7
        %v1042 = vrot.slane %v558, 7
        %v1043 = vrot.slane %v559, 7
        %v1044 = vrot.slane %v560, 7
        %v1045 = vrot.slane %v561, 7
        %v1046 = vrot.slane %v562, 7
        %v1047 = vrot.slane %v563, 7
        %v1048 = vrot.slane %v564, 7
        %v1049 = vrot.slane %v565, 7
        %v1050 = vrot.slane %v566, 7
        %vm1051 = vcmp.lt.s32.totalorder %v571, 1
        %v1052 = vsel %vm1051, %v1049, %v1050
        %v1053 = vsel %vm1051, %v1048, %v1049
        %v1054 = vsel %vm1051, %v1047, %v1048
        %v1055 = vsel %vm1051, %v1046, %v1047
        %v1056 = vsel %vm1051, %v1045, %v1046
        %v1057 = vsel %vm1051, %v1044, %v1045
        %v1058 = vsel %vm1051, %v1043, %v1044
        %v1059 = vsel %vm1051, %v1042, %v1043
        %v1060 = vsel %vm1051, %v1041, %v1042
        %v1061 = vsel %vm1051, %v1040, %v1041
        %v1062 = vsel %vm1051, %v1039, %v1040
        %v1063 = vsel %vm1051, %v1038, %v1039
        %v1064 = vsel %vm1051, %v1037, %v1038
        %v1065 = vsel %vm1051, %v1036, %v1037
        %v1066 = vsel %vm1051, %v1035, %v1036
        %v1067 = vsel %vm1051, %v1034, %v1035
        %v1068 = vsel %vm1051, %v1033, %v1034
        %v1069 = vsel %vm1051, %v1032, %v1033
        %v1070 = vsel %vm1051, %v1031, %v1032
        %v1071 = vsel %vm1051, %v1030, %v1031
        %v1072 = vsel %vm1051, %v1029, %v1030
        %v1073 = vsel %vm1051, %v1028, %v1029
        %v1074 = vsel %vm1051, %v1027, %v1028
        %v1075 = vsel %vm1051, %v1026, %v1027
        %v1076 = vsel %vm1051, %v1025, %v1026
        %v1077 = vsel %vm1051, %v1024, %v1025
        %v1078 = vsel %vm1051, %v1023, %v1024
        %v1079 = vsel %vm1051, %v1022, %v1023
        %v1080 = vsel %vm1051, %v1021, %v1022
        %v1081 = vsel %vm1051, %v1020, %v1021
        %v1082 = vsel %vm1051, %v1019, %v1020
        %v1083 = vsel %vm1051, %v1050, %v1019
        %v1084 = vsel %vm987, 0.0, %v1083
        %v1085 = vsel %vm988, 0.0, %v1082
        %v1086 = vsel %vm989, 0.0, %v1081
        %v1087 = vsel %vm990, 0.0, %v1080
        %v1088 = vsel %vm991, 0.0, %v1079
        %v1089 = vsel %vm992, 0.0, %v1078
        %v1090 = vsel %vm993, 0.0, %v1077
        %v1091 = vsel %vm994, 0.0, %v1076
        %v1092 = vsel %vm995, 0.0, %v1075
        %v1093 = vsel %vm996, 0.0, %v1074
        %v1094 = vsel %vm997, 0.0, %v1073
        %v1095 = vsel %vm998, 0.0, %v1072
        %v1096 = vsel %vm999, 0.0, %v1071
        %v1097 = vsel %vm1000, 0.0, %v1070
        %v1098 = vsel %vm1001, 0.0, %v1069
        %v1099 = vsel %vm1002, 0.0, %v1068
        %v1100 = vsel %vm1003, 0.0, %v1067
        %v1101 = vsel %vm1004, 0.0, %v1066
        %v1102 = vsel %vm1005, 0.0, %v1065
        %v1103 = vsel %vm1006, 0.0, %v1064
        %v1104 = vsel %vm1007, 0.0, %v1063
        %v1105 = vsel %vm1008, 0.0, %v1062
        %v1106 = vsel %vm1009, 0.0, %v1061
        %v1107 = vsel %vm1010, 0.0, %v1060
        %v1108 = vsel %vm1011, 0.0, %v1059
        %v1109 = vsel %vm1012, 0.0, %v1058
        %v1110 = vsel %vm1013, 0.0, %v1057
        %v1111 = vsel %vm1014, 0.0, %v1056
        %v1112 = vsel %vm1015, 0.0, %v1055
        %v1113 = vsel %vm1016, 0.0, %v1054
        %v1114 = vsel %vm1017, 0.0, %v1053
        %v1115 = vsel %vm1018, 0.0, %v1052
        %vm1116 = vcmp.eq.s32.totalorder %v955, 15
        %vm1117 = vcmp.eq.s32.totalorder %v956, 15
        %vm1118 = vcmp.eq.s32.totalorder %v957, 15
        %vm1119 = vcmp.eq.s32.totalorder %v958, 15
        %vm1120 = vcmp.eq.s32.totalorder %v959, 15
        %vm1121 = vcmp.eq.s32.totalorder %v960, 15
        %vm1122 = vcmp.eq.s32.totalorder %v961, 15
        %vm1123 = vcmp.eq.s32.totalorder %v962, 15
        %vm1124 = vcmp.eq.s32.totalorder %v963, 15
        %vm1125 = vcmp.eq.s32.totalorder %v964, 15
        %vm1126 = vcmp.eq.s32.totalorder %v965, 15
        %vm1127 = vcmp.eq.s32.totalorder %v966, 15
        %vm1128 = vcmp.eq.s32.totalorder %v967, 15
        %vm1129 = vcmp.eq.s32.totalorder %v968, 15
        %vm1130 = vcmp.eq.s32.totalorder %v969, 15
        %vm1131 = vcmp.eq.s32.totalorder %v970, 15
        %vm1132 = vcmp.eq.s32.totalorder %v971, 15
        %vm1133 = vcmp.eq.s32.totalorder %v972, 15
        %vm1134 = vcmp.eq.s32.totalorder %v973, 15
        %vm1135 = vcmp.eq.s32.totalorder %v974, 15
        %vm1136 = vcmp.eq.s32.totalorder %v975, 15
        %vm1137 = vcmp.eq.s32.totalorder %v976, 15
        %vm1138 = vcmp.eq.s32.totalorder %v977, 15
        %vm1139 = vcmp.eq.s32.totalorder %v978, 15
        %vm1140 = vcmp.eq.s32.totalorder %v979, 15
        %vm1141 = vcmp.eq.s32.totalorder %v980, 15
        %vm1142 = vcmp.eq.s32.totalorder %v981, 15
        %vm1143 = vcmp.eq.s32.totalorder %v982, 15
        %vm1144 = vcmp.eq.s32.totalorder %v983, 15
        %vm1145 = vcmp.eq.s32.totalorder %v984, 15
        %vm1146 = vcmp.eq.s32.totalorder %v985, 15
        %vm1147 = vcmp.eq.s32.totalorder %v986, 15
        %v1148 = vrot.slane %v535, 1
        %v1149 = vrot.slane %v536, 1
        %v1150 = vrot.slane %v537, 1
        %v1151 = vrot.slane %v538, 1
        %v1152 = vrot.slane %v539, 1
        %v1153 = vrot.slane %v540, 1
        %v1154 = vrot.slane %v541, 1
        %v1155 = vrot.slane %v542, 1
        %v1156 = vrot.slane %v543, 1
        %v1157 = vrot.slane %v544, 1
        %v1158 = vrot.slane %v545, 1
        %v1159 = vrot.slane %v546, 1
        %v1160 = vrot.slane %v547, 1
        %v1161 = vrot.slane %v548, 1
        %v1162 = vrot.slane %v549, 1
        %v1163 = vrot.slane %v550, 1
        %v1164 = vrot.slane %v551, 1
        %v1165 = vrot.slane %v552, 1
        %v1166 = vrot.slane %v553, 1
        %v1167 = vrot.slane %v554, 1
        %v1168 = vrot.slane %v555, 1
        %v1169 = vrot.slane %v556, 1
        %v1170 = vrot.slane %v557, 1
        %v1171 = vrot.slane %v558, 1
        %v1172 = vrot.slane %v559, 1
        %v1173 = vrot.slane %v560, 1
        %v1174 = vrot.slane %v561, 1
        %v1175 = vrot.slane %v562, 1
        %v1176 = vrot.slane %v563, 1
        %v1177 = vrot.slane %v564, 1
        %v1178 = vrot.slane %v565, 1
        %v1179 = vrot.slane %v566, 1
        %vm1180 = vcmp.lt.s32.totalorder %v571, 7
        %v1181 = vsel %vm1180, %v1178, %v1179
        %v1182 = vsel %vm1180, %v1177, %v1178
        %v1183 = vsel %vm1180, %v1176, %v1177
        %v1184 = vsel %vm1180, %v1175, %v1176
        %v1185 = vsel %vm1180, %v1174, %v1175
        %v1186 = vsel %vm1180, %v1173, %v1174
        %v1187 = vsel %vm1180, %v1172, %v1173
        %v1188 = vsel %vm1180, %v1171, %v1172
        %v1189 = vsel %vm1180, %v1170, %v1171
        %v1190 = vsel %vm1180, %v1169, %v1170
        %v1191 = vsel %vm1180, %v1168, %v1169
        %v1192 = vsel %vm1180, %v1167, %v1168
        %v1193 = vsel %vm1180, %v1166, %v1167
        %v1194 = vsel %vm1180, %v1165, %v1166
        %v1195 = vsel %vm1180, %v1164, %v1165
        %v1196 = vsel %vm1180, %v1163, %v1164
        %v1197 = vsel %vm1180, %v1162, %v1163
        %v1198 = vsel %vm1180, %v1161, %v1162
        %v1199 = vsel %vm1180, %v1160, %v1161
        %v1200 = vsel %vm1180, %v1159, %v1160
        %v1201 = vsel %vm1180, %v1158, %v1159
        %v1202 = vsel %vm1180, %v1157, %v1158
        %v1203 = vsel %vm1180, %v1156, %v1157
        %v1204 = vsel %vm1180, %v1155, %v1156
        %v1205 = vsel %vm1180, %v1154, %v1155
        %v1206 = vsel %vm1180, %v1153, %v1154
        %v1207 = vsel %vm1180, %v1152, %v1153
        %v1208 = vsel %vm1180, %v1151, %v1152
        %v1209 = vsel %vm1180, %v1150, %v1151
        %v1210 = vsel %vm1180, %v1149, %v1150
        %v1211 = vsel %vm1180, %v1148, %v1149
        %v1212 = vsel %vm1180, %v1179, %v1148
        %v1213 = vsel %vm1116, 0.0, %v1211
        %v1214 = vsel %vm1117, 0.0, %v1210
        %v1215 = vsel %vm1118, 0.0, %v1209
        %v1216 = vsel %vm1119, 0.0, %v1208
        %v1217 = vsel %vm1120, 0.0, %v1207
        %v1218 = vsel %vm1121, 0.0, %v1206
        %v1219 = vsel %vm1122, 0.0, %v1205
        %v1220 = vsel %vm1123, 0.0, %v1204
        %v1221 = vsel %vm1124, 0.0, %v1203
        %v1222 = vsel %vm1125, 0.0, %v1202
        %v1223 = vsel %vm1126, 0.0, %v1201
        %v1224 = vsel %vm1127, 0.0, %v1200
        %v1225 = vsel %vm1128, 0.0, %v1199
        %v1226 = vsel %vm1129, 0.0, %v1198
        %v1227 = vsel %vm1130, 0.0, %v1197
        %v1228 = vsel %vm1131, 0.0, %v1196
        %v1229 = vsel %vm1132, 0.0, %v1195
        %v1230 = vsel %vm1133, 0.0, %v1194
        %v1231 = vsel %vm1134, 0.0, %v1193
        %v1232 = vsel %vm1135, 0.0, %v1192
        %v1233 = vsel %vm1136, 0.0, %v1191
        %v1234 = vsel %vm1137, 0.0, %v1190
        %v1235 = vsel %vm1138, 0.0, %v1189
        %v1236 = vsel %vm1139, 0.0, %v1188
        %v1237 = vsel %vm1140, 0.0, %v1187
        %v1238 = vsel %vm1141, 0.0, %v1186
        %v1239 = vsel %vm1142, 0.0, %v1185
        %v1240 = vsel %vm1143, 0.0, %v1184
        %v1241 = vsel %vm1144, 0.0, %v1183
        %v1242 = vsel %vm1145, 0.0, %v1182
        %v1243 = vsel %vm1146, 0.0, %v1181
        %v1244 = vsel %vm1147, 0.0, %v1212
        %v1245 = vlaneseq
        %v1246 = vshrl.u32 %v1245, 7
        %v1247 = vsub.s32 0, %v1246
        %v1248 = vrot.slane %v567, %v1247
        %v1249 = vmul.f32 %v1084, %v1248
        %v1250 = vmul.f32 %v1085, %v1248
        %v1251 = vmul.f32 %v1086, %v1248
        %v1252 = vmul.f32 %v1087, %v1248
        %v1253 = vmul.f32 %v1088, %v1248
        %v1254 = vmul.f32 %v1089, %v1248
        %v1255 = vmul.f32 %v1090, %v1248
        %v1256 = vmul.f32 %v1091, %v1248
        %v1257 = vmul.f32 %v1092, %v1248
        %v1258 = vmul.f32 %v1093, %v1248
        %v1259 = vmul.f32 %v1094, %v1248
        %v1260 = vmul.f32 %v1095, %v1248
        %v1261 = vmul.f32 %v1096, %v1248
        %v1262 = vmul.f32 %v1097, %v1248
        %v1263 = vmul.f32 %v1098, %v1248
        %v1264 = vmul.f32 %v1099, %v1248
        %v1265 = vmul.f32 %v1100, %v1248
        %v1266 = vmul.f32 %v1101, %v1248
        %v1267 = vmul.f32 %v1102, %v1248
        %v1268 = vmul.f32 %v1103, %v1248
        %v1269 = vmul.f32 %v1104, %v1248
        %v1270 = vmul.f32 %v1105, %v1248
        %v1271 = vmul.f32 %v1106, %v1248
        %v1272 = vmul.f32 %v1107, %v1248
        %v1273 = vmul.f32 %v1108, %v1248
        %v1274 = vmul.f32 %v1109, %v1248
        %v1275 = vmul.f32 %v1110, %v1248
        %v1276 = vmul.f32 %v1111, %v1248
        %v1277 = vmul.f32 %v1112, %v1248
        %v1278 = vmul.f32 %v1113, %v1248
        %v1279 = vlaneseq
        %v1280 = vshrl.u32 %v1279, 7
        %v1281 = vsub.s32 1, %v1280
        %v1282 = vrot.slane %v567, %v1281
        %v1283 = vmul.f32 %v535, %v1282
        %v1284 = vmul.f32 %v536, %v1282
        %v1285 = vmul.f32 %v537, %v1282
        %v1286 = vmul.f32 %v538, %v1282
        %v1287 = vmul.f32 %v539, %v1282
        %v1288 = vmul.f32 %v540, %v1282
        %v1289 = vmul.f32 %v541, %v1282
        %v1290 = vmul.f32 %v542, %v1282
        %v1291 = vmul.f32 %v543, %v1282
        %v1292 = vmul.f32 %v544, %v1282
        %v1293 = vmul.f32 %v545, %v1282
        %v1294 = vmul.f32 %v546, %v1282
        %v1295 = vmul.f32 %v547, %v1282
        %v1296 = vmul.f32 %v548, %v1282
        %v1297 = vmul.f32 %v549, %v1282
        %v1298 = vmul.f32 %v550, %v1282
        %v1299 = vmul.f32 %v551, %v1282
        %v1300 = vmul.f32 %v552, %v1282
        %v1301 = vmul.f32 %v553, %v1282
        %v1302 = vmul.f32 %v554, %v1282
        %v1303 = vmul.f32 %v555, %v1282
        %v1304 = vmul.f32 %v556, %v1282
        %v1305 = vmul.f32 %v557, %v1282
        %v1306 = vmul.f32 %v558, %v1282
        %v1307 = vmul.f32 %v559, %v1282
        %v1308 = vmul.f32 %v560, %v1282
        %v1309 = vmul.f32 %v561, %v1282
        %v1310 = vmul.f32 %v562, %v1282
        %v1311 = vmul.f32 %v563, %v1282
        %v1312 = vmul.f32 %v564, %v1282
        %v1313 = vadd.f32 %v1249, %v1283
        %v1314 = vadd.f32 %v1250, %v1284
        %v1315 = vadd.f32 %v1251, %v1285
        %v1316 = vadd.f32 %v1252, %v1286
        %v1317 = vadd.f32 %v1253, %v1287
        %v1318 = vadd.f32 %v1254, %v1288
        %v1319 = vadd.f32 %v1255, %v1289
        %v1320 = vadd.f32 %v1256, %v1290
        %v1321 = vadd.f32 %v1257, %v1291
        %v1322 = vadd.f32 %v1258, %v1292
        %v1323 = vadd.f32 %v1259, %v1293
        %v1324 = vadd.f32 %v1260, %v1294
        %v1325 = vadd.f32 %v1261, %v1295
        %v1326 = vadd.f32 %v1262, %v1296
        %v1327 = vadd.f32 %v1263, %v1297
        %v1328 = vadd.f32 %v1264, %v1298
        %v1329 = vadd.f32 %v1265, %v1299
        %v1330 = vadd.f32 %v1266, %v1300
        %v1331 = vadd.f32 %v1267, %v1301
        %v1332 = vadd.f32 %v1268, %v1302
        %v1333 = vadd.f32 %v1269, %v1303
        %v1334 = vadd.f32 %v1270, %v1304
        %v1335 = vadd.f32 %v1271, %v1305
        %v1336 = vadd.f32 %v1272, %v1306
        %v1337 = vadd.f32 %v1273, %v1307
        %v1338 = vadd.f32 %v1274, %v1308
        %v1339 = vadd.f32 %v1275, %v1309
        %v1340 = vadd.f32 %v1276, %v1310
        %v1341 = vadd.f32 %v1277, %v1311
        %v1342 = vadd.f32 %v1278, %v1312
        %v1343 = vlaneseq
        %v1344 = vshrl.u32 %v1343, 7
        %v1345 = vsub.s32 2, %v1344
        %v1346 = vrot.slane %v567, %v1345
        %v1347 = vmul.f32 %v1213, %v1346
        %v1348 = vmul.f32 %v1214, %v1346
        %v1349 = vmul.f32 %v1215, %v1346
        %v1350 = vmul.f32 %v1216, %v1346
        %v1351 = vmul.f32 %v1217, %v1346
        %v1352 = vmul.f32 %v1218, %v1346
        %v1353 = vmul.f32 %v1219, %v1346
        %v1354 = vmul.f32 %v1220, %v1346
        %v1355 = vmul.f32 %v1221, %v1346
        %v1356 = vmul.f32 %v1222, %v1346
        %v1357 = vmul.f32 %v1223, %v1346
        %v1358 = vmul.f32 %v1224, %v1346
        %v1359 = vmul.f32 %v1225, %v1346
        %v1360 = vmul.f32 %v1226, %v1346
        %v1361 = vmul.f32 %v1227, %v1346
        %v1362 = vmul.f32 %v1228, %v1346
        %v1363 = vmul.f32 %v1229, %v1346
        %v1364 = vmul.f32 %v1230, %v1346
        %v1365 = vmul.f32 %v1231, %v1346
        %v1366 = vmul.f32 %v1232, %v1346
        %v1367 = vmul.f32 %v1233, %v1346
        %v1368 = vmul.f32 %v1234, %v1346
        %v1369 = vmul.f32 %v1235, %v1346
        %v1370 = vmul.f32 %v1236, %v1346
        %v1371 = vmul.f32 %v1237, %v1346
        %v1372 = vmul.f32 %v1238, %v1346
        %v1373 = vmul.f32 %v1239, %v1346
        %v1374 = vmul.f32 %v1240, %v1346
        %v1375 = vmul.f32 %v1241, %v1346
        %v1376 = vmul.f32 %v1242, %v1346
        %v1377 = vadd.f32 %v1313, %v1347
        %v1378 = vadd.f32 %v1314, %v1348
        %v1379 = vadd.f32 %v1315, %v1349
        %v1380 = vadd.f32 %v1316, %v1350
        %v1381 = vadd.f32 %v1317, %v1351
        %v1382 = vadd.f32 %v1318, %v1352
        %v1383 = vadd.f32 %v1319, %v1353
        %v1384 = vadd.f32 %v1320, %v1354
        %v1385 = vadd.f32 %v1321, %v1355
        %v1386 = vadd.f32 %v1322, %v1356
        %v1387 = vadd.f32 %v1323, %v1357
        %v1388 = vadd.f32 %v1324, %v1358
        %v1389 = vadd.f32 %v1325, %v1359
        %v1390 = vadd.f32 %v1326, %v1360
        %v1391 = vadd.f32 %v1327, %v1361
        %v1392 = vadd.f32 %v1328, %v1362
        %v1393 = vadd.f32 %v1329, %v1363
        %v1394 = vadd.f32 %v1330, %v1364
        %v1395 = vadd.f32 %v1331, %v1365
        %v1396 = vadd.f32 %v1332, %v1366
        %v1397 = vadd.f32 %v1333, %v1367
        %v1398 = vadd.f32 %v1334, %v1368
        %v1399 = vadd.f32 %v1335, %v1369
        %v1400 = vadd.f32 %v1336, %v1370
        %v1401 = vadd.f32 %v1337, %v1371
        %v1402 = vadd.f32 %v1338, %v1372
        %v1403 = vadd.f32 %v1339, %v1373
        %v1404 = vadd.f32 %v1340, %v1374
        %v1405 = vadd.f32 %v1341, %v1375
        %v1406 = vadd.f32 %v1342, %v1376
        %v1407 = vlaneseq
        %v1408 = vshrl.u32 %v1407, 7
        %v1409 = vsub.s32 0, %v1408
        %v1410 = vrot.slane %v568, %v1409
        %v1411 = vmul.f32 %v1084, %v1410
        %v1412 = vmul.f32 %v1085, %v1410
        %v1413 = vmul.f32 %v1086, %v1410
        %v1414 = vmul.f32 %v1087, %v1410
        %v1415 = vmul.f32 %v1088, %v1410
        %v1416 = vmul.f32 %v1089, %v1410
        %v1417 = vmul.f32 %v1090, %v1410
        %v1418 = vmul.f32 %v1091, %v1410
        %v1419 = vmul.f32 %v1092, %v1410
        %v1420 = vmul.f32 %v1093, %v1410
        %v1421 = vmul.f32 %v1094, %v1410
        %v1422 = vmul.f32 %v1095, %v1410
        %v1423 = vmul.f32 %v1096, %v1410
        %v1424 = vmul.f32 %v1097, %v1410
        %v1425 = vmul.f32 %v1098, %v1410
        %v1426 = vmul.f32 %v1099, %v1410
        %v1427 = vmul.f32 %v1100, %v1410
        %v1428 = vmul.f32 %v1101, %v1410
        %v1429 = vmul.f32 %v1102, %v1410
        %v1430 = vmul.f32 %v1103, %v1410
        %v1431 = vmul.f32 %v1104, %v1410
        %v1432 = vmul.f32 %v1105, %v1410
        %v1433 = vmul.f32 %v1106, %v1410
        %v1434 = vmul.f32 %v1107, %v1410
        %v1435 = vmul.f32 %v1108, %v1410
        %v1436 = vmul.f32 %v1109, %v1410
        %v1437 = vmul.f32 %v1110, %v1410
        %v1438 = vmul.f32 %v1111, %v1410
        %v1439 = vmul.f32 %v1112, %v1410
        %v1440 = vmul.f32 %v1113, %v1410
        %v1441 = vmul.f32 %v1114, %v1410
        %v1442 = vmul.f32 %v1115, %v1410
        %v1443 = vlaneseq
        %v1444 = vshrl.u32 %v1443, 7
        %v1445 = vsub.s32 1, %v1444
        %v1446 = vrot.slane %v568, %v1445
        %v1447 = vmul.f32 %v535, %v1446
        %v1448 = vmul.f32 %v536, %v1446
        %v1449 = vmul.f32 %v537, %v1446
        %v1450 = vmul.f32 %v538, %v1446
        %v1451 = vmul.f32 %v539, %v1446
        %v1452 = vmul.f32 %v540, %v1446
        %v1453 = vmul.f32 %v541, %v1446
        %v1454 = vmul.f32 %v542, %v1446
        %v1455 = vmul.f32 %v543, %v1446
        %v1456 = vmul.f32 %v544, %v1446
        %v1457 = vmul.f32 %v545, %v1446
        %v1458 = vmul.f32 %v546, %v1446
        %v1459 = vmul.f32 %v547, %v1446
        %v1460 = vmul.f32 %v548, %v1446
        %v1461 = vmul.f32 %v549, %v1446
        %v1462 = vmul.f32 %v550, %v1446
        %v1463 = vmul.f32 %v551, %v1446
        %v1464 = vmul.f32 %v552, %v1446
        %v1465 = vmul.f32 %v553, %v1446
        %v1466 = vmul.f32 %v554, %v1446
        %v1467 = vmul.f32 %v555, %v1446
        %v1468 = vmul.f32 %v556, %v1446
        %v1469 = vmul.f32 %v557, %v1446
        %v1470 = vmul.f32 %v558, %v1446
        %v1471 = vmul.f32 %v559, %v1446
        %v1472 = vmul.f32 %v560, %v1446
        %v1473 = vmul.f32 %v561, %v1446
        %v1474 = vmul.f32 %v562, %v1446
        %v1475 = vmul.f32 %v563, %v1446
        %v1476 = vmul.f32 %v564, %v1446
        %v1477 = vmul.f32 %v565, %v1446
        %v1478 = vmul.f32 %v566, %v1446
        %v1479 = vadd.f32 %v1411, %v1447
        %v1480 = vadd.f32 %v1412, %v1448
        %v1481 = vadd.f32 %v1413, %v1449
        %v1482 = vadd.f32 %v1414, %v1450
        %v1483 = vadd.f32 %v1415, %v1451
        %v1484 = vadd.f32 %v1416, %v1452
        %v1485 = vadd.f32 %v1417, %v1453
        %v1486 = vadd.f32 %v1418, %v1454
        %v1487 = vadd.f32 %v1419, %v1455
        %v1488 = vadd.f32 %v1420, %v1456
        %v1489 = vadd.f32 %v1421, %v1457
        %v1490 = vadd.f32 %v1422, %v1458
        %v1491 = vadd.f32 %v1423, %v1459
        %v1492 = vadd.f32 %v1424, %v1460
        %v1493 = vadd.f32 %v1425, %v1461
        %v1494 = vadd.f32 %v1426, %v1462
        %v1495 = vadd.f32 %v1427, %v1463
        %v1496 = vadd.f32 %v1428, %v1464
        %v1497 = vadd.f32 %v1429, %v1465
        %v1498 = vadd.f32 %v1430, %v1466
        %v1499 = vadd.f32 %v1431, %v1467
        %v1500 = vadd.f32 %v1432, %v1468
        %v1501 = vadd.f32 %v1433, %v1469
        %v1502 = vadd.f32 %v1434, %v1470
        %v1503 = vadd.f32 %v1435, %v1471
        %v1504 = vadd.f32 %v1436, %v1472
        %v1505 = vadd.f32 %v1437, %v1473
        %v1506 = vadd.f32 %v1438, %v1474
        %v1507 = vadd.f32 %v1439, %v1475
        %v1508 = vadd.f32 %v1440, %v1476
        %v1509 = vadd.f32 %v1441, %v1477
        %v1510 = vadd.f32 %v1442, %v1478
        %v1511 = vlaneseq
        %v1512 = vshrl.u32 %v1511, 7
        %v1513 = vsub.s32 2, %v1512
        %v1514 = vrot.slane %v568, %v1513
        %v1515 = vmul.f32 %v1213, %v1514
        %v1516 = vmul.f32 %v1214, %v1514
        %v1517 = vmul.f32 %v1215, %v1514
        %v1518 = vmul.f32 %v1216, %v1514
        %v1519 = vmul.f32 %v1217, %v1514
        %v1520 = vmul.f32 %v1218, %v1514
        %v1521 = vmul.f32 %v1219, %v1514
        %v1522 = vmul.f32 %v1220, %v1514
        %v1523 = vmul.f32 %v1221, %v1514
        %v1524 = vmul.f32 %v1222, %v1514
        %v1525 = vmul.f32 %v1223, %v1514
        %v1526 = vmul.f32 %v1224, %v1514
        %v1527 = vmul.f32 %v1225, %v1514
        %v1528 = vmul.f32 %v1226, %v1514
        %v1529 = vmul.f32 %v1227, %v1514
        %v1530 = vmul.f32 %v1228, %v1514
        %v1531 = vmul.f32 %v1229, %v1514
        %v1532 = vmul.f32 %v1230, %v1514
        %v1533 = vmul.f32 %v1231, %v1514
        %v1534 = vmul.f32 %v1232, %v1514
        %v1535 = vmul.f32 %v1233, %v1514
        %v1536 = vmul.f32 %v1234, %v1514
        %v1537 = vmul.f32 %v1235, %v1514
        %v1538 = vmul.f32 %v1236, %v1514
        %v1539 = vmul.f32 %v1237, %v1514
        %v1540 = vmul.f32 %v1238, %v1514
        %v1541 = vmul.f32 %v1239, %v1514
        %v1542 = vmul.f32 %v1240, %v1514
        %v1543 = vmul.f32 %v1241, %v1514
        %v1544 = vmul.f32 %v1242, %v1514
        %v1545 = vmul.f32 %v1243, %v1514
        %v1546 = vmul.f32 %v1244, %v1514
        %v1547 = vadd.f32 %v1479, %v1515
        %v1548 = vadd.f32 %v1480, %v1516
        %v1549 = vadd.f32 %v1481, %v1517
        %v1550 = vadd.f32 %v1482, %v1518
        %v1551 = vadd.f32 %v1483, %v1519
        %v1552 = vadd.f32 %v1484, %v1520
        %v1553 = vadd.f32 %v1485, %v1521
        %v1554 = vadd.f32 %v1486, %v1522
        %v1555 = vadd.f32 %v1487, %v1523
        %v1556 = vadd.f32 %v1488, %v1524
        %v1557 = vadd.f32 %v1489, %v1525
        %v1558 = vadd.f32 %v1490, %v1526
        %v1559 = vadd.f32 %v1491, %v1527
        %v1560 = vadd.f32 %v1492, %v1528
        %v1561 = vadd.f32 %v1493, %v1529
        %v1562 = vadd.f32 %v1494, %v1530
        %v1563 = vadd.f32 %v1495, %v1531
        %v1564 = vadd.f32 %v1496, %v1532
        %v1565 = vadd.f32 %v1497, %v1533
        %v1566 = vadd.f32 %v1498, %v1534
        %v1567 = vadd.f32 %v1499, %v1535
        %v1568 = vadd.f32 %v1500, %v1536
        %v1569 = vadd.f32 %v1501, %v1537
        %v1570 = vadd.f32 %v1502, %v1538
        %v1571 = vadd.f32 %v1503, %v1539
        %v1572 = vadd.f32 %v1504, %v1540
        %v1573 = vadd.f32 %v1505, %v1541
        %v1574 = vadd.f32 %v1506, %v1542
        %v1575 = vadd.f32 %v1507, %v1543
        %v1576 = vadd.f32 %v1508, %v1544
        %v1577 = vadd.f32 %v1509, %v1545
        %v1578 = vadd.f32 %v1510, %v1546
        %v1579 = vlaneseq
        %v1580 = vshrl.u32 %v1579, 7
        %v1581 = vsub.s32 0, %v1580
        %v1582 = vrot.slane %v569, %v1581
        %v1583 = vmul.f32 %v1086, %v1582
        %v1584 = vmul.f32 %v1087, %v1582
        %v1585 = vmul.f32 %v1088, %v1582
        %v1586 = vmul.f32 %v1089, %v1582
        %v1587 = vmul.f32 %v1090, %v1582
        %v1588 = vmul.f32 %v1091, %v1582
        %v1589 = vmul.f32 %v1092, %v1582
        %v1590 = vmul.f32 %v1093, %v1582
        %v1591 = vmul.f32 %v1094, %v1582
        %v1592 = vmul.f32 %v1095, %v1582
        %v1593 = vmul.f32 %v1096, %v1582
        %v1594 = vmul.f32 %v1097, %v1582
        %v1595 = vmul.f32 %v1098, %v1582
        %v1596 = vmul.f32 %v1099, %v1582
        %v1597 = vmul.f32 %v1100, %v1582
        %v1598 = vmul.f32 %v1101, %v1582
        %v1599 = vmul.f32 %v1102, %v1582
        %v1600 = vmul.f32 %v1103, %v1582
        %v1601 = vmul.f32 %v1104, %v1582
        %v1602 = vmul.f32 %v1105, %v1582
        %v1603 = vmul.f32 %v1106, %v1582
        %v1604 = vmul.f32 %v1107, %v1582
        %v1605 = vmul.f32 %v1108, %v1582
        %v1606 = vmul.f32 %v1109, %v1582
        %v1607 = vmul.f32 %v1110, %v1582
        %v1608 = vmul.f32 %v1111, %v1582
        %v1609 = vmul.f32 %v1112, %v1582
        %v1610 = vmul.f32 %v1113, %v1582
        %v1611 = vmul.f32 %v1114, %v1582
        %v1612 = vmul.f32 %v1115, %v1582
        %v1613 = vlaneseq
        %v1614 = vshrl.u32 %v1613, 7
        %v1615 = vsub.s32 1, %v1614
        %v1616 = vrot.slane %v569, %v1615
        %v1617 = vmul.f32 %v537, %v1616
        %v1618 = vmul.f32 %v538, %v1616
        %v1619 = vmul.f32 %v539, %v1616
        %v1620 = vmul.f32 %v540, %v1616
        %v1621 = vmul.f32 %v541, %v1616
        %v1622 = vmul.f32 %v542, %v1616
        %v1623 = vmul.f32 %v543, %v1616
        %v1624 = vmul.f32 %v544, %v1616
        %v1625 = vmul.f32 %v545, %v1616
        %v1626 = vmul.f32 %v546, %v1616
        %v1627 = vmul.f32 %v547, %v1616
        %v1628 = vmul.f32 %v548, %v1616
        %v1629 = vmul.f32 %v549, %v1616
        %v1630 = vmul.f32 %v550, %v1616
        %v1631 = vmul.f32 %v551, %v1616
        %v1632 = vmul.f32 %v552, %v1616
        %v1633 = vmul.f32 %v553, %v1616
        %v1634 = vmul.f32 %v554, %v1616
        %v1635 = vmul.f32 %v555, %v1616
        %v1636 = vmul.f32 %v556, %v1616
        %v1637 = vmul.f32 %v557, %v1616
        %v1638 = vmul.f32 %v558, %v1616
        %v1639 = vmul.f32 %v559, %v1616
        %v1640 = vmul.f32 %v560, %v1616
        %v1641 = vmul.f32 %v561, %v1616
        %v1642 = vmul.f32 %v562, %v1616
        %v1643 = vmul.f32 %v563, %v1616
        %v1644 = vmul.f32 %v564, %v1616
        %v1645 = vmul.f32 %v565, %v1616
        %v1646 = vmul.f32 %v566, %v1616
        %v1647 = vadd.f32 %v1583, %v1617
        %v1648 = vadd.f32 %v1584, %v1618
        %v1649 = vadd.f32 %v1585, %v1619
        %v1650 = vadd.f32 %v1586, %v1620
        %v1651 = vadd.f32 %v1587, %v1621
        %v1652 = vadd.f32 %v1588, %v1622
        %v1653 = vadd.f32 %v1589, %v1623
        %v1654 = vadd.f32 %v1590, %v1624
        %v1655 = vadd.f32 %v1591, %v1625
        %v1656 = vadd.f32 %v1592, %v1626
        %v1657 = vadd.f32 %v1593, %v1627
        %v1658 = vadd.f32 %v1594, %v1628
        %v1659 = vadd.f32 %v1595, %v1629
        %v1660 = vadd.f32 %v1596, %v1630
        %v1661 = vadd.f32 %v1597, %v1631
        %v1662 = vadd.f32 %v1598, %v1632
        %v1663 = vadd.f32 %v1599, %v1633
        %v1664 = vadd.f32 %v1600, %v1634
        %v1665 = vadd.f32 %v1601, %v1635
        %v1666 = vadd.f32 %v1602, %v1636
        %v1667 = vadd.f32 %v1603, %v1637
        %v1668 = vadd.f32 %v1604, %v1638
        %v1669 = vadd.f32 %v1605, %v1639
        %v1670 = vadd.f32 %v1606, %v1640
        %v1671 = vadd.f32 %v1607, %v1641
        %v1672 = vadd.f32 %v1608, %v1642
        %v1673 = vadd.f32 %v1609, %v1643
        %v1674 = vadd.f32 %v1610, %v1644
        %v1675 = vadd.f32 %v1611, %v1645
        %v1676 = vadd.f32 %v1612, %v1646
        %v1677 = vlaneseq
        %v1678 = vshrl.u32 %v1677, 7
        %v1679 = vsub.s32 2, %v1678
        %v1680 = vrot.slane %v569, %v1679
        %v1681 = vmul.f32 %v1215, %v1680
        %v1682 = vmul.f32 %v1216, %v1680
        %v1683 = vmul.f32 %v1217, %v1680
        %v1684 = vmul.f32 %v1218, %v1680
        %v1685 = vmul.f32 %v1219, %v1680
        %v1686 = vmul.f32 %v1220, %v1680
        %v1687 = vmul.f32 %v1221, %v1680
        %v1688 = vmul.f32 %v1222, %v1680
        %v1689 = vmul.f32 %v1223, %v1680
        %v1690 = vmul.f32 %v1224, %v1680
        %v1691 = vmul.f32 %v1225, %v1680
        %v1692 = vmul.f32 %v1226, %v1680
        %v1693 = vmul.f32 %v1227, %v1680
        %v1694 = vmul.f32 %v1228, %v1680
        %v1695 = vmul.f32 %v1229, %v1680
        %v1696 = vmul.f32 %v1230, %v1680
        %v1697 = vmul.f32 %v1231, %v1680
        %v1698 = vmul.f32 %v1232, %v1680
        %v1699 = vmul.f32 %v1233, %v1680
        %v1700 = vmul.f32 %v1234, %v1680
        %v1701 = vmul.f32 %v1235, %v1680
        %v1702 = vmul.f32 %v1236, %v1680
        %v1703 = vmul.f32 %v1237, %v1680
        %v1704 = vmul.f32 %v1238, %v1680
        %v1705 = vmul.f32 %v1239, %v1680
        %v1706 = vmul.f32 %v1240, %v1680
        %v1707 = vmul.f32 %v1241, %v1680
        %v1708 = vmul.f32 %v1242, %v1680
        %v1709 = vmul.f32 %v1243, %v1680
        %v1710 = vmul.f32 %v1244, %v1680
        %v1711 = vadd.f32 %v1647, %v1681
        %v1712 = vadd.f32 %v1648, %v1682
        %v1713 = vadd.f32 %v1649, %v1683
        %v1714 = vadd.f32 %v1650, %v1684
        %v1715 = vadd.f32 %v1651, %v1685
        %v1716 = vadd.f32 %v1652, %v1686
        %v1717 = vadd.f32 %v1653, %v1687
        %v1718 = vadd.f32 %v1654, %v1688
        %v1719 = vadd.f32 %v1655, %v1689
        %v1720 = vadd.f32 %v1656, %v1690
        %v1721 = vadd.f32 %v1657, %v1691
        %v1722 = vadd.f32 %v1658, %v1692
        %v1723 = vadd.f32 %v1659, %v1693
        %v1724 = vadd.f32 %v1660, %v1694
        %v1725 = vadd.f32 %v1661, %v1695
        %v1726 = vadd.f32 %v1662, %v1696
        %v1727 = vadd.f32 %v1663, %v1697
        %v1728 = vadd.f32 %v1664, %v1698
        %v1729 = vadd.f32 %v1665, %v1699
        %v1730 = vadd.f32 %v1666, %v1700
        %v1731 = vadd.f32 %v1667, %v1701
        %v1732 = vadd.f32 %v1668, %v1702
        %v1733 = vadd.f32 %v1669, %v1703
        %v1734 = vadd.f32 %v1670, %v1704
        %v1735 = vadd.f32 %v1671, %v1705
        %v1736 = vadd.f32 %v1672, %v1706
        %v1737 = vadd.f32 %v1673, %v1707
        %v1738 = vadd.f32 %v1674, %v1708
        %v1739 = vadd.f32 %v1675, %v1709
        %v1740 = vadd.f32 %v1676, %v1710
        %vm1741 = vcmask 31744
        %1742 = vst.msk [vmem:[#allocation2] sm:$0xff] %vm1741, %v1547
        %1743 = vst.msk [vmem:[#allocation2 + $0x8] sm:$0xff] %vm1741, %v1548
        %1744 = vst.msk [vmem:[#allocation2 + $0x10] sm:$0xff] %vm1741, %v1549
        %1745 = vst.msk [vmem:[#allocation2 + $0x18] sm:$0xff] %vm1741, %v1550
        %1746 = vst.msk [vmem:[#allocation2 + $0x20] sm:$0xff] %vm1741, %v1551
        %1747 = vst.msk [vmem:[#allocation2 + $0x28] sm:$0xff] %vm1741, %v1552
        %1748 = vst.msk [vmem:[#allocation2 + $0x30] sm:$0xff] %vm1741, %v1553
        %1749 = vst.msk [vmem:[#allocation2 + $0x38] sm:$0xff] %vm1741, %v1554
        %1750 = vst.msk [vmem:[#allocation2 + $0x40] sm:$0xff] %vm1741, %v1555
        %1751 = vst.msk [vmem:[#allocation2 + $0x48] sm:$0xff] %vm1741, %v1556
        %1752 = vst.msk [vmem:[#allocation2 + $0x50] sm:$0xff] %vm1741, %v1557
        %1753 = vst.msk [vmem:[#allocation2 + $0x58] sm:$0xff] %vm1741, %v1558
        %1754 = vst.msk [vmem:[#allocation2 + $0x60] sm:$0xff] %vm1741, %v1559
        %1755 = vst.msk [vmem:[#allocation2 + $0x68] sm:$0xff] %vm1741, %v1560
        %1756 = vst.msk [vmem:[#allocation2 + $0x70] sm:$0xff] %vm1741, %v1561
        %1757 = vst.msk [vmem:[#allocation2 + $0x78] sm:$0xff] %vm1741, %v1562
        %1758 = vst.msk [vmem:[#allocation2 + $0x80] sm:$0xff] %vm1741, %v1563
        %1759 = vst.msk [vmem:[#allocation2 + $0x88] sm:$0xff] %vm1741, %v1564
        %1760 = vst.msk [vmem:[#allocation2 + $0x90] sm:$0xff] %vm1741, %v1565
        %1761 = vst.msk [vmem:[#allocation2 + $0x98] sm:$0xff] %vm1741, %v1566
        %1762 = vst.msk [vmem:[#allocation2 + $0xa0] sm:$0xff] %vm1741, %v1567
        %1763 = vst.msk [vmem:[#allocation2 + $0xa8] sm:$0xff] %vm1741, %v1568
        %1764 = vst.msk [vmem:[#allocation2 + $0xb0] sm:$0xff] %vm1741, %v1569
        %1765 = vst.msk [vmem:[#allocation2 + $0xb8] sm:$0xff] %vm1741, %v1570
        %1766 = vst.msk [vmem:[#allocation2 + $0xc0] sm:$0xff] %vm1741, %v1571
        %1767 = vst.msk [vmem:[#allocation2 + $0xc8] sm:$0xff] %vm1741, %v1572
        %1768 = vst.msk [vmem:[#allocation2 + $0xd0] sm:$0xff] %vm1741, %v1573
        %1769 = vst.msk [vmem:[#allocation2 + $0xd8] sm:$0xff] %vm1741, %v1574
        %1770 = vst.msk [vmem:[#allocation2 + $0xe0] sm:$0xff] %vm1741, %v1575
        %1771 = vst.msk [vmem:[#allocation2 + $0xe8] sm:$0xff] %vm1741, %v1576
        %1772 = vst.msk [vmem:[#allocation2 + $0xf0] sm:$0xff] %vm1741, %v1577
        %1773 = vst.msk [vmem:[#allocation2 + $0xf8] sm:$0xff] %vm1741, %v1578
        %v1774 = vld [vmem:[#allocation2 + $0x10] sm:$0xff]
        %v1775 = vld [vmem:[#allocation2 + $0x18] sm:$0xff]
        %v1776 = vld [vmem:[#allocation2 + $0x20] sm:$0xff]
        %v1777 = vld [vmem:[#allocation2 + $0x28] sm:$0xff]
        %v1778 = vld [vmem:[#allocation2 + $0x30] sm:$0xff]
        %v1779 = vld [vmem:[#allocation2 + $0x38] sm:$0xff]
        %v1780 = vld [vmem:[#allocation2 + $0x40] sm:$0xff]
        %v1781 = vld [vmem:[#allocation2 + $0x48] sm:$0xff]
        %v1782 = vld [vmem:[#allocation2 + $0x50] sm:$0xff]
        %v1783 = vld [vmem:[#allocation2 + $0x58] sm:$0xff]
        %v1784 = vld [vmem:[#allocation2 + $0x60] sm:$0xff]
        %v1785 = vld [vmem:[#allocation2 + $0x68] sm:$0xff]
        %v1786 = vld [vmem:[#allocation2 + $0x70] sm:$0xff]
        %v1787 = vld [vmem:[#allocation2 + $0x78] sm:$0xff]
        %v1788 = vld [vmem:[#allocation2 + $0x80] sm:$0xff]
        %v1789 = vld [vmem:[#allocation2 + $0x88] sm:$0xff]
        %v1790 = vld [vmem:[#allocation2 + $0x90] sm:$0xff]
        %v1791 = vld [vmem:[#allocation2 + $0x98] sm:$0xff]
        %v1792 = vld [vmem:[#allocation2 + $0xa0] sm:$0xff]
        %v1793 = vld [vmem:[#allocation2 + $0xa8] sm:$0xff]
        %v1794 = vld [vmem:[#allocation2 + $0xb0] sm:$0xff]
        %v1795 = vld [vmem:[#allocation2 + $0xb8] sm:$0xff]
        %v1796 = vld [vmem:[#allocation2 + $0xc0] sm:$0xff]
        %v1797 = vld [vmem:[#allocation2 + $0xc8] sm:$0xff]
        %v1798 = vld [vmem:[#allocation2 + $0xd0] sm:$0xff]
        %v1799 = vld [vmem:[#allocation2 + $0xd8] sm:$0xff]
        %v1800 = vld [vmem:[#allocation2 + $0xe0] sm:$0xff]
        %v1801 = vld [vmem:[#allocation2 + $0xe8] sm:$0xff]
        %v1802 = vld [vmem:[#allocation2 + $0xf0] sm:$0xff]
        %v1803 = vld [vmem:[#allocation2 + $0xf8] sm:$0xff]
        %v1804 = vadd.f32 %v1774, %v1377
        %v1805 = vadd.f32 %v1775, %v1378
        %v1806 = vadd.f32 %v1776, %v1379
        %v1807 = vadd.f32 %v1777, %v1380
        %v1808 = vadd.f32 %v1778, %v1381
        %v1809 = vadd.f32 %v1779, %v1382
        %v1810 = vadd.f32 %v1780, %v1383
        %v1811 = vadd.f32 %v1781, %v1384
        %v1812 = vadd.f32 %v1782, %v1385
        %v1813 = vadd.f32 %v1783, %v1386
        %v1814 = vadd.f32 %v1784, %v1387
        %v1815 = vadd.f32 %v1785, %v1388
        %v1816 = vadd.f32 %v1786, %v1389
        %v1817 = vadd.f32 %v1787, %v1390
        %v1818 = vadd.f32 %v1788, %v1391
        %v1819 = vadd.f32 %v1789, %v1392
        %v1820 = vadd.f32 %v1790, %v1393
        %v1821 = vadd.f32 %v1791, %v1394
        %v1822 = vadd.f32 %v1792, %v1395
        %v1823 = vadd.f32 %v1793, %v1396
        %v1824 = vadd.f32 %v1794, %v1397
        %v1825 = vadd.f32 %v1795, %v1398
        %v1826 = vadd.f32 %v1796, %v1399
        %v1827 = vadd.f32 %v1797, %v1400
        %v1828 = vadd.f32 %v1798, %v1401
        %v1829 = vadd.f32 %v1799, %v1402
        %v1830 = vadd.f32 %v1800, %v1403
        %v1831 = vadd.f32 %v1801, %v1404
        %v1832 = vadd.f32 %v1802, %v1405
        %v1833 = vadd.f32 %v1803, %v1406
        %1834 = vst.msk [vmem:[#allocation2 + $0x10] sm:$0xff] %vm1741, %v1804
        %1835 = vst.msk [vmem:[#allocation2 + $0x18] sm:$0xff] %vm1741, %v1805
        %1836 = vst.msk [vmem:[#allocation2 + $0x20] sm:$0xff] %vm1741, %v1806
        %1837 = vst.msk [vmem:[#allocation2 + $0x28] sm:$0xff] %vm1741, %v1807
        %1838 = vst.msk [vmem:[#allocation2 + $0x30] sm:$0xff] %vm1741, %v1808
        %1839 = vst.msk [vmem:[#allocation2 + $0x38] sm:$0xff] %vm1741, %v1809
        %1840 = vst.msk [vmem:[#allocation2 + $0x40] sm:$0xff] %vm1741, %v1810
        %1841 = vst.msk [vmem:[#allocation2 + $0x48] sm:$0xff] %vm1741, %v1811
        %1842 = vst.msk [vmem:[#allocation2 + $0x50] sm:$0xff] %vm1741, %v1812
        %1843 = vst.msk [vmem:[#allocation2 + $0x58] sm:$0xff] %vm1741, %v1813
        %1844 = vst.msk [vmem:[#allocation2 + $0x60] sm:$0xff] %vm1741, %v1814
        %1845 = vst.msk [vmem:[#allocation2 + $0x68] sm:$0xff] %vm1741, %v1815
        %1846 = vst.msk [vmem:[#allocation2 + $0x70] sm:$0xff] %vm1741, %v1816
        %1847 = vst.msk [vmem:[#allocation2 + $0x78] sm:$0xff] %vm1741, %v1817
        %1848 = vst.msk [vmem:[#allocation2 + $0x80] sm:$0xff] %vm1741, %v1818
        %1849 = vst.msk [vmem:[#allocation2 + $0x88] sm:$0xff] %vm1741, %v1819
        %1850 = vst.msk [vmem:[#allocation2 + $0x90] sm:$0xff] %vm1741, %v1820
        %1851 = vst.msk [vmem:[#allocation2 + $0x98] sm:$0xff] %vm1741, %v1821
        %1852 = vst.msk [vmem:[#allocation2 + $0xa0] sm:$0xff] %vm1741, %v1822
        %1853 = vst.msk [vmem:[#allocation2 + $0xa8] sm:$0xff] %vm1741, %v1823
        %1854 = vst.msk [vmem:[#allocation2 + $0xb0] sm:$0xff] %vm1741, %v1824
        %1855 = vst.msk [vmem:[#allocation2 + $0xb8] sm:$0xff] %vm1741, %v1825
        %1856 = vst.msk [vmem:[#allocation2 + $0xc0] sm:$0xff] %vm1741, %v1826
        %1857 = vst.msk [vmem:[#allocation2 + $0xc8] sm:$0xff] %vm1741, %v1827
        %1858 = vst.msk [vmem:[#allocation2 + $0xd0] sm:$0xff] %vm1741, %v1828
        %1859 = vst.msk [vmem:[#allocation2 + $0xd8] sm:$0xff] %vm1741, %v1829
        %1860 = vst.msk [vmem:[#allocation2 + $0xe0] sm:$0xff] %vm1741, %v1830
        %1861 = vst.msk [vmem:[#allocation2 + $0xe8] sm:$0xff] %vm1741, %v1831
        %1862 = vst.msk [vmem:[#allocation2 + $0xf0] sm:$0xff] %vm1741, %v1832
        %1863 = vst.msk [vmem:[#allocation2 + $0xf8] sm:$0xff] %vm1741, %v1833
        %v1864 = vld [vmem:[#allocation2] sm:$0xff]
        %v1865 = vld [vmem:[#allocation2 + $0x8] sm:$0xff]
        %v1866 = vld [vmem:[#allocation2 + $0x10] sm:$0xff]
        %v1867 = vld [vmem:[#allocation2 + $0x18] sm:$0xff]
        %v1868 = vld [vmem:[#allocation2 + $0x20] sm:$0xff]
        %v1869 = vld [vmem:[#allocation2 + $0x28] sm:$0xff]
        %v1870 = vld [vmem:[#allocation2 + $0x30] sm:$0xff]
        %v1871 = vld [vmem:[#allocation2 + $0x38] sm:$0xff]
        %v1872 = vld [vmem:[#allocation2 + $0x40] sm:$0xff]
        %v1873 = vld [vmem:[#allocation2 + $0x48] sm:$0xff]
        %v1874 = vld [vmem:[#allocation2 + $0x50] sm:$0xff]
        %v1875 = vld [vmem:[#allocation2 + $0x58] sm:$0xff]
        %v1876 = vld [vmem:[#allocation2 + $0x60] sm:$0xff]
        %v1877 = vld [vmem:[#allocation2 + $0x68] sm:$0xff]
        %v1878 = vld [vmem:[#allocation2 + $0x70] sm:$0xff]
        %v1879 = vld [vmem:[#allocation2 + $0x78] sm:$0xff]
        %v1880 = vld [vmem:[#allocation2 + $0x80] sm:$0xff]
        %v1881 = vld [vmem:[#allocation2 + $0x88] sm:$0xff]
        %v1882 = vld [vmem:[#allocation2 + $0x90] sm:$0xff]
        %v1883 = vld [vmem:[#allocation2 + $0x98] sm:$0xff]
        %v1884 = vld [vmem:[#allocation2 + $0xa0] sm:$0xff]
        %v1885 = vld [vmem:[#allocation2 + $0xa8] sm:$0xff]
        %v1886 = vld [vmem:[#allocation2 + $0xb0] sm:$0xff]
        %v1887 = vld [vmem:[#allocation2 + $0xb8] sm:$0xff]
        %v1888 = vld [vmem:[#allocation2 + $0xc0] sm:$0xff]
        %v1889 = vld [vmem:[#allocation2 + $0xc8] sm:$0xff]
        %v1890 = vld [vmem:[#allocation2 + $0xd0] sm:$0xff]
        %v1891 = vld [vmem:[#allocation2 + $0xd8] sm:$0xff]
        %v1892 = vld [vmem:[#allocation2 + $0xe0] sm:$0xff]
        %v1893 = vld [vmem:[#allocation2 + $0xe8] sm:$0xff]
        %v1894 = vadd.f32 %v1864, %v1711
        %v1895 = vadd.f32 %v1865, %v1712
        %v1896 = vadd.f32 %v1866, %v1713
        %v1897 = vadd.f32 %v1867, %v1714
        %v1898 = vadd.f32 %v1868, %v1715
        %v1899 = vadd.f32 %v1869, %v1716
        %v1900 = vadd.f32 %v1870, %v1717
        %v1901 = vadd.f32 %v1871, %v1718
        %v1902 = vadd.f32 %v1872, %v1719
        %v1903 = vadd.f32 %v1873, %v1720
        %v1904 = vadd.f32 %v1874, %v1721
        %v1905 = vadd.f32 %v1875, %v1722
        %v1906 = vadd.f32 %v1876, %v1723
        %v1907 = vadd.f32 %v1877, %v1724
        %v1908 = vadd.f32 %v1878, %v1725
        %v1909 = vadd.f32 %v1879, %v1726
        %v1910 = vadd.f32 %v1880, %v1727
        %v1911 = vadd.f32 %v1881, %v1728
        %v1912 = vadd.f32 %v1882, %v1729
        %v1913 = vadd.f32 %v1883, %v1730
        %v1914 = vadd.f32 %v1884, %v1731
        %v1915 = vadd.f32 %v1885, %v1732
        %v1916 = vadd.f32 %v1886, %v1733
        %v1917 = vadd.f32 %v1887, %v1734
        %v1918 = vadd.f32 %v1888, %v1735
        %v1919 = vadd.f32 %v1889, %v1736
        %v1920 = vadd.f32 %v1890, %v1737
        %v1921 = vadd.f32 %v1891, %v1738
        %v1922 = vadd.f32 %v1892, %v1739
        %v1923 = vadd.f32 %v1893, %v1740
        %1924 = vst.msk [vmem:[#allocation2] sm:$0xff] %vm1741, %v1894
        %1925 = vst.msk [vmem:[#allocation2 + $0x8] sm:$0xff] %vm1741, %v1895
        %1926 = vst.msk [vmem:[#allocation2 + $0x10] sm:$0xff] %vm1741, %v1896
        %1927 = vst.msk [vmem:[#allocation2 + $0x18] sm:$0xff] %vm1741, %v1897
        %1928 = vst.msk [vmem:[#allocation2 + $0x20] sm:$0xff] %vm1741, %v1898
        %1929 = vst.msk [vmem:[#allocation2 + $0x28] sm:$0xff] %vm1741, %v1899
        %1930 = vst.msk [vmem:[#allocation2 + $0x30] sm:$0xff] %vm1741, %v1900
        %1931 = vst.msk [vmem:[#allocation2 + $0x38] sm:$0xff] %vm1741, %v1901
        %1932 = vst.msk [vmem:[#allocation2 + $0x40] sm:$0xff] %vm1741, %v1902
        %1933 = vst.msk [vmem:[#allocation2 + $0x48] sm:$0xff] %vm1741, %v1903
        %1934 = vst.msk [vmem:[#allocation2 + $0x50] sm:$0xff] %vm1741, %v1904
        %1935 = vst.msk [vmem:[#allocation2 + $0x58] sm:$0xff] %vm1741, %v1905
        %1936 = vst.msk [vmem:[#allocation2 + $0x60] sm:$0xff] %vm1741, %v1906
        %1937 = vst.msk [vmem:[#allocation2 + $0x68] sm:$0xff] %vm1741, %v1907
        %1938 = vst.msk [vmem:[#allocation2 + $0x70] sm:$0xff] %vm1741, %v1908
        %1939 = vst.msk [vmem:[#allocation2 + $0x78] sm:$0xff] %vm1741, %v1909
        %1940 = vst.msk [vmem:[#allocation2 + $0x80] sm:$0xff] %vm1741, %v1910
        %1941 = vst.msk [vmem:[#allocation2 + $0x88] sm:$0xff] %vm1741, %v1911
        %1942 = vst.msk [vmem:[#allocation2 + $0x90] sm:$0xff] %vm1741, %v1912
        %1943 = vst.msk [vmem:[#allocation2 + $0x98] sm:$0xff] %vm1741, %v1913
        %1944 = vst.msk [vmem:[#allocation2 + $0xa0] sm:$0xff] %vm1741, %v1914
        %1945 = vst.msk [vmem:[#allocation2 + $0xa8] sm:$0xff] %vm1741, %v1915
        %1946 = vst.msk [vmem:[#allocation2 + $0xb0] sm:$0xff] %vm1741, %v1916
        %1947 = vst.msk [vmem:[#allocation2 + $0xb8] sm:$0xff] %vm1741, %v1917
        %1948 = vst.msk [vmem:[#allocation2 + $0xc0] sm:$0xff] %vm1741, %v1918
        %1949 = vst.msk [vmem:[#allocation2 + $0xc8] sm:$0xff] %vm1741, %v1919
        %1950 = vst.msk [vmem:[#allocation2 + $0xd0] sm:$0xff] %vm1741, %v1920
        %1951 = vst.msk [vmem:[#allocation2 + $0xd8] sm:$0xff] %vm1741, %v1921
        %1952 = vst.msk [vmem:[#allocation2 + $0xe0] sm:$0xff] %vm1741, %v1922
        %1953 = vst.msk [vmem:[#allocation2 + $0xe8] sm:$0xff] %vm1741, %v1923
        %v1954 = vld [vmem:[#allocation2] sm:$0xff]
        %v1955 = vld [vmem:[#allocation2 + $0x8] sm:$0xff]
        %v1956 = vld [vmem:[#allocation2 + $0x10] sm:$0xff]
        %v1957 = vld [vmem:[#allocation2 + $0x18] sm:$0xff]
        %v1958 = vld [vmem:[#allocation2 + $0x20] sm:$0xff]
        %v1959 = vld [vmem:[#allocation2 + $0x28] sm:$0xff]
        %v1960 = vld [vmem:[#allocation2 + $0x30] sm:$0xff]
        %v1961 = vld [vmem:[#allocation2 + $0x38] sm:$0xff]
        %v1962 = vld [vmem:[#allocation2 + $0x40] sm:$0xff]
        %v1963 = vld [vmem:[#allocation2 + $0x48] sm:$0xff]
        %v1964 = vld [vmem:[#allocation2 + $0x50] sm:$0xff]
        %v1965 = vld [vmem:[#allocation2 + $0x58] sm:$0xff]
        %v1966 = vld [vmem:[#allocation2 + $0x60] sm:$0xff]
        %v1967 = vld [vmem:[#allocation2 + $0x68] sm:$0xff]
        %v1968 = vld [vmem:[#allocation2 + $0x70] sm:$0xff]
        %v1969 = vld [vmem:[#allocation2 + $0x78] sm:$0xff]
        %v1970 = vld [vmem:[#allocation2 + $0x80] sm:$0xff]
        %v1971 = vld [vmem:[#allocation2 + $0x88] sm:$0xff]
        %v1972 = vld [vmem:[#allocation2 + $0x90] sm:$0xff]
        %v1973 = vld [vmem:[#allocation2 + $0x98] sm:$0xff]
        %v1974 = vld [vmem:[#allocation2 + $0xa0] sm:$0xff]
        %v1975 = vld [vmem:[#allocation2 + $0xa8] sm:$0xff]
        %v1976 = vld [vmem:[#allocation2 + $0xb0] sm:$0xff]
        %v1977 = vld [vmem:[#allocation2 + $0xb8] sm:$0xff]
        %v1978 = vld [vmem:[#allocation2 + $0xc0] sm:$0xff]
        %v1979 = vld [vmem:[#allocation2 + $0xc8] sm:$0xff]
        %v1980 = vld [vmem:[#allocation2 + $0xd0] sm:$0xff]
        %v1981 = vld [vmem:[#allocation2 + $0xd8] sm:$0xff]
        %v1982 = vld [vmem:[#allocation2 + $0xe0] sm:$0xff]
        %v1983 = vld [vmem:[#allocation2 + $0xe8] sm:$0xff]
        %v1984 = vld [vmem:[#allocation2 + $0xf0] sm:$0xff]
        %v1985 = vld [vmem:[#allocation2 + $0xf8] sm:$0xff]
        %v1986 = vld [vmem:[#allocation8] sm:$0x1]
        %v1988 = vlaneseq
        %v1989 = vshrl.u32 %v1988, 7
        %v1990 = vsub.s32 0, %v1989
        %v1991 = vrot.slane %v1986, %v1990
        %v1993 = vmul.f32 %v1954, %v1991
        %v1994 = vmul.f32 %v1955, %v1991
        %v1995 = vmul.f32 %v1956, %v1991
        %v1996 = vmul.f32 %v1957, %v1991
        %v1997 = vmul.f32 %v1958, %v1991
        %v1998 = vmul.f32 %v1959, %v1991
        %v1999 = vmul.f32 %v1960, %v1991
        %v2000 = vmul.f32 %v1961, %v1991
        %v2001 = vmul.f32 %v1962, %v1991
        %v2002 = vmul.f32 %v1963, %v1991
        %v2003 = vmul.f32 %v1964, %v1991
        %v2004 = vmul.f32 %v1965, %v1991
        %v2005 = vmul.f32 %v1966, %v1991
        %v2006 = vmul.f32 %v1967, %v1991
        %v2007 = vmul.f32 %v1968, %v1991
        %v2008 = vmul.f32 %v1969, %v1991
        %v2009 = vmul.f32 %v1970, %v1991
        %v2010 = vmul.f32 %v1971, %v1991
        %v2011 = vmul.f32 %v1972, %v1991
        %v2012 = vmul.f32 %v1973, %v1991
        %v2013 = vmul.f32 %v1974, %v1991
        %v2014 = vmul.f32 %v1975, %v1991
        %v2015 = vmul.f32 %v1976, %v1991
        %v2016 = vmul.f32 %v1977, %v1991
        %v2017 = vmul.f32 %v1978, %v1991
        %v2018 = vmul.f32 %v1979, %v1991
        %v2019 = vmul.f32 %v1980, %v1991
        %v2020 = vmul.f32 %v1981, %v1991
        %v2021 = vmul.f32 %v1982, %v1991
        %v2022 = vmul.f32 %v1983, %v1991
        %v2023 = vmul.f32 %v1984, %v1991
        %v2024 = vmul.f32 %v1985, %v1991
        %v2025 = vld [vmem:[#allocation9] sm:$0x1]
        %v2027 = vlaneseq
        %v2028 = vshrl.u32 %v2027, 7
        %v2029 = vsub.s32 0, %v2028
        %v2030 = vrot.slane %v2025, %v2029
        %v2032 = vadd.f32 %v1993, %v2030
        %v2033 = vadd.f32 %v1994, %v2030
        %v2034 = vadd.f32 %v1995, %v2030
        %v2035 = vadd.f32 %v1996, %v2030
        %v2036 = vadd.f32 %v1997, %v2030
        %v2037 = vadd.f32 %v1998, %v2030
        %v2038 = vadd.f32 %v1999, %v2030
        %v2039 = vadd.f32 %v2000, %v2030
        %v2040 = vadd.f32 %v2001, %v2030
        %v2041 = vadd.f32 %v2002, %v2030
        %v2042 = vadd.f32 %v2003, %v2030
        %v2043 = vadd.f32 %v2004, %v2030
        %v2044 = vadd.f32 %v2005, %v2030
        %v2045 = vadd.f32 %v2006, %v2030
        %v2046 = vadd.f32 %v2007, %v2030
        %v2047 = vadd.f32 %v2008, %v2030
        %v2048 = vadd.f32 %v2009, %v2030
        %v2049 = vadd.f32 %v2010, %v2030
        %v2050 = vadd.f32 %v2011, %v2030
        %v2051 = vadd.f32 %v2012, %v2030
        %v2052 = vadd.f32 %v2013, %v2030
        %v2053 = vadd.f32 %v2014, %v2030
        %v2054 = vadd.f32 %v2015, %v2030
        %v2055 = vadd.f32 %v2016, %v2030
        %v2056 = vadd.f32 %v2017, %v2030
        %v2057 = vadd.f32 %v2018, %v2030
        %v2058 = vadd.f32 %v2019, %v2030
        %v2059 = vadd.f32 %v2020, %v2030
        %v2060 = vadd.f32 %v2021, %v2030
        %v2061 = vadd.f32 %v2022, %v2030
        %v2062 = vadd.f32 %v2023, %v2030
        %v2063 = vadd.f32 %v2024, %v2030
        %v2064 = vmax.f32 %v2032, 0.0
        %v2065 = vmax.f32 %v2033, 0.0
        %v2066 = vmax.f32 %v2034, 0.0
        %v2067 = vmax.f32 %v2035, 0.0
        %v2068 = vmax.f32 %v2036, 0.0
        %v2069 = vmax.f32 %v2037, 0.0
        %v2070 = vmax.f32 %v2038, 0.0
        %v2071 = vmax.f32 %v2039, 0.0
        %v2072 = vmax.f32 %v2040, 0.0
        %v2073 = vmax.f32 %v2041, 0.0
        %v2074 = vmax.f32 %v2042, 0.0
        %v2075 = vmax.f32 %v2043, 0.0
        %v2076 = vmax.f32 %v2044, 0.0
        %v2077 = vmax.f32 %v2045, 0.0
        %v2078 = vmax.f32 %v2046, 0.0
        %v2079 = vmax.f32 %v2047, 0.0
        %v2080 = vmax.f32 %v2048, 0.0
        %v2081 = vmax.f32 %v2049, 0.0
        %v2082 = vmax.f32 %v2050, 0.0
        %v2083 = vmax.f32 %v2051, 0.0
        %v2084 = vmax.f32 %v2052, 0.0
        %v2085 = vmax.f32 %v2053, 0.0
        %v2086 = vmax.f32 %v2054, 0.0
        %v2087 = vmax.f32 %v2055, 0.0
        %v2088 = vmax.f32 %v2056, 0.0
        %v2089 = vmax.f32 %v2057, 0.0
        %v2090 = vmax.f32 %v2058, 0.0
        %v2091 = vmax.f32 %v2059, 0.0
        %v2092 = vmax.f32 %v2060, 0.0
        %v2093 = vmax.f32 %v2061, 0.0
        %v2094 = vmax.f32 %v2062, 0.0
        %v2095 = vmax.f32 %v2063, 0.0
        %v2096 = vpack.c.bf16 %v2065, %v2064
        %v2097 = vpack.c.bf16 %v2067, %v2066
        %v2098 = vpack.c.bf16 %v2069, %v2068
        %v2099 = vpack.c.bf16 %v2071, %v2070
        %v2100 = vpack.c.bf16 %v2073, %v2072
        %v2101 = vpack.c.bf16 %v2075, %v2074
        %v2102 = vpack.c.bf16 %v2077, %v2076
        %v2103 = vpack.c.bf16 %v2079, %v2078
        %v2104 = vpack.c.bf16 %v2081, %v2080
        %v2105 = vpack.c.bf16 %v2083, %v2082
        %v2106 = vpack.c.bf16 %v2085, %v2084
        %v2107 = vpack.c.bf16 %v2087, %v2086
        %v2108 = vpack.c.bf16 %v2089, %v2088
        %v2109 = vpack.c.bf16 %v2091, %v2090
        %v2110 = vpack.c.bf16 %v2093, %v2092
        %v2111 = vpack.c.bf16 %v2095, %v2094
        %v2112 = vld [vmem:[#allocation11] sm:$0x3]
        %v2114 = vsel %vm1741, %v2096, 0
        %v2117 = vsel %vm1741, %v2097, 0
        %v2120 = vsel %vm1741, %v2098, 0
        %v2123 = vsel %vm1741, %v2099, 0
        %v2126 = vsel %vm1741, %v2100, 0
        %v2129 = vsel %vm1741, %v2101, 0
        %v2132 = vsel %vm1741, %v2102, 0
        %v2135 = vsel %vm1741, %v2103, 0
        %v2138 = vsel %vm1741, %v2104, 0
        %v2141 = vsel %vm1741, %v2105, 0
        %v2144 = vsel %vm1741, %v2106, 0
        %v2147 = vsel %vm1741, %v2107, 0
        %v2150 = vsel %vm1741, %v2108, 0
        %v2153 = vsel %vm1741, %v2109, 0
        %v2156 = vsel %vm1741, %v2110, 0
        %v2159 = vsel %vm1741, %v2111, 0
        %vm2161 = vcmask 1041408
        %v2163 = vsel %vm2161, %v2112, 0
        %2165 = vmatprep.subr.bf16.mxu0 0
        %2166 = vmatpush1.bf16.msra.mxu0 %v2163
        %2167 = vmatprep.subr.bf16.mxu0 0
        %2168 = vmatpush1.bf16.msra.mxu0 0
        %2169 = vmatprep.subr.bf16.mxu0 0
        %2170 = vmatpush1.bf16.msra.mxu0 0
        %2171 = vmatprep.subr.bf16.mxu0 0
        %2172 = vmatpush1.bf16.msra.mxu0 0
        %2173 = vmatprep.subr.bf16.mxu0 0
        %2174 = vmatpush1.bf16.msra.mxu0 0
        %2175 = vmatprep.subr.bf16.mxu0 0
        %2176 = vmatpush1.bf16.msra.mxu0 0
        %2177 = vmatprep.subr.bf16.mxu0 0
        %2178 = vmatpush1.bf16.msra.mxu0 0
        %2179 = vmatprep.subr.bf16.mxu0 0
        %2180 = vmatpush1.bf16.msra.mxu0 0
        %2181 = vmatprep.subr.bf16.mxu0 0
        %2182 = vmatpush1.bf16.msra.mxu0 0
        %2183 = vmatprep.subr.bf16.mxu0 0
        %2184 = vmatpush1.bf16.msra.mxu0 0
        %2185 = vmatprep.subr.bf16.mxu0 0
        %2186 = vmatpush1.bf16.msra.mxu0 0
        %2187 = vmatprep.subr.bf16.mxu0 0
        %2188 = vmatpush1.bf16.msra.mxu0 0
        %2189 = vmatprep.subr.bf16.mxu0 0
        %2190 = vmatpush1.bf16.msra.mxu0 0
        %2191 = vmatprep.subr.bf16.mxu0 0
        %2192 = vmatpush1.bf16.msra.mxu0 0
        %2193 = vmatprep.subr.bf16.mxu0 0
        %2194 = vmatpush1.bf16.msra.mxu0 0
        %2195 = vmatprep.subr.bf16.mxu0 0
        %2196 = vmatpush1.bf16.msra.mxu0 0
        %2197 = vmatprep.mubr.bf16.mxu0 0
        %2198 = vmatmul.mubr.bf16.gmra.mrb[0].mxu0 %v2114
        %v2199 = vpop.f32.mrb[0].mxu0
        %v2200 = vadd.f32 %v535, %v2199
        %v2201 = vpop.f32.mrb[0].mxu0
        %v2202 = vpop.f32.mrb[0].mxu0
        %v2203 = vadd.f32 %v536, %v2202
        %v2204 = vpop.f32.mrb[0].mxu0
        %2205 = vmatprep.mubr.bf16.mxu0 0
        %2206 = vmatmul.mubr.bf16.gmra.mrb[0].mxu0 %v2117
        %v2207 = vpop.f32.mrb[0].mxu0
        %v2208 = vadd.f32 %v537, %v2207
        %v2209 = vpop.f32.mrb[0].mxu0
        %v2210 = vpop.f32.mrb[0].mxu0
        %v2211 = vadd.f32 %v538, %v2210
        %v2212 = vpop.f32.mrb[0].mxu0
        %2213 = vmatprep.mubr.bf16.mxu0 0
        %2214 = vmatmul.mubr.bf16.gmra.mrb[0].mxu0 %v2120
        %v2215 = vpop.f32.mrb[0].mxu0
        %v2216 = vadd.f32 %v539, %v2215
        %v2217 = vpop.f32.mrb[0].mxu0
        %v2218 = vpop.f32.mrb[0].mxu0
        %v2219 = vadd.f32 %v540, %v2218
        %v2220 = vpop.f32.mrb[0].mxu0
        %2221 = vmatprep.mubr.bf16.mxu0 0
        %2222 = vmatmul.mubr.bf16.gmra.mrb[0].mxu0 %v2123
        %v2223 = vpop.f32.mrb[0].mxu0
        %v2224 = vadd.f32 %v541, %v2223
        %v2225 = vpop.f32.mrb[0].mxu0
        %v2226 = vpop.f32.mrb[0].mxu0
        %v2227 = vadd.f32 %v542, %v2226
        %v2228 = vpop.f32.mrb[0].mxu0
        %2229 = vmatprep.mubr.bf16.mxu0 0
        %2230 = vmatmul.mubr.bf16.gmra.mrb[0].mxu0 %v2126
        %v2231 = vpop.f32.mrb[0].mxu0
        %v2232 = vadd.f32 %v543, %v2231
        %v2233 = vpop.f32.mrb[0].mxu0
        %v2234 = vpop.f32.mrb[0].mxu0
        %v2235 = vadd.f32 %v544, %v2234
        %v2236 = vpop.f32.mrb[0].mxu0
        %2237 = vmatprep.mubr.bf16.mxu0 0
        %2238 = vmatmul.mubr.bf16.gmra.mrb[0].mxu0 %v2129
        %v2239 = vpop.f32.mrb[0].mxu0
        %v2240 = vadd.f32 %v545, %v2239
        %v2241 = vpop.f32.mrb[0].mxu0
        %v2242 = vpop.f32.mrb[0].mxu0
        %v2243 = vadd.f32 %v546, %v2242
        %v2244 = vpop.f32.mrb[0].mxu0
        %2245 = vmatprep.mubr.bf16.mxu0 0
        %2246 = vmatmul.mubr.bf16.gmra.mrb[0].mxu0 %v2132
        %v2247 = vpop.f32.mrb[0].mxu0
        %v2248 = vadd.f32 %v547, %v2247
        %v2249 = vpop.f32.mrb[0].mxu0
        %v2250 = vpop.f32.mrb[0].mxu0
        %v2251 = vadd.f32 %v548, %v2250
        %v2252 = vpop.f32.mrb[0].mxu0
        %2253 = vmatprep.mubr.bf16.mxu0 0
        %2254 = vmatmul.mubr.bf16.gmra.mrb[0].mxu0 %v2135
        %v2255 = vpop.f32.mrb[0].mxu0
        %v2256 = vadd.f32 %v549, %v2255
        %v2257 = vpop.f32.mrb[0].mxu0
        %v2258 = vpop.f32.mrb[0].mxu0
        %v2259 = vadd.f32 %v550, %v2258
        %v2260 = vpop.f32.mrb[0].mxu0
        %2261 = vmatprep.mubr.bf16.mxu0 0
        %2262 = vmatmul.mubr.bf16.gmra.mrb[0].mxu0 %v2138
        %v2263 = vpop.f32.mrb[0].mxu0
        %v2264 = vadd.f32 %v551, %v2263
        %v2265 = vpop.f32.mrb[0].mxu0
        %v2266 = vpop.f32.mrb[0].mxu0
        %v2267 = vadd.f32 %v552, %v2266
        %v2268 = vpop.f32.mrb[0].mxu0
        %2269 = vmatprep.mubr.bf16.mxu0 0
        %2270 = vmatmul.mubr.bf16.gmra.mrb[0].mxu0 %v2141
        %v2271 = vpop.f32.mrb[0].mxu0
        %v2272 = vadd.f32 %v553, %v2271
        %v2273 = vpop.f32.mrb[0].mxu0
        %v2274 = vpop.f32.mrb[0].mxu0
        %v2275 = vadd.f32 %v554, %v2274
        %v2276 = vpop.f32.mrb[0].mxu0
        %2277 = vmatprep.mubr.bf16.mxu0 0
        %2278 = vmatmul.mubr.bf16.gmra.mrb[0].mxu0 %v2144
        %v2279 = vpop.f32.mrb[0].mxu0
        %v2280 = vadd.f32 %v555, %v2279
        %v2281 = vpop.f32.mrb[0].mxu0
        %v2282 = vpop.f32.mrb[0].mxu0
        %v2283 = vadd.f32 %v556, %v2282
        %v2284 = vpop.f32.mrb[0].mxu0
        %2285 = vmatprep.mubr.bf16.mxu0 0
        %2286 = vmatmul.mubr.bf16.gmra.mrb[0].mxu0 %v2147
        %v2287 = vpop.f32.mrb[0].mxu0
        %v2288 = vadd.f32 %v557, %v2287
        %v2289 = vpop.f32.mrb[0].mxu0
        %v2290 = vpop.f32.mrb[0].mxu0
        %v2291 = vadd.f32 %v558, %v2290
        %v2292 = vpop.f32.mrb[0].mxu0
        %2293 = vmatprep.mubr.bf16.mxu0 0
        %2294 = vmatmul.mubr.bf16.gmra.mrb[0].mxu0 %v2150
        %v2295 = vpop.f32.mrb[0].mxu0
        %v2296 = vadd.f32 %v559, %v2295
        %v2297 = vpop.f32.mrb[0].mxu0
        %v2298 = vpop.f32.mrb[0].mxu0
        %v2299 = vadd.f32 %v560, %v2298
        %v2300 = vpop.f32.mrb[0].mxu0
        %2301 = vmatprep.mubr.bf16.mxu0 0
        %2302 = vmatmul.mubr.bf16.gmra.mrb[0].mxu0 %v2153
        %v2303 = vpop.f32.mrb[0].mxu0
        %v2304 = vadd.f32 %v561, %v2303
        %v2305 = vpop.f32.mrb[0].mxu0
        %v2306 = vpop.f32.mrb[0].mxu0
        %v2307 = vadd.f32 %v562, %v2306
        %v2308 = vpop.f32.mrb[0].mxu0
        %2309 = vmatprep.mubr.bf16.mxu0 0
        %2310 = vmatmul.mubr.bf16.gmra.mrb[0].mxu0 %v2156
        %v2311 = vpop.f32.mrb[0].mxu0
        %v2312 = vadd.f32 %v563, %v2311
        %v2313 = vpop.f32.mrb[0].mxu0
        %v2314 = vpop.f32.mrb[0].mxu0
        %v2315 = vadd.f32 %v564, %v2314
        %v2316 = vpop.f32.mrb[0].mxu0
        %2317 = vmatprep.mubr.bf16.mxu0 0
        %2318 = vmatmul.mubr.bf16.gmra.mrb[0].mxu0 %v2159
        %v2319 = vpop.f32.mrb[0].mxu0
        %v2320 = vadd.f32 %v565, %v2319
        %v2321 = vpop.f32.mrb[0].mxu0
        %v2322 = vpop.f32.mrb[0].mxu0
        %v2323 = vadd.f32 %v566, %v2322
        %v2324 = vpop.f32.mrb[0].mxu0
        %2325 = vdwg.mxu0
        %v2326 = vpack.c.bf16 %v2203, %v2200
        %v2327 = vpack.c.bf16 %v2211, %v2208
        %v2328 = vpack.c.bf16 %v2219, %v2216
        %v2329 = vpack.c.bf16 %v2227, %v2224
        %v2330 = vpack.c.bf16 %v2235, %v2232
        %v2331 = vpack.c.bf16 %v2243, %v2240
        %v2332 = vpack.c.bf16 %v2251, %v2248
        %v2333 = vpack.c.bf16 %v2259, %v2256
        %v2334 = vpack.c.bf16 %v2267, %v2264
        %v2335 = vpack.c.bf16 %v2275, %v2272
        %v2336 = vpack.c.bf16 %v2283, %v2280
        %v2337 = vpack.c.bf16 %v2291, %v2288
        %v2338 = vpack.c.bf16 %v2299, %v2296
        %v2339 = vpack.c.bf16 %v2307, %v2304
        %v2340 = vpack.c.bf16 %v2315, %v2312
        %v2341 = vpack.c.bf16 %v2323, %v2320
        %v2342 = vld [vmem:[#allocation12] sm:$0x3]
        %v2343 = vld [vmem:[#allocation14] sm:$0x1]
        %v2345 = vlaneseq
        %v2346 = vshrl.u32 %v2345, 7
        %v2347 = vsub.s32 0, %v2346
        %v2348 = vrot.slane %v2343, %v2347
        %v2351 = vsel %vm1741, %v2326, 0
        %v2354 = vsel %vm1741, %v2327, 0
        %v2357 = vsel %vm1741, %v2328, 0
        %v2360 = vsel %vm1741, %v2329, 0
        %v2363 = vsel %vm1741, %v2330, 0
        %v2366 = vsel %vm1741, %v2331, 0
        %v2369 = vsel %vm1741, %v2332, 0
        %v2372 = vsel %vm1741, %v2333, 0
        %v2375 = vsel %vm1741, %v2334, 0
        %v2378 = vsel %vm1741, %v2335, 0
        %v2381 = vsel %vm1741, %v2336, 0
        %v2384 = vsel %vm1741, %v2337, 0
        %v2387 = vsel %vm1741, %v2338, 0
        %v2390 = vsel %vm1741, %v2339, 0
        %v2393 = vsel %vm1741, %v2340, 0
        %v2396 = vsel %vm1741, %v2341, 0
        %v2399 = vsel %vm2161, %v2342, 0
        %2401 = vmatprep.subr.bf16.mxu0 0
        %2402 = vmatpush1.bf16.msra.mxu0 %v2399
        %2403 = vmatprep.subr.bf16.mxu0 0
        %2404 = vmatpush1.bf16.msra.mxu0 0
        %2405 = vmatprep.subr.bf16.mxu0 0
        %2406 = vmatpush1.bf16.msra.mxu0 0
        %2407 = vmatprep.subr.bf16.mxu0 0
        %2408 = vmatpush1.bf16.msra.mxu0 0
        %2409 = vmatprep.subr.bf16.mxu0 0
        %2410 = vmatpush1.bf16.msra.mxu0 0
        %2411 = vmatprep.subr.bf16.mxu0 0
        %2412 = vmatpush1.bf16.msra.mxu0 0
        %2413 = vmatprep.subr.bf16.mxu0 0
        %2414 = vmatpush1.bf16.msra.mxu0 0
        %2415 = vmatprep.subr.bf16.mxu0 0
        %2416 = vmatpush1.bf16.msra.mxu0 0
        %2417 = vmatprep.subr.bf16.mxu0 0
        %2418 = vmatpush1.bf16.msra.mxu0 0
        %2419 = vmatprep.subr.bf16.mxu0 0
        %2420 = vmatpush1.bf16.msra.mxu0 0
        %2421 = vmatprep.subr.bf16.mxu0 0
        %2422 = vmatpush1.bf16.msra.mxu0 0
        %2423 = vmatprep.subr.bf16.mxu0 0
        %2424 = vmatpush1.bf16.msra.mxu0 0
        %2425 = vmatprep.subr.bf16.mxu0 0
        %2426 = vmatpush1.bf16.msra.mxu0 0
        %2427 = vmatprep.subr.bf16.mxu0 0
        %2428 = vmatpush1.bf16.msra.mxu0 0
        %2429 = vmatprep.subr.bf16.mxu0 0
        %2430 = vmatpush1.bf16.msra.mxu0 0
        %2431 = vmatprep.subr.bf16.mxu0 0
        %2432 = vmatpush1.bf16.msra.mxu0 0
        %2433 = vmatprep.mubr.bf16.mxu0 0
        %2434 = vmatmul.mubr.bf16.gmra.mrb[0].mxu0 %v2351
        %v2435 = vpop.f32.mrb[0].mxu0
        %v2436 = vadd.f32 %v2348, %v2435
        %v2437 = vpop.f32.mrb[0].mxu0
        %v2438 = vpop.f32.mrb[0].mxu0
        %v2439 = vadd.f32 %v2348, %v2438
        %v2440 = vpop.f32.mrb[0].mxu0
        %2441 = vmatprep.mubr.bf16.mxu0 0
        %2442 = vmatmul.mubr.bf16.gmra.mrb[0].mxu0 %v2354
        %v2443 = vpop.f32.mrb[0].mxu0
        %v2444 = vadd.f32 %v2348, %v2443
        %v2445 = vpop.f32.mrb[0].mxu0
        %v2446 = vpop.f32.mrb[0].mxu0
        %v2447 = vadd.f32 %v2348, %v2446
        %v2448 = vpop.f32.mrb[0].mxu0
        %2449 = vmatprep.mubr.bf16.mxu0 0
        %2450 = vmatmul.mubr.bf16.gmra.mrb[0].mxu0 %v2357
        %v2451 = vpop.f32.mrb[0].mxu0
        %v2452 = vadd.f32 %v2348, %v2451
        %v2453 = vpop.f32.mrb[0].mxu0
        %v2454 = vpop.f32.mrb[0].mxu0
        %v2455 = vadd.f32 %v2348, %v2454
        %v2456 = vpop.f32.mrb[0].mxu0
        %2457 = vmatprep.mubr.bf16.mxu0 0
        %2458 = vmatmul.mubr.bf16.gmra.mrb[0].mxu0 %v2360
        %v2459 = vpop.f32.mrb[0].mxu0
        %v2460 = vadd.f32 %v2348, %v2459
        %v2461 = vpop.f32.mrb[0].mxu0
        %v2462 = vpop.f32.mrb[0].mxu0
        %v2463 = vadd.f32 %v2348, %v2462
        %v2464 = vpop.f32.mrb[0].mxu0
        %2465 = vmatprep.mubr.bf16.mxu0 0
        %2466 = vmatmul.mubr.bf16.gmra.mrb[0].mxu0 %v2363
        %v2467 = vpop.f32.mrb[0].mxu0
        %v2468 = vadd.f32 %v2348, %v2467
        %v2469 = vpop.f32.mrb[0].mxu0
        %v2470 = vpop.f32.mrb[0].mxu0
        %v2471 = vadd.f32 %v2348, %v2470
        %v2472 = vpop.f32.mrb[0].mxu0
        %2473 = vmatprep.mubr.bf16.mxu0 0
        %2474 = vmatmul.mubr.bf16.gmra.mrb[0].mxu0 %v2366
        %v2475 = vpop.f32.mrb[0].mxu0
        %v2476 = vadd.f32 %v2348, %v2475
        %v2477 = vpop.f32.mrb[0].mxu0
        %v2478 = vpop.f32.mrb[0].mxu0
        %v2479 = vadd.f32 %v2348, %v2478
        %v2480 = vpop.f32.mrb[0].mxu0
        %2481 = vmatprep.mubr.bf16.mxu0 0
        %2482 = vmatmul.mubr.bf16.gmra.mrb[0].mxu0 %v2369
        %v2483 = vpop.f32.mrb[0].mxu0
        %v2484 = vadd.f32 %v2348, %v2483
        %v2485 = vpop.f32.mrb[0].mxu0
        %v2486 = vpop.f32.mrb[0].mxu0
        %v2487 = vadd.f32 %v2348, %v2486
        %v2488 = vpop.f32.mrb[0].mxu0
        %2489 = vmatprep.mubr.bf16.mxu0 0
        %2490 = vmatmul.mubr.bf16.gmra.mrb[0].mxu0 %v2372
        %v2491 = vpop.f32.mrb[0].mxu0
        %v2492 = vadd.f32 %v2348, %v2491
        %v2493 = vpop.f32.mrb[0].mxu0
        %v2494 = vpop.f32.mrb[0].mxu0
        %v2495 = vadd.f32 %v2348, %v2494
        %v2496 = vpop.f32.mrb[0].mxu0
        %2497 = vmatprep.mubr.bf16.mxu0 0
        %2498 = vmatmul.mubr.bf16.gmra.mrb[0].mxu0 %v2375
        %v2499 = vpop.f32.mrb[0].mxu0
        %v2500 = vadd.f32 %v2348, %v2499
        %v2501 = vpop.f32.mrb[0].mxu0
        %v2502 = vpop.f32.mrb[0].mxu0
        %v2503 = vadd.f32 %v2348, %v2502
        %v2504 = vpop.f32.mrb[0].mxu0
        %2505 = vmatprep.mubr.bf16.mxu0 0
        %2506 = vmatmul.mubr.bf16.gmra.mrb[0].mxu0 %v2378
        %v2507 = vpop.f32.mrb[0].mxu0
        %v2508 = vadd.f32 %v2348, %v2507
        %v2509 = vpop.f32.mrb[0].mxu0
        %v2510 = vpop.f32.mrb[0].mxu0
        %v2511 = vadd.f32 %v2348, %v2510
        %v2512 = vpop.f32.mrb[0].mxu0
        %2513 = vmatprep.mubr.bf16.mxu0 0
        %2514 = vmatmul.mubr.bf16.gmra.mrb[0].mxu0 %v2381
        %v2515 = vpop.f32.mrb[0].mxu0
        %v2516 = vadd.f32 %v2348, %v2515
        %v2517 = vpop.f32.mrb[0].mxu0
        %v2518 = vpop.f32.mrb[0].mxu0
        %v2519 = vadd.f32 %v2348, %v2518
        %v2520 = vpop.f32.mrb[0].mxu0
        %2521 = vmatprep.mubr.bf16.mxu0 0
        %2522 = vmatmul.mubr.bf16.gmra.mrb[0].mxu0 %v2384
        %v2523 = vpop.f32.mrb[0].mxu0
        %v2524 = vadd.f32 %v2348, %v2523
        %v2525 = vpop.f32.mrb[0].mxu0
        %v2526 = vpop.f32.mrb[0].mxu0
        %v2527 = vadd.f32 %v2348, %v2526
        %v2528 = vpop.f32.mrb[0].mxu0
        %2529 = vmatprep.mubr.bf16.mxu0 0
        %2530 = vmatmul.mubr.bf16.gmra.mrb[0].mxu0 %v2387
        %v2531 = vpop.f32.mrb[0].mxu0
        %v2532 = vadd.f32 %v2348, %v2531
        %v2533 = vpop.f32.mrb[0].mxu0
        %v2534 = vpop.f32.mrb[0].mxu0
        %v2535 = vadd.f32 %v2348, %v2534
        %v2536 = vpop.f32.mrb[0].mxu0
        %2537 = vmatprep.mubr.bf16.mxu0 0
        %2538 = vmatmul.mubr.bf16.gmra.mrb[0].mxu0 %v2390
        %v2539 = vpop.f32.mrb[0].mxu0
        %v2540 = vadd.f32 %v2348, %v2539
        %v2541 = vpop.f32.mrb[0].mxu0
        %v2542 = vpop.f32.mrb[0].mxu0
        %v2543 = vadd.f32 %v2348, %v2542
        %v2544 = vpop.f32.mrb[0].mxu0
        %2545 = vmatprep.mubr.bf16.mxu0 0
        %2546 = vmatmul.mubr.bf16.gmra.mrb[0].mxu0 %v2393
        %v2547 = vpop.f32.mrb[0].mxu0
        %v2548 = vadd.f32 %v2348, %v2547
        %v2549 = vpop.f32.mrb[0].mxu0
        %v2550 = vpop.f32.mrb[0].mxu0
        %v2551 = vadd.f32 %v2348, %v2550
        %v2552 = vpop.f32.mrb[0].mxu0
        %2553 = vmatprep.mubr.bf16.mxu0 0
        %2554 = vmatmul.mubr.bf16.gmra.mrb[0].mxu0 %v2396
        %v2555 = vpop.f32.mrb[0].mxu0
        %v2556 = vadd.f32 %v2348, %v2555
        %v2557 = vpop.f32.mrb[0].mxu0
        %v2558 = vpop.f32.mrb[0].mxu0
        %v2559 = vadd.f32 %v2348, %v2558
        %v2560 = vpop.f32.mrb[0].mxu0
        %2561 = vdwg.mxu0
        %v2562 = vld [vmem:[#allocation15] sm:$0x1]
        %v2564 = vlaneseq
        %v2565 = vshrl.u32 %v2564, 7
        %v2566 = vsub.s32 0, %v2565
        %v2567 = vrot.slane %v2562, %v2566
        %v2569 = vmul.f32 %v2436, %v2567
        %v2570 = vmul.f32 %v2439, %v2567
        %v2571 = vmul.f32 %v2444, %v2567
        %v2572 = vmul.f32 %v2447, %v2567
        %v2573 = vmul.f32 %v2452, %v2567
        %v2574 = vmul.f32 %v2455, %v2567
        %v2575 = vmul.f32 %v2460, %v2567
        %v2576 = vmul.f32 %v2463, %v2567
        %v2577 = vmul.f32 %v2468, %v2567
        %v2578 = vmul.f32 %v2471, %v2567
        %v2579 = vmul.f32 %v2476, %v2567
        %v2580 = vmul.f32 %v2479, %v2567
        %v2581 = vmul.f32 %v2484, %v2567
        %v2582 = vmul.f32 %v2487, %v2567
        %v2583 = vmul.f32 %v2492, %v2567
        %v2584 = vmul.f32 %v2495, %v2567
        %v2585 = vmul.f32 %v2500, %v2567
        %v2586 = vmul.f32 %v2503, %v2567
        %v2587 = vmul.f32 %v2508, %v2567
        %v2588 = vmul.f32 %v2511, %v2567
        %v2589 = vmul.f32 %v2516, %v2567
        %v2590 = vmul.f32 %v2519, %v2567
        %v2591 = vmul.f32 %v2524, %v2567
        %v2592 = vmul.f32 %v2527, %v2567
        %v2593 = vmul.f32 %v2532, %v2567
        %v2594 = vmul.f32 %v2535, %v2567
        %v2595 = vmul.f32 %v2540, %v2567
        %v2596 = vmul.f32 %v2543, %v2567
        %v2597 = vmul.f32 %v2548, %v2567
        %v2598 = vmul.f32 %v2551, %v2567
        %v2599 = vmul.f32 %v2556, %v2567
        %v2600 = vmul.f32 %v2559, %v2567
        %v2601 = vld [vmem:[#allocation17] sm:$0x1]
        %v2603 = vlaneseq
        %v2604 = vshrl.u32 %v2603, 7
        %v2605 = vsub.s32 0, %v2604
        %v2606 = vrot.slane %v2601, %v2605
        %v2608 = vadd.f32 %v2569, %v2606
        %v2609 = vadd.f32 %v2570, %v2606
        %v2610 = vadd.f32 %v2571, %v2606
        %v2611 = vadd.f32 %v2572, %v2606
        %v2612 = vadd.f32 %v2573, %v2606
        %v2613 = vadd.f32 %v2574, %v2606
        %v2614 = vadd.f32 %v2575, %v2606
        %v2615 = vadd.f32 %v2576, %v2606
        %v2616 = vadd.f32 %v2577, %v2606
        %v2617 = vadd.f32 %v2578, %v2606
        %v2618 = vadd.f32 %v2579, %v2606
        %v2619 = vadd.f32 %v2580, %v2606
        %v2620 = vadd.f32 %v2581, %v2606
        %v2621 = vadd.f32 %v2582, %v2606
        %v2622 = vadd.f32 %v2583, %v2606
        %v2623 = vadd.f32 %v2584, %v2606
        %v2624 = vadd.f32 %v2585, %v2606
        %v2625 = vadd.f32 %v2586, %v2606
        %v2626 = vadd.f32 %v2587, %v2606
        %v2627 = vadd.f32 %v2588, %v2606
        %v2628 = vadd.f32 %v2589, %v2606
        %v2629 = vadd.f32 %v2590, %v2606
        %v2630 = vadd.f32 %v2591, %v2606
        %v2631 = vadd.f32 %v2592, %v2606
        %v2632 = vadd.f32 %v2593, %v2606
        %v2633 = vadd.f32 %v2594, %v2606
        %v2634 = vadd.f32 %v2595, %v2606
        %v2635 = vadd.f32 %v2596, %v2606
        %v2636 = vadd.f32 %v2597, %v2606
        %v2637 = vadd.f32 %v2598, %v2606
        %v2638 = vadd.f32 %v2599, %v2606
        %v2639 = vadd.f32 %v2600, %v2606
        %v2640 = vmax.f32 %v2608, 0.0
        %v2641 = vmax.f32 %v2609, 0.0
        %v2642 = vmax.f32 %v2610, 0.0
        %v2643 = vmax.f32 %v2611, 0.0
        %v2644 = vmax.f32 %v2612, 0.0
        %v2645 = vmax.f32 %v2613, 0.0
        %v2646 = vmax.f32 %v2614, 0.0
        %v2647 = vmax.f32 %v2615, 0.0
        %v2648 = vmax.f32 %v2616, 0.0
        %v2649 = vmax.f32 %v2617, 0.0
        %v2650 = vmax.f32 %v2618, 0.0
        %v2651 = vmax.f32 %v2619, 0.0
        %v2652 = vmax.f32 %v2620, 0.0
        %v2653 = vmax.f32 %v2621, 0.0
        %v2654 = vmax.f32 %v2622, 0.0
        %v2655 = vmax.f32 %v2623, 0.0
        %v2656 = vmax.f32 %v2624, 0.0
        %v2657 = vmax.f32 %v2625, 0.0
        %v2658 = vmax.f32 %v2626, 0.0
        %v2659 = vmax.f32 %v2627, 0.0
        %v2660 = vmax.f32 %v2628, 0.0
        %v2661 = vmax.f32 %v2629, 0.0
        %v2662 = vmax.f32 %v2630, 0.0
        %v2663 = vmax.f32 %v2631, 0.0
        %v2664 = vmax.f32 %v2632, 0.0
        %v2665 = vmax.f32 %v2633, 0.0
        %v2666 = vmax.f32 %v2634, 0.0
        %v2667 = vmax.f32 %v2635, 0.0
        %v2668 = vmax.f32 %v2636, 0.0
        %v2669 = vmax.f32 %v2637, 0.0
        %v2670 = vmax.f32 %v2638, 0.0
        %v2671 = vmax.f32 %v2639, 0.0
        %v2672 = vpack.c.bf16 %v2641, %v2640
        %v2673 = vpack.c.bf16 %v2643, %v2642
        %v2674 = vpack.c.bf16 %v2645, %v2644
        %v2675 = vpack.c.bf16 %v2647, %v2646
        %v2676 = vpack.c.bf16 %v2649, %v2648
        %v2677 = vpack.c.bf16 %v2651, %v2650
        %v2678 = vpack.c.bf16 %v2653, %v2652
        %v2679 = vpack.c.bf16 %v2655, %v2654
        %v2680 = vpack.c.bf16 %v2657, %v2656
        %v2681 = vpack.c.bf16 %v2659, %v2658
        %v2682 = vpack.c.bf16 %v2661, %v2660
        %v2683 = vpack.c.bf16 %v2663, %v2662
        %v2684 = vpack.c.bf16 %v2665, %v2664
        %v2685 = vpack.c.bf16 %v2667, %v2666
        %v2686 = vpack.c.bf16 %v2669, %v2668
        %v2687 = vpack.c.bf16 %v2671, %v2670
        %v2688 = vld [vmem:[#allocation18] sm:$0xf]
        %v2689 = vld [vmem:[#allocation18 + $0x4] sm:$0x3]
        %v2690 = vld [vmem:[#allocation20] sm:$0x1]
        %v2692 = vlaneseq
        %v2693 = vshrl.u32 %v2692, 7
        %v2694 = vsub.s32 0, %v2693
        %v2695 = vrot.slane %v2690, %v2694
        %v2699 = vunpack.c.l.b16 %v2688
        %v2700 = vunpack.c.l.b16 %v2689
        %v2701 = vpack.c.b16 %v2700, %v2699
        %vm2702 = vcmask 97280
        %v2704 = vsel %vm2702, %v2672, 0
        %v2707 = vsel %vm2702, %v2673, 0
        %v2710 = vsel %vm2702, %v2674, 0
        %v2713 = vsel %vm2702, %v2675, 0
        %v2716 = vsel %vm2702, %v2676, 0
        %v2719 = vsel %vm2702, %v2677, 0
        %v2722 = vsel %vm2702, %v2678, 0
        %v2725 = vsel %vm2702, %v2679, 0
        %v2728 = vsel %vm2702, %v2680, 0
        %v2731 = vsel %vm2702, %v2681, 0
        %v2734 = vsel %vm2702, %v2682, 0
        %v2737 = vsel %vm2702, %v2683, 0
        %v2740 = vsel %vm2702, %v2684, 0
        %v2743 = vsel %vm2702, %v2685, 0
        %v2746 = vsel %vm2702, %v2686, 0
        %v2749 = vsel %vm2702, %v2687, 0
        %vm2751 = vcmask 1045504
        %v2753 = vsel %vm2751, %v2701, 0
        %2755 = vmatprep.subr.bf16.mxu0 0
        %2756 = vmatpush1.bf16.msra.mxu0 %v2753
        %2757 = vmatprep.subr.bf16.mxu0 0
        %2758 = vmatpush1.bf16.msra.mxu0 0
        %2759 = vmatprep.subr.bf16.mxu0 0
        %2760 = vmatpush1.bf16.msra.mxu0 0
        %2761 = vmatprep.subr.bf16.mxu0 0
        %2762 = vmatpush1.bf16.msra.mxu0 0
        %2763 = vmatprep.subr.bf16.mxu0 0
        %2764 = vmatpush1.bf16.msra.mxu0 0
        %2765 = vmatprep.subr.bf16.mxu0 0
        %2766 = vmatpush1.bf16.msra.mxu0 0
        %2767 = vmatprep.subr.bf16.mxu0 0
        %2768 = vmatpush1.bf16.msra.mxu0 0
        %2769 = vmatprep.subr.bf16.mxu0 0
        %2770 = vmatpush1.bf16.msra.mxu0 0
        %2771 = vmatprep.subr.bf16.mxu0 0
        %2772 = vmatpush1.bf16.msra.mxu0 0
        %2773 = vmatprep.subr.bf16.mxu0 0
        %2774 = vmatpush1.bf16.msra.mxu0 0
        %2775 = vmatprep.subr.bf16.mxu0 0
        %2776 = vmatpush1.bf16.msra.mxu0 0
        %2777 = vmatprep.subr.bf16.mxu0 0
        %2778 = vmatpush1.bf16.msra.mxu0 0
        %2779 = vmatprep.subr.bf16.mxu0 0
        %2780 = vmatpush1.bf16.msra.mxu0 0
        %2781 = vmatprep.subr.bf16.mxu0 0
        %2782 = vmatpush1.bf16.msra.mxu0 0
        %2783 = vmatprep.subr.bf16.mxu0 0
        %2784 = vmatpush1.bf16.msra.mxu0 0
        %2785 = vmatprep.subr.bf16.mxu0 0
        %2786 = vmatpush1.bf16.msra.mxu0 0
        %2787 = vmatprep.mubr.bf16.mxu0 0
        %2788 = vmatmul.mubr.bf16.gmra.mrb[0].mxu0 %v2704
        %v2789 = vpop.f32.mrb[0].mxu0
        %v2790 = vadd.f32 %v2695, %v2789
        %v2791 = vpop.f32.mrb[0].mxu0
        %v2792 = vpop.f32.mrb[0].mxu0
        %v2793 = vadd.f32 %v2695, %v2792
        %v2794 = vpop.f32.mrb[0].mxu0
        %2795 = vmatprep.mubr.bf16.mxu0 0
        %2796 = vmatmul.mubr.bf16.gmra.mrb[0].mxu0 %v2707
        %v2797 = vpop.f32.mrb[0].mxu0
        %v2798 = vadd.f32 %v2695, %v2797
        %v2799 = vpop.f32.mrb[0].mxu0
        %v2800 = vpop.f32.mrb[0].mxu0
        %v2801 = vadd.f32 %v2695, %v2800
        %v2802 = vpop.f32.mrb[0].mxu0
        %2803 = vmatprep.mubr.bf16.mxu0 0
        %2804 = vmatmul.mubr.bf16.gmra.mrb[0].mxu0 %v2710
        %v2805 = vpop.f32.mrb[0].mxu0
        %v2806 = vadd.f32 %v2695, %v2805
        %v2807 = vpop.f32.mrb[0].mxu0
        %v2808 = vpop.f32.mrb[0].mxu0
        %v2809 = vadd.f32 %v2695, %v2808
        %v2810 = vpop.f32.mrb[0].mxu0
        %2811 = vmatprep.mubr.bf16.mxu0 0
        %2812 = vmatmul.mubr.bf16.gmra.mrb[0].mxu0 %v2713
        %v2813 = vpop.f32.mrb[0].mxu0
        %v2814 = vadd.f32 %v2695, %v2813
        %v2815 = vpop.f32.mrb[0].mxu0
        %v2816 = vpop.f32.mrb[0].mxu0
        %v2817 = vadd.f32 %v2695, %v2816
        %v2818 = vpop.f32.mrb[0].mxu0
        %2819 = vmatprep.mubr.bf16.mxu0 0
        %2820 = vmatmul.mubr.bf16.gmra.mrb[0].mxu0 %v2716
        %v2821 = vpop.f32.mrb[0].mxu0
        %v2822 = vadd.f32 %v2695, %v2821
        %v2823 = vpop.f32.mrb[0].mxu0
        %v2824 = vpop.f32.mrb[0].mxu0
        %v2825 = vadd.f32 %v2695, %v2824
        %v2826 = vpop.f32.mrb[0].mxu0
        %2827 = vmatprep.mubr.bf16.mxu0 0
        %2828 = vmatmul.mubr.bf16.gmra.mrb[0].mxu0 %v2719
        %v2829 = vpop.f32.mrb[0].mxu0
        %v2830 = vadd.f32 %v2695, %v2829
        %v2831 = vpop.f32.mrb[0].mxu0
        %v2832 = vpop.f32.mrb[0].mxu0
        %v2833 = vadd.f32 %v2695, %v2832
        %v2834 = vpop.f32.mrb[0].mxu0
        %2835 = vmatprep.mubr.bf16.mxu0 0
        %2836 = vmatmul.mubr.bf16.gmra.mrb[0].mxu0 %v2722
        %v2837 = vpop.f32.mrb[0].mxu0
        %v2838 = vadd.f32 %v2695, %v2837
        %v2839 = vpop.f32.mrb[0].mxu0
        %v2840 = vpop.f32.mrb[0].mxu0
        %v2841 = vadd.f32 %v2695, %v2840
        %v2842 = vpop.f32.mrb[0].mxu0
        %2843 = vmatprep.mubr.bf16.mxu0 0
        %2844 = vmatmul.mubr.bf16.gmra.mrb[0].mxu0 %v2725
        %v2845 = vpop.f32.mrb[0].mxu0
        %v2846 = vadd.f32 %v2695, %v2845
        %v2847 = vpop.f32.mrb[0].mxu0
        %v2848 = vpop.f32.mrb[0].mxu0
        %v2849 = vadd.f32 %v2695, %v2848
        %v2850 = vpop.f32.mrb[0].mxu0
        %2851 = vmatprep.mubr.bf16.mxu0 0
        %2852 = vmatmul.mubr.bf16.gmra.mrb[0].mxu0 %v2728
        %v2853 = vpop.f32.mrb[0].mxu0
        %v2854 = vadd.f32 %v2695, %v2853
        %v2855 = vpop.f32.mrb[0].mxu0
        %v2856 = vpop.f32.mrb[0].mxu0
        %v2857 = vadd.f32 %v2695, %v2856
        %v2858 = vpop.f32.mrb[0].mxu0
        %2859 = vmatprep.mubr.bf16.mxu0 0
        %2860 = vmatmul.mubr.bf16.gmra.mrb[0].mxu0 %v2731
        %v2861 = vpop.f32.mrb[0].mxu0
        %v2862 = vadd.f32 %v2695, %v2861
        %v2863 = vpop.f32.mrb[0].mxu0
        %v2864 = vpop.f32.mrb[0].mxu0
        %v2865 = vadd.f32 %v2695, %v2864
        %v2866 = vpop.f32.mrb[0].mxu0
        %2867 = vmatprep.mubr.bf16.mxu0 0
        %2868 = vmatmul.mubr.bf16.gmra.mrb[0].mxu0 %v2734
        %v2869 = vpop.f32.mrb[0].mxu0
        %v2870 = vadd.f32 %v2695, %v2869
        %v2871 = vpop.f32.mrb[0].mxu0
        %v2872 = vpop.f32.mrb[0].mxu0
        %v2873 = vadd.f32 %v2695, %v2872
        %v2874 = vpop.f32.mrb[0].mxu0
        %2875 = vmatprep.mubr.bf16.mxu0 0
        %2876 = vmatmul.mubr.bf16.gmra.mrb[0].mxu0 %v2737
        %v2877 = vpop.f32.mrb[0].mxu0
        %v2878 = vadd.f32 %v2695, %v2877
        %v2879 = vpop.f32.mrb[0].mxu0
        %v2880 = vpop.f32.mrb[0].mxu0
        %v2881 = vadd.f32 %v2695, %v2880
        %v2882 = vpop.f32.mrb[0].mxu0
        %2883 = vmatprep.mubr.bf16.mxu0 0
        %2884 = vmatmul.mubr.bf16.gmra.mrb[0].mxu0 %v2740
        %v2885 = vpop.f32.mrb[0].mxu0
        %v2886 = vadd.f32 %v2695, %v2885
        %v2887 = vpop.f32.mrb[0].mxu0
        %v2888 = vpop.f32.mrb[0].mxu0
        %v2889 = vadd.f32 %v2695, %v2888
        %v2890 = vpop.f32.mrb[0].mxu0
        %2891 = vmatprep.mubr.bf16.mxu0 0
        %2892 = vmatmul.mubr.bf16.gmra.mrb[0].mxu0 %v2743
        %v2893 = vpop.f32.mrb[0].mxu0
        %v2894 = vadd.f32 %v2695, %v2893
        %v2895 = vpop.f32.mrb[0].mxu0
        %v2896 = vpop.f32.mrb[0].mxu0
        %v2897 = vadd.f32 %v2695, %v2896
        %v2898 = vpop.f32.mrb[0].mxu0
        %2899 = vmatprep.mubr.bf16.mxu0 0
        %2900 = vmatmul.mubr.bf16.gmra.mrb[0].mxu0 %v2746
        %v2901 = vpop.f32.mrb[0].mxu0
        %v2902 = vadd.f32 %v2695, %v2901
        %v2903 = vpop.f32.mrb[0].mxu0
        %v2904 = vpop.f32.mrb[0].mxu0
        %v2905 = vadd.f32 %v2695, %v2904
        %v2906 = vpop.f32.mrb[0].mxu0
        %2907 = vmatprep.mubr.bf16.mxu0 0
        %2908 = vmatmul.mubr.bf16.gmra.mrb[0].mxu0 %v2749
        %v2909 = vpop.f32.mrb[0].mxu0
        %v2910 = vadd.f32 %v2695, %v2909
        %v2911 = vpop.f32.mrb[0].mxu0
        %v2912 = vpop.f32.mrb[0].mxu0
        %v2913 = vadd.f32 %v2695, %v2912
        %v2914 = vpop.f32.mrb[0].mxu0
        %2915 = vdwg.mxu0
        %v2916 = vadd.f32 %v2790, %v2200
        %v2917 = vadd.f32 %v2793, %v2203
        %v2918 = vadd.f32 %v2798, %v2208
        %v2919 = vadd.f32 %v2801, %v2211
        %v2920 = vadd.f32 %v2806, %v2216
        %v2921 = vadd.f32 %v2809, %v2219
        %v2922 = vadd.f32 %v2814, %v2224
        %v2923 = vadd.f32 %v2817, %v2227
        %v2924 = vadd.f32 %v2822, %v2232
        %v2925 = vadd.f32 %v2825, %v2235
        %v2926 = vadd.f32 %v2830, %v2240
        %v2927 = vadd.f32 %v2833, %v2243
        %v2928 = vadd.f32 %v2838, %v2248
        %v2929 = vadd.f32 %v2841, %v2251
        %v2930 = vadd.f32 %v2846, %v2256
        %v2931 = vadd.f32 %v2849, %v2259
        %v2932 = vadd.f32 %v2854, %v2264
        %v2933 = vadd.f32 %v2857, %v2267
        %v2934 = vadd.f32 %v2862, %v2272
        %v2935 = vadd.f32 %v2865, %v2275
        %v2936 = vadd.f32 %v2870, %v2280
        %v2937 = vadd.f32 %v2873, %v2283
        %v2938 = vadd.f32 %v2878, %v2288
        %v2939 = vadd.f32 %v2881, %v2291
        %v2940 = vadd.f32 %v2886, %v2296
        %v2941 = vadd.f32 %v2889, %v2299
        %v2942 = vadd.f32 %v2894, %v2304
        %v2943 = vadd.f32 %v2897, %v2307
        %v2944 = vadd.f32 %v2902, %v2312
        %v2945 = vadd.f32 %v2905, %v2315
        %v2946 = vadd.f32 %v2910, %v2320
        %v2947 = vadd.f32 %v2913, %v2323
        %2948 = vst.msk [vmem:[%s533] sm:$0xff] %vm1741, %v2916
        %2949 = vst.msk [vmem:[%s533 + $0x8] sm:$0xff] %vm1741, %v2917
        %2950 = vst.msk [vmem:[%s533 + $0x10] sm:$0xff] %vm1741, %v2918
        %2951 = vst.msk [vmem:[%s533 + $0x18] sm:$0xff] %vm1741, %v2919
        %2952 = vst.msk [vmem:[%s533 + $0x20] sm:$0xff] %vm1741, %v2920
        %2953 = vst.msk [vmem:[%s533 + $0x28] sm:$0xff] %vm1741, %v2921
        %2954 = vst.msk [vmem:[%s533 + $0x30] sm:$0xff] %vm1741, %v2922
        %2955 = vst.msk [vmem:[%s533 + $0x38] sm:$0xff] %vm1741, %v2923
        %2956 = vst.msk [vmem:[%s533 + $0x40] sm:$0xff] %vm1741, %v2924
        %2957 = vst.msk [vmem:[%s533 + $0x48] sm:$0xff] %vm1741, %v2925
        %2958 = vst.msk [vmem:[%s533 + $0x50] sm:$0xff] %vm1741, %v2926
        %2959 = vst.msk [vmem:[%s533 + $0x58] sm:$0xff] %vm1741, %v2927
        %2960 = vst.msk [vmem:[%s533 + $0x60] sm:$0xff] %vm1741, %v2928
        %2961 = vst.msk [vmem:[%s533 + $0x68] sm:$0xff] %vm1741, %v2929
        %2962 = vst.msk [vmem:[%s533 + $0x70] sm:$0xff] %vm1741, %v2930
        %2963 = vst.msk [vmem:[%s533 + $0x78] sm:$0xff] %vm1741, %v2931
        %2964 = vst.msk [vmem:[%s533 + $0x80] sm:$0xff] %vm1741, %v2932
        %2965 = vst.msk [vmem:[%s533 + $0x88] sm:$0xff] %vm1741, %v2933
        %2966 = vst.msk [vmem:[%s533 + $0x90] sm:$0xff] %vm1741, %v2934
        %2967 = vst.msk [vmem:[%s533 + $0x98] sm:$0xff] %vm1741, %v2935
        %2968 = vst.msk [vmem:[%s533 + $0xa0] sm:$0xff] %vm1741, %v2936
        %2969 = vst.msk [vmem:[%s533 + $0xa8] sm:$0xff] %vm1741, %v2937
        %2970 = vst.msk [vmem:[%s533 + $0xb0] sm:$0xff] %vm1741, %v2938
        %2971 = vst.msk [vmem:[%s533 + $0xb8] sm:$0xff] %vm1741, %v2939
        %2972 = vst.msk [vmem:[%s533 + $0xc0] sm:$0xff] %vm1741, %v2940
        %2973 = vst.msk [vmem:[%s533 + $0xc8] sm:$0xff] %vm1741, %v2941
        %2974 = vst.msk [vmem:[%s533 + $0xd0] sm:$0xff] %vm1741, %v2942
        %2975 = vst.msk [vmem:[%s533 + $0xd8] sm:$0xff] %vm1741, %v2943
        %2976 = vst.msk [vmem:[%s533 + $0xe0] sm:$0xff] %vm1741, %v2944
        %2977 = vst.msk [vmem:[%s533 + $0xe8] sm:$0xff] %vm1741, %v2945
        %2978 = vst.msk [vmem:[%s533 + $0xf0] sm:$0xff] %vm1741, %v2946
        %2979 = vst.msk [vmem:[%s533 + $0xf8] sm:$0xff] %vm1741, %v2947
        %s2980 = sand.u32 %s277, 1
        %s2981 = scalar_lea.sflag [#allocation5], %s2980
        %s2982 = sand.u32 %s277, 1
        %s2983 = smul.addr %s2982, 256
        %s2984 = scalar_lea.vmem [#allocation21], %s2983
        // Predicated region
        $region109: #{ncb_forward.1} parent=63 // pred_check
          %p2985 = pneg %p287
        $region110: #{ncb_forward.1} parent=63 // pred_check_branch
          %2987 = sbr.rel (%p2985) target = $region112
        $region111: #{ncb_forward.1} parent=63 // pred_region
          %s2989 = ssub.s32 4096, 4096
          %2990 = vsyncadd %s2981, %s2989
          %s2991 = smul.addr %s33, 32
          %s2992 = smul.addr %s2991, 128
          %s2993 = scalar_lea.hbm %s11, %s2992
          %s2994 = sshll.u32 %s2984, 4
          %s2995 = int_to_ptr.vmem [resolvable:$true] %s2994
          %3000 = dma.vmem_to_hbm [thread:$0]  %s2995, 4096, %s2993, %s2981, 128, 128, 8
        $region112: #{ncb_forward.1} parent=63 // pred_fallthru
          _
      $region64: #{ncb_forward.1} parent=5 // pred_fallthru
        _
      %p3001 = scmp.le.s32.totalorder 2, %s28
      // Predicated region
      $region113: #{ncb_forward.1} parent=5 // pred_check
        %p3002 = pneg %p3001
      $region114: #{ncb_forward.1} parent=5 // pred_check_branch
        %3004 = sbr.rel (%p3002) target = $region116
      $region115: #{ncb_forward.1} parent=5 // pred_region
        %s3005 = ssub.s32 %s28, 2
        // Predicated region
        $region117: #{ncb_forward.1} parent=115 // pred_check
          %p3006 = pneg %p293
        $region118: #{ncb_forward.1} parent=115 // pred_check_branch
          %3008 = sbr.rel (%p3006) target = $region120
        $region119: #{ncb_forward.1} parent=115 // pred_region
          %s3009 = sand.u32 %s278, 1
          %s3010 = scalar_lea.sflag [#allocation5], %s3009
          %s3011 = sand.u32 %s278, 1
          %s3012 = smul.addr %s3011, 256
          %s3013 = scalar_lea.vmem [#allocation21], %s3012
          %3014 = dma.done %s3010, 4096
        $region120: #{ncb_forward.1} parent=115 // pred_fallthru
          _
      $region116: #{ncb_forward.1} parent=5 // pred_fallthru
        _
    $region6: #{ncb_forward.1} parent=1 // loop_footer
      %s32 = sadd.s32 1, %s28
    $region7: #{ncb_forward.1} parent=1 // loop_footer_branch
      %27 = sbr.rel target = $region3
    $region8: #{ncb_forward.1} parent=1 // loop_exit
      _
    %3015 = vsyncpa [#allocation4], 1
    %s3016 = scalar_lea.sflag [#allocation4], 1
    %3017 = vsyncpa %s3016, 1
    %3018 = vsyncpa [#allocation7], 1
    %3019 = vsyncpa [#allocation10], 1
    %3020 = vsyncpa [#allocation13], 1
    %3021 = vsyncpa [#allocation16], 1
    %3022 = vsyncpa [#allocation19], 1
    %3023 = vsyncpa [#allocation5], 1
    %s3024 = scalar_lea.sflag [#allocation5], 1
    %3025 = vsyncpa %s3024, 1

</llo_original>
